<compile_context>
chip_gen: v6e
topology: v6e:2x2x1
jax: 0.10.0
libtpu: 0.0.40
codegen_flags: <defaults>
</compile_context>

<pallas_src>
import math

import jax
import jax.numpy as jnp
from jax.experimental import pallas as pl
from jax.experimental.pallas import tpu as pltpu

# Compat shim for older JAX releases that still expose TPUCompilerParams.
_CompilerParams = getattr(pltpu, "CompilerParams", None)
if _CompilerParams is None:  # pragma: no cover
    _CompilerParams = pltpu.TPUCompilerParams

VMEM_LIMIT_BYTES = 32 * 1024 * 1024


def _compiler_params():
    return _CompilerParams(dimension_semantics=("parallel",),
                           vmem_limit_bytes=VMEM_LIMIT_BYTES)


# ----------------------------------------------------------------------------
# Fused coder (start conv -> dilated GLU stack -> end conv), one pallas_call.
# ----------------------------------------------------------------------------
def coder_forward(p, x, bias0):
    """Apply one coder to x.

    p      : packed parameters (see init_coder)
    x      : (B, in_ch, T) float32
    bias0  : (B, mid, 1) float32   start-conv bias with speaker conditioning
                                    already folded in
    returns: (B, out_ch, T) float32
    """
    B, in_ch, T = x.shape
    mid = p["w_start"].shape[0]
    L, two_mid, Kmid = p["w_glu"].shape
    assert Kmid % mid == 0
    K = Kmid // mid
    out_ch = p["w_end"].shape[0]
    dilations = tuple(3 ** (i % 4) for i in range(L))
    half = (K - 1) // 2                       # 'same' padding (odd K assumed)
    maxpad = half * max(dilations)
    Tp = T + 2 * maxpad

    def kernel(x_ref, b0_ref, w0_ref, wg_ref, bg_ref, we_ref, be_ref,
               o_ref, pad_ref):
        # start 1x1 conv (+ speaker-folded bias) -- single MXU matmul
        h = jnp.dot(w0_ref[...], x_ref[...].astype(jnp.bfloat16),
                    preferred_element_type=jnp.float32) + b0_ref[...]

        # zero the padded scratch; only the centre is written per layer, so the
        # halo stays zero (acts as the conv 'same' padding).
        pad_ref[...] = jnp.zeros_like(pad_ref)

        for l in range(L):
            dil = dilations[l]
            pad_ref[:, maxpad:maxpad + T] = h
            # K dilated taps as static VMEM slices, folded into the
            # contraction dim: (K*mid, T) against (2*mid, K*mid) weights.
            taps = [pad_ref[:, maxpad + (k - half) * dil:
                            maxpad + (k - half) * dil + T]
                    for k in range(K)]
            xk = jnp.concatenate(taps, axis=0).astype(jnp.bfloat16)
            hh = jnp.dot(wg_ref[l], xk,
                         preferred_element_type=jnp.float32) + bg_ref[l]
            # TODO(synk): md.DilConvGLU1D internals not given; assumed
            #             conv -> GLU -> residual scaled by sqrt(0.5).
            h = (hh[:mid, :] * jax.nn.sigmoid(hh[mid:, :]) + h) \
                * jnp.float32(math.sqrt(0.5))

        # end 1x1 conv
        o_ref[...] = jnp.dot(we_ref[...], h.astype(jnp.bfloat16),
                             preferred_element_type=jnp.float32) + be_ref[...]

    return pl.pallas_call(
        kernel,
        out_shape=jax.ShapeDtypeStruct((B, out_ch, T), jnp.float32),
        grid=(B,),
        in_specs=[
            pl.BlockSpec((None, in_ch, T), lambda i: (i, 0, 0)),
            pl.BlockSpec((None, mid, 1), lambda i: (i, 0, 0)),
            pl.BlockSpec((mid, in_ch), lambda i: (0, 0)),
            pl.BlockSpec((L, two_mid, Kmid), lambda i: (0, 0, 0)),
            pl.BlockSpec((L, two_mid, 1), lambda i: (0, 0, 0)),
            pl.BlockSpec((out_ch, mid), lambda i: (0, 0)),
            pl.BlockSpec((out_ch, 1), lambda i: (0, 0)),
        ],
        out_specs=pl.BlockSpec((None, out_ch, T), lambda i: (i, 0, 0)),
        scratch_shapes=[pltpu.VMEM((mid, Tp), jnp.float32)],
        compiler_params=_compiler_params(),
    )(x, bias0, p["w_start"], p["w_glu"], p["b_glu"], p["w_end"], p["b_end"])


# ----------------------------------------------------------------------------
# Attention kernel: A = softmax(K^T Q / sqrt(d), over source dim), R = V @ A.
# ----------------------------------------------------------------------------
def _attn_kernel(k_ref, v_ref, q_ref, a_ref, r_ref):
    d = k_ref.shape[0]
    scale = jnp.float32(1.0 / math.sqrt(d))
    # (K^T Q) without an explicit transpose: contract channel axis of both.
    s = jax.lax.dot_general(
        k_ref[...], q_ref[...], (((0,), (0,)), ((), ())),
        preferred_element_type=jnp.float32) * scale          # (N, T) f32
    s = s - jnp.max(s, axis=0, keepdims=True)
    e = jnp.exp(s)
    a = e * pl.reciprocal(jnp.sum(e, axis=0, keepdims=True), approx=True)
    a_ref[...] = a
    r_ref[...] = jnp.dot(v_ref[...], a.astype(jnp.bfloat16),
                         preferred_element_type=jnp.float32)


def attention(K_s, V_s, Q_t):
    B, d, N = K_s.shape
    T = Q_t.shape[2]
    kb = K_s.astype(jnp.bfloat16)
    vb = V_s.astype(jnp.bfloat16)
    qb = Q_t.astype(jnp.bfloat16)
    return pl.pallas_call(
        _attn_kernel,
        out_shape=(jax.ShapeDtypeStruct((B, N, T), jnp.float32),
                   jax.ShapeDtypeStruct((B, d, T), jnp.float32)),
        grid=(B,),
        in_specs=[
            pl.BlockSpec((None, d, N), lambda i: (i, 0, 0)),
            pl.BlockSpec((None, d, N), lambda i: (i, 0, 0)),
            pl.BlockSpec((None, d, T), lambda i: (i, 0, 0)),
        ],
        out_specs=(pl.BlockSpec((None, N, T), lambda i: (i, 0, 0)),
                   pl.BlockSpec((None, d, T), lambda i: (i, 0, 0))),
        compiler_params=_compiler_params(),
    )(kb, vb, qb)


# ----------------------------------------------------------------------------
# Parameter construction (deterministic, in-script). Weights are packed into
# the kernel-native layouts: start/end convs as (Cout, Cin) bf16, GLU convs as
# (L, 2*mid, K*mid) bf16 with the tap dim folded into the contraction dim.
# ----------------------------------------------------------------------------
def _init_conv(key, cout, cin, k):
    kw, kb = jax.random.split(key)
    scale = 1.0 / math.sqrt(cin * k)
    w = jax.random.normal(kw, (cout, cin, k), jnp.float32) * scale
    b = jax.random.normal(kb, (cout,), jnp.float32) * 0.01
    return w, b


def init_coder(key, in_ch, out_ch, mid_ch, num_layers, glu_kernel, n_spk=None):
    keys = jax.random.split(key, num_layers + 3)
    w0, b0 = _init_conv(keys[0], mid_ch, in_ch, 1)
    glu = [_init_conv(keys[1 + i], 2 * mid_ch, mid_ch, glu_kernel)
           for i in range(num_layers)]
    we, be = _init_conv(keys[num_layers + 1], out_ch, mid_ch, 1)

    # fold taps into contraction: w_folded[c, k*mid + cin] = w[c, cin, k]
    w_glu = jnp.stack([
        jnp.transpose(w, (0, 2, 1)).reshape(2 * mid_ch, glu_kernel * mid_ch)
        for (w, _) in glu])
    b_glu = jnp.stack([b for (_, b) in glu])[:, :, None]

    params = {
        "w_start": w0[:, :, 0].astype(jnp.bfloat16),      # (mid, in_ch)
        "b_start": b0,                                    # (mid,)
        "w_glu": w_glu.astype(jnp.bfloat16),              # (L, 2*mid, K*mid)
        "b_glu": b_glu,                                   # (L, 2*mid, 1)
        "w_end": we[:, :, 0].astype(jnp.bfloat16),        # (out_ch, mid)
        "b_end": be[:, None],                             # (out_ch, 1)
    }
    if n_spk is not None:
        params["spk"] = jax.random.normal(
            keys[num_layers + 2], (n_spk, mid_ch), jnp.float32) * 0.1
    return params


# ----------------------------------------------------------------------------
# Module forward passes
# ----------------------------------------------------------------------------
def encoder_forward(p, x):
    # TODO(synk): nn.Dropout(p=0.1) is stochastic in training mode; applied as
    #             identity (eval semantics) for determinism.
    B = x.shape[0]
    mid = p["w_start"].shape[0]
    bias0 = jnp.broadcast_to(p["b_start"][None, :, None], (B, mid, 1))
    out = coder_forward(p, x, bias0)
    dd = out.shape[1] // 2
    return out[:, :dd, :], out[:, dd:, :]


def decoder_forward(p, x, c_t):
    # TODO(synk): predec/postdec module definitions are not provided; modeled
    #             as DilConv/GLU stacks with additive speaker conditioning
    #             (folded into the start-conv bias).
    bias0 = (p["b_start"][None, :] + c_t @ p["spk"])[:, :, None]
    return coder_forward(p, x, bias0)


def convs2s_a2m_forward(params, in_s, in_t, c_t):
    K_s, V_s = encoder_forward(params["enc"], in_s)
    Q_t = decoder_forward(params["predec"], in_t, c_t)
    A, R = attention(K_s, V_s, Q_t)
    # TODO(synk): F.dropout(Q_t, p=0.9) with training=True is stochastic;
    #             applied as identity (eval semantics) for determinism.
    R = jnp.concatenate([R, Q_t], axis=1)
    y = decoder_forward(params["postdec"], R, c_t)
    return y, A


# ----------------------------------------------------------------------------
# Demo
# ----------------------------------------------------------------------------
if __name__ == "__main__":
    B = 2           # batch
    D = 12          # num_mels * reduction_factor (feature dim of in_s / in_t)
    N = 16          # source frames
    T = 8           # target frames
    mid = 32        # mid_ch
    d_attn = 16     # out_ch (attention key/value dim)
    n_spk = 4
    enc_layers, dec_layers = 4, 2

    root = jax.random.PRNGKey(0)
    k_enc, k_pre, k_post, k_s, k_t = jax.random.split(root, 5)

    params = {
        "enc": init_coder(k_enc, D, 2 * d_attn, mid, enc_layers, glu_kernel=5),
        "predec": init_coder(k_pre, D, d_attn, mid, dec_layers,
                             glu_kernel=3, n_spk=n_spk),
        "postdec": init_coder(k_post, 2 * d_attn, D, mid, dec_layers,
                              glu_kernel=3, n_spk=n_spk),
    }

    in_s = jax.random.normal(k_s, (B, D, N), jnp.float32)
    in_t = jax.random.normal(k_t, (B, D, T), jnp.float32)
    c_t = jax.nn.one_hot(jnp.array([0, 2]), n_spk, dtype=jnp.float32)

    y, A = jax.jit(convs2s_a2m_forward)(params, in_s, in_t, c_t)
    jax.block_until_ready((y, A))

    assert y.shape == (B, D, T)
    assert A.shape == (B, N, T)
    # attention columns are probability distributions over source frames
    # (loose tolerance: softmax denominator uses the approx EUP reciprocal).
    assert bool(jnp.allclose(jnp.sum(A, axis=1), 1.0, atol=1e-2))
    print("KERNEL_OK")
</pallas_src>

<mosaic_0001>
module attributes {stable_mosaic.version = 11 : i64} {
  func.func @kernel(%arg0: i32, %arg1: memref<1x12x16xf32, #tpu.memory_space<vmem>>, %arg2: memref<1x32x1xf32, #tpu.memory_space<vmem>>, %arg3: memref<32x12xbf16, #tpu.memory_space<vmem>>, %arg4: memref<4x64x160xbf16, #tpu.memory_space<vmem>>, %arg5: memref<4x64x1xf32, #tpu.memory_space<vmem>>, %arg6: memref<32x32xbf16, #tpu.memory_space<vmem>>, %arg7: memref<32x1xf32, #tpu.memory_space<vmem>>, %arg8: memref<1x32x16xf32, #tpu.memory_space<vmem>>, %arg9: memref<32x124xf32, #tpu.memory_space<vmem>>) attributes {dimension_semantics = [#tpu.dimension_semantics<parallel>], iteration_bounds = array<i64: 2>, scalar_prefetch = 0 : i64, scratch_operands = 1 : i64, tpu.core_type = #tpu.core_type<tc>, window_params = [{transform_indices = @transform_0, window_bounds = array<i64: 1, 12, 16>}, {transform_indices = @transform_1, window_bounds = array<i64: 1, 32, 1>}, {pipeline_mode = #tpu.pipeline_mode<synchronous>, transform_indices = @transform_2, window_bounds = array<i64: 32, 12>}, {pipeline_mode = #tpu.pipeline_mode<synchronous>, transform_indices = @transform_3, window_bounds = array<i64: 4, 64, 160>}, {pipeline_mode = #tpu.pipeline_mode<synchronous>, transform_indices = @transform_4, window_bounds = array<i64: 4, 64, 1>}, {pipeline_mode = #tpu.pipeline_mode<synchronous>, transform_indices = @transform_5, window_bounds = array<i64: 32, 32>}, {pipeline_mode = #tpu.pipeline_mode<synchronous>, transform_indices = @transform_6, window_bounds = array<i64: 32, 1>}, {transform_indices = @transform_7, window_bounds = array<i64: 1, 32, 16>}]} {
    %c0 = arith.constant 0 : index
    %c0_0 = arith.constant 0 : index
    %0 = vector.load %arg3[%c0, %c0_0] : memref<32x12xbf16, #tpu.memory_space<vmem>>, vector<32x12xbf16>
    %c0_1 = arith.constant 0 : index
    %c0_2 = arith.constant 0 : index
    %c0_3 = arith.constant 0 : index
    %1 = vector.load %arg1[%c0_1, %c0_2, %c0_3] : memref<1x12x16xf32, #tpu.memory_space<vmem>>, vector<1x12x16xf32>
    %2 = vector.shape_cast %1 : vector<1x12x16xf32> to vector<12x16xf32>
    %3 = arith.truncf %2 : vector<12x16xf32> to vector<12x16xbf16>
    %cst = arith.constant dense<0.000000e+00> : vector<32x16xf32>
    %4 = tpu.matmul %0, %3, %cst {dimension_numbers = #tpu.dot_dimension_numbers<[1], [0], [0], [1], [0, 0, 1, 1], [], []>} : vector<32x12xbf16>, vector<12x16xbf16>, vector<32x16xf32> -> vector<32x16xf32>
    %c0_4 = arith.constant 0 : index
    %c0_5 = arith.constant 0 : index
    %c0_6 = arith.constant 0 : index
    %5 = vector.load %arg2[%c0_4, %c0_5, %c0_6] : memref<1x32x1xf32, #tpu.memory_space<vmem>>, vector<1x32x1xf32>
    %6 = vector.shape_cast %5 : vector<1x32x1xf32> to vector<32x1xf32>
    %7 = vector.broadcast %6 : vector<32x1xf32> to vector<32x16xf32>
    %8 = arith.addf %4, %7 : vector<32x16xf32>
    %cst_7 = arith.constant 0.000000e+00 : f32
    %9 = vector.broadcast %cst_7 : f32 to vector<32x124xf32>
    %c0_8 = arith.constant 0 : index
    %c0_9 = arith.constant 0 : index
    %10 = vector.load %arg9[%c0_8, %c0_9] : memref<32x124xf32, #tpu.memory_space<vmem>>, vector<32x124xf32>
    tpu.vector_store %arg9[%c0_8, %c0_9], %9 {strides = array<i32>} : memref<32x124xf32, #tpu.memory_space<vmem>>, vector<32x124xf32>,
    %c0_10 = arith.constant 0 : index
    %c54 = arith.constant 54 : index
    %11 = vector.load %arg9[%c0_10, %c54] : memref<32x124xf32, #tpu.memory_space<vmem>>, vector<32x16xf32>
    tpu.vector_store %arg9[%c0_10, %c54], %8 {strides = array<i32>} : memref<32x124xf32, #tpu.memory_space<vmem>>, vector<32x16xf32>,
    %c0_11 = arith.constant 0 : index
    %c52 = arith.constant 52 : index
    %12 = vector.load %arg9[%c0_11, %c52] : memref<32x124xf32, #tpu.memory_space<vmem>>, vector<32x16xf32>
    %c0_12 = arith.constant 0 : index
    %c53 = arith.constant 53 : index
    %13 = vector.load %arg9[%c0_12, %c53] : memref<32x124xf32, #tpu.memory_space<vmem>>, vector<32x16xf32>
    %c0_13 = arith.constant 0 : index
    %c54_14 = arith.constant 54 : index
    %14 = vector.load %arg9[%c0_13, %c54_14] : memref<32x124xf32, #tpu.memory_space<vmem>>, vector<32x16xf32>
    %c0_15 = arith.constant 0 : index
    %c55 = arith.constant 55 : index
    %15 = vector.load %arg9[%c0_15, %c55] : memref<32x124xf32, #tpu.memory_space<vmem>>, vector<32x16xf32>
    %c0_16 = arith.constant 0 : index
    %c56 = arith.constant 56 : index
    %16 = vector.load %arg9[%c0_16, %c56] : memref<32x124xf32, #tpu.memory_space<vmem>>, vector<32x16xf32>
    %17 = tpu.concatenate %12, %13, %14, %15, %16 in 0 : vector<32x16xf32>, vector<32x16xf32>, vector<32x16xf32>, vector<32x16xf32>, vector<32x16xf32> -> vector<160x16xf32>
    %18 = arith.truncf %17 : vector<160x16xf32> to vector<160x16xbf16>
    %c0_17 = arith.constant 0 : index
    %c0_18 = arith.constant 0 : index
    %c0_19 = arith.constant 0 : index
    %19 = vector.load %arg4[%c0_17, %c0_18, %c0_19] : memref<4x64x160xbf16, #tpu.memory_space<vmem>>, vector<1x64x160xbf16>
    %20 = vector.shape_cast %19 : vector<1x64x160xbf16> to vector<64x160xbf16>
    %cst_20 = arith.constant dense<0.000000e+00> : vector<64x16xf32>
    %21 = tpu.matmul %20, %18, %cst_20 {dimension_numbers = #tpu.dot_dimension_numbers<[1], [0], [0], [1], [0, 0, 1, 1], [], []>} : vector<64x160xbf16>, vector<160x16xbf16>, vector<64x16xf32> -> vector<64x16xf32>
    %c0_21 = arith.constant 0 : index
    %c0_22 = arith.constant 0 : index
    %c0_23 = arith.constant 0 : index
    %22 = vector.load %arg5[%c0_21, %c0_22, %c0_23] : memref<4x64x1xf32, #tpu.memory_space<vmem>>, vector<1x64x1xf32>
    %23 = vector.shape_cast %22 : vector<1x64x1xf32> to vector<64x1xf32>
    %24 = vector.broadcast %23 : vector<64x1xf32> to vector<64x16xf32>
    %25 = arith.addf %21, %24 : vector<64x16xf32>
    %26 = vector.extract_strided_slice %25 {offsets = [0, 0], sizes = [32, 16], strides = [1, 1]} : vector<64x16xf32> to vector<32x16xf32>
    %27 = vector.extract_strided_slice %25 {offsets = [32, 0], sizes = [32, 16], strides = [1, 1]} : vector<64x16xf32> to vector<32x16xf32>
    %28 = arith.negf %27 : vector<32x16xf32>
    %29 = math.exp %28 : vector<32x16xf32>
    %cst_24 = arith.constant 1.000000e+00 : f32
    %30 = vector.broadcast %cst_24 : f32 to vector<32x16xf32>
    %31 = arith.addf %30, %29 : vector<32x16xf32>
    %32 = arith.divf %30, %31 : vector<32x16xf32>
    %33 = arith.mulf %26, %32 : vector<32x16xf32>
    %34 = arith.addf %33, %8 : vector<32x16xf32>
    %cst_25 = arith.constant 0.707106769 : f32
    %35 = vector.broadcast %cst_25 : f32 to vector<32x16xf32>
    %36 = arith.mulf %34, %35 : vector<32x16xf32>
    %c0_26 = arith.constant 0 : index
    %c54_27 = arith.constant 54 : index
    %37 = vector.load %arg9[%c0_26, %c54_27] : memref<32x124xf32, #tpu.memory_space<vmem>>, vector<32x16xf32>
    tpu.vector_store %arg9[%c0_26, %c54_27], %36 {strides = array<i32>} : memref<32x124xf32, #tpu.memory_space<vmem>>, vector<32x16xf32>,
    %c0_28 = arith.constant 0 : index
    %c48 = arith.constant 48 : index
    %38 = vector.load %arg9[%c0_28, %c48] : memref<32x124xf32, #tpu.memory_space<vmem>>, vector<32x16xf32>
    %c0_29 = arith.constant 0 : index
    %c51 = arith.constant 51 : index
    %39 = vector.load %arg9[%c0_29, %c51] : memref<32x124xf32, #tpu.memory_space<vmem>>, vector<32x16xf32>
    %c0_30 = arith.constant 0 : index
    %c54_31 = arith.constant 54 : index
    %40 = vector.load %arg9[%c0_30, %c54_31] : memref<32x124xf32, #tpu.memory_space<vmem>>, vector<32x16xf32>
    %c0_32 = arith.constant 0 : index
    %c57 = arith.constant 57 : index
    %41 = vector.load %arg9[%c0_32, %c57] : memref<32x124xf32, #tpu.memory_space<vmem>>, vector<32x16xf32>
    %c0_33 = arith.constant 0 : index
    %c60 = arith.constant 60 : index
    %42 = vector.load %arg9[%c0_33, %c60] : memref<32x124xf32, #tpu.memory_space<vmem>>, vector<32x16xf32>
    %43 = tpu.concatenate %38, %39, %40, %41, %42 in 0 : vector<32x16xf32>, vector<32x16xf32>, vector<32x16xf32>, vector<32x16xf32>, vector<32x16xf32> -> vector<160x16xf32>
    %44 = arith.truncf %43 : vector<160x16xf32> to vector<160x16xbf16>
    %c1 = arith.constant 1 : index
    %c0_34 = arith.constant 0 : index
    %c0_35 = arith.constant 0 : index
    %45 = vector.load %arg4[%c1, %c0_34, %c0_35] : memref<4x64x160xbf16, #tpu.memory_space<vmem>>, vector<1x64x160xbf16>
    %46 = vector.shape_cast %45 : vector<1x64x160xbf16> to vector<64x160xbf16>
    %cst_36 = arith.constant dense<0.000000e+00> : vector<64x16xf32>
    %47 = tpu.matmul %46, %44, %cst_36 {dimension_numbers = #tpu.dot_dimension_numbers<[1], [0], [0], [1], [0, 0, 1, 1], [], []>} : vector<64x160xbf16>, vector<160x16xbf16>, vector<64x16xf32> -> vector<64x16xf32>
    %c1_37 = arith.constant 1 : index
    %c0_38 = arith.constant 0 : index
    %c0_39 = arith.constant 0 : index
    %48 = vector.load %arg5[%c1_37, %c0_38, %c0_39] : memref<4x64x1xf32, #tpu.memory_space<vmem>>, vector<1x64x1xf32>
    %49 = vector.shape_cast %48 : vector<1x64x1xf32> to vector<64x1xf32>
    %50 = vector.broadcast %49 : vector<64x1xf32> to vector<64x16xf32>
    %51 = arith.addf %47, %50 : vector<64x16xf32>
    %52 = vector.extract_strided_slice %51 {offsets = [0, 0], sizes = [32, 16], strides = [1, 1]} : vector<64x16xf32> to vector<32x16xf32>
    %53 = vector.extract_strided_slice %51 {offsets = [32, 0], sizes = [32, 16], strides = [1, 1]} : vector<64x16xf32> to vector<32x16xf32>
    %54 = arith.negf %53 : vector<32x16xf32>
    %55 = math.exp %54 : vector<32x16xf32>
    %cst_40 = arith.constant 1.000000e+00 : f32
    %56 = vector.broadcast %cst_40 : f32 to vector<32x16xf32>
    %57 = arith.addf %56, %55 : vector<32x16xf32>
    %58 = arith.divf %56, %57 : vector<32x16xf32>
    %59 = arith.mulf %52, %58 : vector<32x16xf32>
    %60 = arith.addf %59, %36 : vector<32x16xf32>
    %cst_41 = arith.constant 0.707106769 : f32
    %61 = vector.broadcast %cst_41 : f32 to vector<32x16xf32>
    %62 = arith.mulf %60, %61 : vector<32x16xf32>
    %c0_42 = arith.constant 0 : index
    %c54_43 = arith.constant 54 : index
    %63 = vector.load %arg9[%c0_42, %c54_43] : memref<32x124xf32, #tpu.memory_space<vmem>>, vector<32x16xf32>
    tpu.vector_store %arg9[%c0_42, %c54_43], %62 {strides = array<i32>} : memref<32x124xf32, #tpu.memory_space<vmem>>, vector<32x16xf32>,
    %c0_44 = arith.constant 0 : index
    %c36 = arith.constant 36 : index
    %64 = vector.load %arg9[%c0_44, %c36] : memref<32x124xf32, #tpu.memory_space<vmem>>, vector<32x16xf32>
    %c0_45 = arith.constant 0 : index
    %c45 = arith.constant 45 : index
    %65 = vector.load %arg9[%c0_45, %c45] : memref<32x124xf32, #tpu.memory_space<vmem>>, vector<32x16xf32>
    %c0_46 = arith.constant 0 : index
    %c54_47 = arith.constant 54 : index
    %66 = vector.load %arg9[%c0_46, %c54_47] : memref<32x124xf32, #tpu.memory_space<vmem>>, vector<32x16xf32>
    %c0_48 = arith.constant 0 : index
    %c63 = arith.constant 63 : index
    %67 = vector.load %arg9[%c0_48, %c63] : memref<32x124xf32, #tpu.memory_space<vmem>>, vector<32x16xf32>
    %c0_49 = arith.constant 0 : index
    %c72 = arith.constant 72 : index
    %68 = vector.load %arg9[%c0_49, %c72] : memref<32x124xf32, #tpu.memory_space<vmem>>, vector<32x16xf32>
    %69 = tpu.concatenate %64, %65, %66, %67, %68 in 0 : vector<32x16xf32>, vector<32x16xf32>, vector<32x16xf32>, vector<32x16xf32>, vector<32x16xf32> -> vector<160x16xf32>
    %70 = arith.truncf %69 : vector<160x16xf32> to vector<160x16xbf16>
    %c2 = arith.constant 2 : index
    %c0_50 = arith.constant 0 : index
    %c0_51 = arith.constant 0 : index
    %71 = vector.load %arg4[%c2, %c0_50, %c0_51] : memref<4x64x160xbf16, #tpu.memory_space<vmem>>, vector<1x64x160xbf16>
    %72 = vector.shape_cast %71 : vector<1x64x160xbf16> to vector<64x160xbf16>
    %cst_52 = arith.constant dense<0.000000e+00> : vector<64x16xf32>
    %73 = tpu.matmul %72, %70, %cst_52 {dimension_numbers = #tpu.dot_dimension_numbers<[1], [0], [0], [1], [0, 0, 1, 1], [], []>} : vector<64x160xbf16>, vector<160x16xbf16>, vector<64x16xf32> -> vector<64x16xf32>
    %c2_53 = arith.constant 2 : index
    %c0_54 = arith.constant 0 : index
    %c0_55 = arith.constant 0 : index
    %74 = vector.load %arg5[%c2_53, %c0_54, %c0_55] : memref<4x64x1xf32, #tpu.memory_space<vmem>>, vector<1x64x1xf32>
    %75 = vector.shape_cast %74 : vector<1x64x1xf32> to vector<64x1xf32>
    %76 = vector.broadcast %75 : vector<64x1xf32> to vector<64x16xf32>
    %77 = arith.addf %73, %76 : vector<64x16xf32>
    %78 = vector.extract_strided_slice %77 {offsets = [0, 0], sizes = [32, 16], strides = [1, 1]} : vector<64x16xf32> to vector<32x16xf32>
    %79 = vector.extract_strided_slice %77 {offsets = [32, 0], sizes = [32, 16], strides = [1, 1]} : vector<64x16xf32> to vector<32x16xf32>
    %80 = arith.negf %79 : vector<32x16xf32>
    %81 = math.exp %80 : vector<32x16xf32>
    %cst_56 = arith.constant 1.000000e+00 : f32
    %82 = vector.broadcast %cst_56 : f32 to vector<32x16xf32>
    %83 = arith.addf %82, %81 : vector<32x16xf32>
    %84 = arith.divf %82, %83 : vector<32x16xf32>
    %85 = arith.mulf %78, %84 : vector<32x16xf32>
    %86 = arith.addf %85, %62 : vector<32x16xf32>
    %cst_57 = arith.constant 0.707106769 : f32
    %87 = vector.broadcast %cst_57 : f32 to vector<32x16xf32>
    %88 = arith.mulf %86, %87 : vector<32x16xf32>
    %c0_58 = arith.constant 0 : index
    %c54_59 = arith.constant 54 : index
    %89 = vector.load %arg9[%c0_58, %c54_59] : memref<32x124xf32, #tpu.memory_space<vmem>>, vector<32x16xf32>
    tpu.vector_store %arg9[%c0_58, %c54_59], %88 {strides = array<i32>} : memref<32x124xf32, #tpu.memory_space<vmem>>, vector<32x16xf32>,
    %c0_60 = arith.constant 0 : index
    %c0_61 = arith.constant 0 : index
    %90 = vector.load %arg9[%c0_60, %c0_61] : memref<32x124xf32, #tpu.memory_space<vmem>>, vector<32x16xf32>
    %c0_62 = arith.constant 0 : index
    %c27 = arith.constant 27 : index
    %91 = vector.load %arg9[%c0_62, %c27] : memref<32x124xf32, #tpu.memory_space<vmem>>, vector<32x16xf32>
    %c0_63 = arith.constant 0 : index
    %c54_64 = arith.constant 54 : index
    %92 = vector.load %arg9[%c0_63, %c54_64] : memref<32x124xf32, #tpu.memory_space<vmem>>, vector<32x16xf32>
    %c0_65 = arith.constant 0 : index
    %c81 = arith.constant 81 : index
    %93 = vector.load %arg9[%c0_65, %c81] : memref<32x124xf32, #tpu.memory_space<vmem>>, vector<32x16xf32>
    %c0_66 = arith.constant 0 : index
    %c108 = arith.constant 108 : index
    %94 = vector.load %arg9[%c0_66, %c108] : memref<32x124xf32, #tpu.memory_space<vmem>>, vector<32x16xf32>
    %95 = tpu.concatenate %90, %91, %92, %93, %94 in 0 : vector<32x16xf32>, vector<32x16xf32>, vector<32x16xf32>, vector<32x16xf32>, vector<32x16xf32> -> vector<160x16xf32>
    %96 = arith.truncf %95 : vector<160x16xf32> to vector<160x16xbf16>
    %c3 = arith.constant 3 : index
    %c0_67 = arith.constant 0 : index
    %c0_68 = arith.constant 0 : index
    %97 = vector.load %arg4[%c3, %c0_67, %c0_68] : memref<4x64x160xbf16, #tpu.memory_space<vmem>>, vector<1x64x160xbf16>
    %98 = vector.shape_cast %97 : vector<1x64x160xbf16> to vector<64x160xbf16>
    %cst_69 = arith.constant dense<0.000000e+00> : vector<64x16xf32>
    %99 = tpu.matmul %98, %96, %cst_69 {dimension_numbers = #tpu.dot_dimension_numbers<[1], [0], [0], [1], [0, 0, 1, 1], [], []>} : vector<64x160xbf16>, vector<160x16xbf16>, vector<64x16xf32> -> vector<64x16xf32>
    %c3_70 = arith.constant 3 : index
    %c0_71 = arith.constant 0 : index
    %c0_72 = arith.constant 0 : index
    %100 = vector.load %arg5[%c3_70, %c0_71, %c0_72] : memref<4x64x1xf32, #tpu.memory_space<vmem>>, vector<1x64x1xf32>
    %101 = vector.shape_cast %100 : vector<1x64x1xf32> to vector<64x1xf32>
    %102 = vector.broadcast %101 : vector<64x1xf32> to vector<64x16xf32>
    %103 = arith.addf %99, %102 : vector<64x16xf32>
    %104 = vector.extract_strided_slice %103 {offsets = [0, 0], sizes = [32, 16], strides = [1, 1]} : vector<64x16xf32> to vector<32x16xf32>
    %105 = vector.extract_strided_slice %103 {offsets = [32, 0], sizes = [32, 16], strides = [1, 1]} : vector<64x16xf32> to vector<32x16xf32>
    %106 = arith.negf %105 : vector<32x16xf32>
    %107 = math.exp %106 : vector<32x16xf32>
    %cst_73 = arith.constant 1.000000e+00 : f32
    %108 = vector.broadcast %cst_73 : f32 to vector<32x16xf32>
    %109 = arith.addf %108, %107 : vector<32x16xf32>
    %110 = arith.divf %108, %109 : vector<32x16xf32>
    %111 = arith.mulf %104, %110 : vector<32x16xf32>
    %112 = arith.addf %111, %88 : vector<32x16xf32>
    %cst_74 = arith.constant 0.707106769 : f32
    %113 = vector.broadcast %cst_74 : f32 to vector<32x16xf32>
    %114 = arith.mulf %112, %113 : vector<32x16xf32>
    %c0_75 = arith.constant 0 : index
    %c0_76 = arith.constant 0 : index
    %115 = vector.load %arg6[%c0_75, %c0_76] : memref<32x32xbf16, #tpu.memory_space<vmem>>, vector<32x32xbf16>
    %116 = arith.truncf %114 : vector<32x16xf32> to vector<32x16xbf16>
    %cst_77 = arith.constant dense<0.000000e+00> : vector<32x16xf32>
    %117 = tpu.matmul %115, %116, %cst_77 {dimension_numbers = #tpu.dot_dimension_numbers<[1], [0], [0], [1], [0, 0, 1, 1], [], []>} : vector<32x32xbf16>, vector<32x16xbf16>, vector<32x16xf32> -> vector<32x16xf32>
    %c0_78 = arith.constant 0 : index
    %c0_79 = arith.constant 0 : index
    %118 = vector.load %arg7[%c0_78, %c0_79] : memref<32x1xf32, #tpu.memory_space<vmem>>, vector<32x1xf32>
    %119 = vector.broadcast %118 : vector<32x1xf32> to vector<32x16xf32>
    %120 = arith.addf %117, %119 : vector<32x16xf32>
    %c0_80 = arith.constant 0 : index
    %c0_81 = arith.constant 0 : index
    %c0_82 = arith.constant 0 : index
    %121 = vector.load %arg8[%c0_80, %c0_81, %c0_82] : memref<1x32x16xf32, #tpu.memory_space<vmem>>, vector<1x32x16xf32>
    %122 = vector.shape_cast %121 : vector<1x32x16xf32> to vector<32x16xf32>
    %123 = vector.shape_cast %120 : vector<32x16xf32> to vector<1x32x16xf32>
    tpu.vector_store %arg8[%c0_80, %c0_81, %c0_82], %123 {strides = array<i32>} : memref<1x32x16xf32, #tpu.memory_space<vmem>>, vector<1x32x16xf32>,
    return
  }
  func.func @transform_0(%arg0: i32) -> (i32, i32, i32) {
    %c0_i32 = arith.constant 0 : i32
    %c0_i32_0 = arith.constant 0 : i32
    %c0_i32_1 = arith.constant 0 : i32
    return %arg0, %c0_i32, %c0_i32_0 : i32, i32, i32
  }
  func.func @transform_1(%arg0: i32) -> (i32, i32, i32) {
    %c0_i32 = arith.constant 0 : i32
    %c0_i32_0 = arith.constant 0 : i32
    %c0_i32_1 = arith.constant 0 : i32
    return %arg0, %c0_i32, %c0_i32_0 : i32, i32, i32
  }
  func.func @transform_2(%arg0: i32) -> (i32, i32) {
    %c0_i32 = arith.constant 0 : i32
    %c0_i32_0 = arith.constant 0 : i32
    %c0_i32_1 = arith.constant 0 : i32
    return %c0_i32, %c0_i32_0 : i32, i32
  }
  func.func @transform_3(%arg0: i32) -> (i32, i32, i32) {
    %c0_i32 = arith.constant 0 : i32
    %c0_i32_0 = arith.constant 0 : i32
    %c0_i32_1 = arith.constant 0 : i32
    %c0_i32_2 = arith.constant 0 : i32
    return %c0_i32, %c0_i32_0, %c0_i32_1 : i32, i32, i32
  }
  func.func @transform_4(%arg0: i32) -> (i32, i32, i32) {
    %c0_i32 = arith.constant 0 : i32
    %c0_i32_0 = arith.constant 0 : i32
    %c0_i32_1 = arith.constant 0 : i32
    %c0_i32_2 = arith.constant 0 : i32
    return %c0_i32, %c0_i32_0, %c0_i32_1 : i32, i32, i32
  }
  func.func @transform_5(%arg0: i32) -> (i32, i32) {
    %c0_i32 = arith.constant 0 : i32
    %c0_i32_0 = arith.constant 0 : i32
    %c0_i32_1 = arith.constant 0 : i32
    return %c0_i32, %c0_i32_0 : i32, i32
  }
  func.func @transform_6(%arg0: i32) -> (i32, i32) {
    %c0_i32 = arith.constant 0 : i32
    %c0_i32_0 = arith.constant 0 : i32
    %c0_i32_1 = arith.constant 0 : i32
    return %c0_i32, %c0_i32_0 : i32, i32
  }
  func.func @transform_7(%arg0: i32) -> (i32, i32, i32) {
    %c0_i32 = arith.constant 0 : i32
    %c0_i32_0 = arith.constant 0 : i32
    %c0_i32_1 = arith.constant 0 : i32
    return %arg0, %c0_i32, %c0_i32_0 : i32, i32, i32
  }
}

module attributes {stable_mosaic.version = 11 : i64} {
  func.func @kernel(%arg0: i32, %arg1: memref<1x12x8xf32, #tpu.memory_space<vmem>>, %arg2: memref<1x32x1xf32, #tpu.memory_space<vmem>>, %arg3: memref<32x12xbf16, #tpu.memory_space<vmem>>, %arg4: memref<2x64x96xbf16, #tpu.memory_space<vmem>>, %arg5: memref<2x64x1xf32, #tpu.memory_space<vmem>>, %arg6: memref<16x32xbf16, #tpu.memory_space<vmem>>, %arg7: memref<16x1xf32, #tpu.memory_space<vmem>>, %arg8: memref<1x16x8xf32, #tpu.memory_space<vmem>>, %arg9: memref<32x14xf32, #tpu.memory_space<vmem>>) attributes {dimension_semantics = [#tpu.dimension_semantics<parallel>], iteration_bounds = array<i64: 2>, scalar_prefetch = 0 : i64, scratch_operands = 1 : i64, tpu.core_type = #tpu.core_type<tc>, window_params = [{transform_indices = @transform_0, window_bounds = array<i64: 1, 12, 8>}, {transform_indices = @transform_1, window_bounds = array<i64: 1, 32, 1>}, {pipeline_mode = #tpu.pipeline_mode<synchronous>, transform_indices = @transform_2, window_bounds = array<i64: 32, 12>}, {pipeline_mode = #tpu.pipeline_mode<synchronous>, transform_indices = @transform_3, window_bounds = array<i64: 2, 64, 96>}, {pipeline_mode = #tpu.pipeline_mode<synchronous>, transform_indices = @transform_4, window_bounds = array<i64: 2, 64, 1>}, {pipeline_mode = #tpu.pipeline_mode<synchronous>, transform_indices = @transform_5, window_bounds = array<i64: 16, 32>}, {pipeline_mode = #tpu.pipeline_mode<synchronous>, transform_indices = @transform_6, window_bounds = array<i64: 16, 1>}, {transform_indices = @transform_7, window_bounds = array<i64: 1, 16, 8>}]} {
    %c0 = arith.constant 0 : index
    %c0_0 = arith.constant 0 : index
    %0 = vector.load %arg3[%c0, %c0_0] : memref<32x12xbf16, #tpu.memory_space<vmem>>, vector<32x12xbf16>
    %c0_1 = arith.constant 0 : index
    %c0_2 = arith.constant 0 : index
    %c0_3 = arith.constant 0 : index
    %1 = vector.load %arg1[%c0_1, %c0_2, %c0_3] : memref<1x12x8xf32, #tpu.memory_space<vmem>>, vector<1x12x8xf32>
    %2 = vector.shape_cast %1 : vector<1x12x8xf32> to vector<12x8xf32>
    %3 = arith.truncf %2 : vector<12x8xf32> to vector<12x8xbf16>
    %cst = arith.constant dense<0.000000e+00> : vector<32x8xf32>
    %4 = tpu.matmul %0, %3, %cst {dimension_numbers = #tpu.dot_dimension_numbers<[1], [0], [0], [1], [0, 0, 1, 1], [], []>} : vector<32x12xbf16>, vector<12x8xbf16>, vector<32x8xf32> -> vector<32x8xf32>
    %c0_4 = arith.constant 0 : index
    %c0_5 = arith.constant 0 : index
    %c0_6 = arith.constant 0 : index
    %5 = vector.load %arg2[%c0_4, %c0_5, %c0_6] : memref<1x32x1xf32, #tpu.memory_space<vmem>>, vector<1x32x1xf32>
    %6 = vector.shape_cast %5 : vector<1x32x1xf32> to vector<32x1xf32>
    %7 = vector.broadcast %6 : vector<32x1xf32> to vector<32x8xf32>
    %8 = arith.addf %4, %7 : vector<32x8xf32>
    %cst_7 = arith.constant 0.000000e+00 : f32
    %9 = vector.broadcast %cst_7 : f32 to vector<32x14xf32>
    %c0_8 = arith.constant 0 : index
    %c0_9 = arith.constant 0 : index
    %10 = vector.load %arg9[%c0_8, %c0_9] : memref<32x14xf32, #tpu.memory_space<vmem>>, vector<32x14xf32>
    tpu.vector_store %arg9[%c0_8, %c0_9], %9 {strides = array<i32>} : memref<32x14xf32, #tpu.memory_space<vmem>>, vector<32x14xf32>,
    %c0_10 = arith.constant 0 : index
    %c3 = arith.constant 3 : index
    %11 = vector.load %arg9[%c0_10, %c3] : memref<32x14xf32, #tpu.memory_space<vmem>>, vector<32x8xf32>
    tpu.vector_store %arg9[%c0_10, %c3], %8 {strides = array<i32>} : memref<32x14xf32, #tpu.memory_space<vmem>>, vector<32x8xf32>,
    %c0_11 = arith.constant 0 : index
    %c2 = arith.constant 2 : index
    %12 = vector.load %arg9[%c0_11, %c2] : memref<32x14xf32, #tpu.memory_space<vmem>>, vector<32x8xf32>
    %c0_12 = arith.constant 0 : index
    %c3_13 = arith.constant 3 : index
    %13 = vector.load %arg9[%c0_12, %c3_13] : memref<32x14xf32, #tpu.memory_space<vmem>>, vector<32x8xf32>
    %c0_14 = arith.constant 0 : index
    %c4 = arith.constant 4 : index
    %14 = vector.load %arg9[%c0_14, %c4] : memref<32x14xf32, #tpu.memory_space<vmem>>, vector<32x8xf32>
    %15 = tpu.concatenate %12, %13, %14 in 0 : vector<32x8xf32>, vector<32x8xf32>, vector<32x8xf32> -> vector<96x8xf32>
    %16 = arith.truncf %15 : vector<96x8xf32> to vector<96x8xbf16>
    %c0_15 = arith.constant 0 : index
    %c0_16 = arith.constant 0 : index
    %c0_17 = arith.constant 0 : index
    %17 = vector.load %arg4[%c0_15, %c0_16, %c0_17] : memref<2x64x96xbf16, #tpu.memory_space<vmem>>, vector<1x64x96xbf16>
    %18 = vector.shape_cast %17 : vector<1x64x96xbf16> to vector<64x96xbf16>
    %cst_18 = arith.constant dense<0.000000e+00> : vector<64x8xf32>
    %19 = tpu.matmul %18, %16, %cst_18 {dimension_numbers = #tpu.dot_dimension_numbers<[1], [0], [0], [1], [0, 0, 1, 1], [], []>} : vector<64x96xbf16>, vector<96x8xbf16>, vector<64x8xf32> -> vector<64x8xf32>
    %c0_19 = arith.constant 0 : index
    %c0_20 = arith.constant 0 : index
    %c0_21 = arith.constant 0 : index
    %20 = vector.load %arg5[%c0_19, %c0_20, %c0_21] : memref<2x64x1xf32, #tpu.memory_space<vmem>>, vector<1x64x1xf32>
    %21 = vector.shape_cast %20 : vector<1x64x1xf32> to vector<64x1xf32>
    %22 = vector.broadcast %21 : vector<64x1xf32> to vector<64x8xf32>
    %23 = arith.addf %19, %22 : vector<64x8xf32>
    %24 = vector.extract_strided_slice %23 {offsets = [0, 0], sizes = [32, 8], strides = [1, 1]} : vector<64x8xf32> to vector<32x8xf32>
    %25 = vector.extract_strided_slice %23 {offsets = [32, 0], sizes = [32, 8], strides = [1, 1]} : vector<64x8xf32> to vector<32x8xf32>
    %26 = arith.negf %25 : vector<32x8xf32>
    %27 = math.exp %26 : vector<32x8xf32>
    %cst_22 = arith.constant 1.000000e+00 : f32
    %28 = vector.broadcast %cst_22 : f32 to vector<32x8xf32>
    %29 = arith.addf %28, %27 : vector<32x8xf32>
    %30 = arith.divf %28, %29 : vector<32x8xf32>
    %31 = arith.mulf %24, %30 : vector<32x8xf32>
    %32 = arith.addf %31, %8 : vector<32x8xf32>
    %cst_23 = arith.constant 0.707106769 : f32
    %33 = vector.broadcast %cst_23 : f32 to vector<32x8xf32>
    %34 = arith.mulf %32, %33 : vector<32x8xf32>
    %c0_24 = arith.constant 0 : index
    %c3_25 = arith.constant 3 : index
    %35 = vector.load %arg9[%c0_24, %c3_25] : memref<32x14xf32, #tpu.memory_space<vmem>>, vector<32x8xf32>
    tpu.vector_store %arg9[%c0_24, %c3_25], %34 {strides = array<i32>} : memref<32x14xf32, #tpu.memory_space<vmem>>, vector<32x8xf32>,
    %c0_26 = arith.constant 0 : index
    %c0_27 = arith.constant 0 : index
    %36 = vector.load %arg9[%c0_26, %c0_27] : memref<32x14xf32, #tpu.memory_space<vmem>>, vector<32x8xf32>
    %c0_28 = arith.constant 0 : index
    %c3_29 = arith.constant 3 : index
    %37 = vector.load %arg9[%c0_28, %c3_29] : memref<32x14xf32, #tpu.memory_space<vmem>>, vector<32x8xf32>
    %c0_30 = arith.constant 0 : index
    %c6 = arith.constant 6 : index
    %38 = vector.load %arg9[%c0_30, %c6] : memref<32x14xf32, #tpu.memory_space<vmem>>, vector<32x8xf32>
    %39 = tpu.concatenate %36, %37, %38 in 0 : vector<32x8xf32>, vector<32x8xf32>, vector<32x8xf32> -> vector<96x8xf32>
    %40 = arith.truncf %39 : vector<96x8xf32> to vector<96x8xbf16>
    %c1 = arith.constant 1 : index
    %c0_31 = arith.constant 0 : index
    %c0_32 = arith.constant 0 : index
    %41 = vector.load %arg4[%c1, %c0_31, %c0_32] : memref<2x64x96xbf16, #tpu.memory_space<vmem>>, vector<1x64x96xbf16>
    %42 = vector.shape_cast %41 : vector<1x64x96xbf16> to vector<64x96xbf16>
    %cst_33 = arith.constant dense<0.000000e+00> : vector<64x8xf32>
    %43 = tpu.matmul %42, %40, %cst_33 {dimension_numbers = #tpu.dot_dimension_numbers<[1], [0], [0], [1], [0, 0, 1, 1], [], []>} : vector<64x96xbf16>, vector<96x8xbf16>, vector<64x8xf32> -> vector<64x8xf32>
    %c1_34 = arith.constant 1 : index
    %c0_35 = arith.constant 0 : index
    %c0_36 = arith.constant 0 : index
    %44 = vector.load %arg5[%c1_34, %c0_35, %c0_36] : memref<2x64x1xf32, #tpu.memory_space<vmem>>, vector<1x64x1xf32>
    %45 = vector.shape_cast %44 : vector<1x64x1xf32> to vector<64x1xf32>
    %46 = vector.broadcast %45 : vector<64x1xf32> to vector<64x8xf32>
    %47 = arith.addf %43, %46 : vector<64x8xf32>
    %48 = vector.extract_strided_slice %47 {offsets = [0, 0], sizes = [32, 8], strides = [1, 1]} : vector<64x8xf32> to vector<32x8xf32>
    %49 = vector.extract_strided_slice %47 {offsets = [32, 0], sizes = [32, 8], strides = [1, 1]} : vector<64x8xf32> to vector<32x8xf32>
    %50 = arith.negf %49 : vector<32x8xf32>
    %51 = math.exp %50 : vector<32x8xf32>
    %cst_37 = arith.constant 1.000000e+00 : f32
    %52 = vector.broadcast %cst_37 : f32 to vector<32x8xf32>
    %53 = arith.addf %52, %51 : vector<32x8xf32>
    %54 = arith.divf %52, %53 : vector<32x8xf32>
    %55 = arith.mulf %48, %54 : vector<32x8xf32>
    %56 = arith.addf %55, %34 : vector<32x8xf32>
    %cst_38 = arith.constant 0.707106769 : f32
    %57 = vector.broadcast %cst_38 : f32 to vector<32x8xf32>
    %58 = arith.mulf %56, %57 : vector<32x8xf32>
    %c0_39 = arith.constant 0 : index
    %c0_40 = arith.constant 0 : index
    %59 = vector.load %arg6[%c0_39, %c0_40] : memref<16x32xbf16, #tpu.memory_space<vmem>>, vector<16x32xbf16>
    %60 = arith.truncf %58 : vector<32x8xf32> to vector<32x8xbf16>
    %cst_41 = arith.constant dense<0.000000e+00> : vector<16x8xf32>
    %61 = tpu.matmul %59, %60, %cst_41 {dimension_numbers = #tpu.dot_dimension_numbers<[1], [0], [0], [1], [0, 0, 1, 1], [], []>} : vector<16x32xbf16>, vector<32x8xbf16>, vector<16x8xf32> -> vector<16x8xf32>
    %c0_42 = arith.constant 0 : index
    %c0_43 = arith.constant 0 : index
    %62 = vector.load %arg7[%c0_42, %c0_43] : memref<16x1xf32, #tpu.memory_space<vmem>>, vector<16x1xf32>
    %63 = vector.broadcast %62 : vector<16x1xf32> to vector<16x8xf32>
    %64 = arith.addf %61, %63 : vector<16x8xf32>
    %c0_44 = arith.constant 0 : index
    %c0_45 = arith.constant 0 : index
    %c0_46 = arith.constant 0 : index
    %65 = vector.load %arg8[%c0_44, %c0_45, %c0_46] : memref<1x16x8xf32, #tpu.memory_space<vmem>>, vector<1x16x8xf32>
    %66 = vector.shape_cast %65 : vector<1x16x8xf32> to vector<16x8xf32>
    %67 = vector.shape_cast %64 : vector<16x8xf32> to vector<1x16x8xf32>
    tpu.vector_store %arg8[%c0_44, %c0_45, %c0_46], %67 {strides = array<i32>} : memref<1x16x8xf32, #tpu.memory_space<vmem>>, vector<1x16x8xf32>,
    return
  }
  func.func @transform_0(%arg0: i32) -> (i32, i32, i32) {
    %c0_i32 = arith.constant 0 : i32
    %c0_i32_0 = arith.constant 0 : i32
    %c0_i32_1 = arith.constant 0 : i32
    return %arg0, %c0_i32, %c0_i32_0 : i32, i32, i32
  }
  func.func @transform_1(%arg0: i32) -> (i32, i32, i32) {
    %c0_i32 = arith.constant 0 : i32
    %c0_i32_0 = arith.constant 0 : i32
    %c0_i32_1 = arith.constant 0 : i32
    return %arg0, %c0_i32, %c0_i32_0 : i32, i32, i32
  }
  func.func @transform_2(%arg0: i32) -> (i32, i32) {
    %c0_i32 = arith.constant 0 : i32
    %c0_i32_0 = arith.constant 0 : i32
    %c0_i32_1 = arith.constant 0 : i32
    return %c0_i32, %c0_i32_0 : i32, i32
  }
  func.func @transform_3(%arg0: i32) -> (i32, i32, i32) {
    %c0_i32 = arith.constant 0 : i32
    %c0_i32_0 = arith.constant 0 : i32
    %c0_i32_1 = arith.constant 0 : i32
    %c0_i32_2 = arith.constant 0 : i32
    return %c0_i32, %c0_i32_0, %c0_i32_1 : i32, i32, i32
  }
  func.func @transform_4(%arg0: i32) -> (i32, i32, i32) {
    %c0_i32 = arith.constant 0 : i32
    %c0_i32_0 = arith.constant 0 : i32
    %c0_i32_1 = arith.constant 0 : i32
    %c0_i32_2 = arith.constant 0 : i32
    return %c0_i32, %c0_i32_0, %c0_i32_1 : i32, i32, i32
  }
  func.func @transform_5(%arg0: i32) -> (i32, i32) {
    %c0_i32 = arith.constant 0 : i32
    %c0_i32_0 = arith.constant 0 : i32
    %c0_i32_1 = arith.constant 0 : i32
    return %c0_i32, %c0_i32_0 : i32, i32
  }
  func.func @transform_6(%arg0: i32) -> (i32, i32) {
    %c0_i32 = arith.constant 0 : i32
    %c0_i32_0 = arith.constant 0 : i32
    %c0_i32_1 = arith.constant 0 : i32
    return %c0_i32, %c0_i32_0 : i32, i32
  }
  func.func @transform_7(%arg0: i32) -> (i32, i32, i32) {
    %c0_i32 = arith.constant 0 : i32
    %c0_i32_0 = arith.constant 0 : i32
    %c0_i32_1 = arith.constant 0 : i32
    return %arg0, %c0_i32, %c0_i32_0 : i32, i32, i32
  }
}

module attributes {stable_mosaic.version = 11 : i64} {
  func.func @_attn_kernel(%arg0: i32, %arg1: memref<1x16x16xbf16, #tpu.memory_space<vmem>>, %arg2: memref<1x16x16xbf16, #tpu.memory_space<vmem>>, %arg3: memref<1x16x8xbf16, #tpu.memory_space<vmem>>, %arg4: memref<1x16x8xf32, #tpu.memory_space<vmem>>, %arg5: memref<1x16x8xf32, #tpu.memory_space<vmem>>) attributes {dimension_semantics = [#tpu.dimension_semantics<parallel>], iteration_bounds = array<i64: 2>, scalar_prefetch = 0 : i64, scratch_operands = 0 : i64, tpu.core_type = #tpu.core_type<tc>, window_params = [{transform_indices = @transform_0, window_bounds = array<i64: 1, 16, 16>}, {transform_indices = @transform_1, window_bounds = array<i64: 1, 16, 16>}, {transform_indices = @transform_2, window_bounds = array<i64: 1, 16, 8>}, {transform_indices = @transform_3, window_bounds = array<i64: 1, 16, 8>}, {transform_indices = @transform_4, window_bounds = array<i64: 1, 16, 8>}]} {
    %c0 = arith.constant 0 : index
    %c0_0 = arith.constant 0 : index
    %c0_1 = arith.constant 0 : index
    %0 = vector.load %arg1[%c0, %c0_0, %c0_1] : memref<1x16x16xbf16, #tpu.memory_space<vmem>>, vector<1x16x16xbf16>
    %1 = vector.shape_cast %0 : vector<1x16x16xbf16> to vector<16x16xbf16>
    %c0_2 = arith.constant 0 : index
    %c0_3 = arith.constant 0 : index
    %c0_4 = arith.constant 0 : index
    %2 = vector.load %arg3[%c0_2, %c0_3, %c0_4] : memref<1x16x8xbf16, #tpu.memory_space<vmem>>, vector<1x16x8xbf16>
    %3 = vector.shape_cast %2 : vector<1x16x8xbf16> to vector<16x8xbf16>
    %cst = arith.constant dense<0.000000e+00> : vector<16x8xf32>
    %4 = tpu.matmul %1, %3, %cst {dimension_numbers = #tpu.dot_dimension_numbers<[0], [0], [1], [1], [0, 1, 1, 1], [], []>} : vector<16x16xbf16>, vector<16x8xbf16>, vector<16x8xf32> -> vector<16x8xf32>
    %cst_5 = arith.constant 2.500000e-01 : f32
    %5 = vector.broadcast %cst_5 : f32 to vector<16x8xf32>
    %6 = arith.mulf %4, %5 : vector<16x8xf32>
    %cst_6 = arith.constant dense<0xFF800000> : vector<8xf32>
    %7 = vector.multi_reduction <maximumf>, %6, %cst_6 [0] : vector<16x8xf32> to vector<8xf32>
    %8 = vector.shape_cast %7 : vector<8xf32> to vector<1x8xf32>
    %9 = vector.broadcast %8 : vector<1x8xf32> to vector<16x8xf32>
    %10 = arith.subf %6, %9 : vector<16x8xf32>
    %11 = math.exp %10 : vector<16x8xf32>
    %cst_7 = arith.constant dense<0.000000e+00> : vector<8xf32>
    %12 = vector.multi_reduction <add>, %11, %cst_7 [0] : vector<16x8xf32> to vector<8xf32>
    %13 = vector.shape_cast %12 : vector<8xf32> to vector<1x8xf32>
    %14 = tpu.reciprocal %13 {approx = true} : vector<1x8xf32> -> vector<1x8xf32>
    %15 = vector.broadcast %14 : vector<1x8xf32> to vector<16x8xf32>
    %16 = arith.mulf %11, %15 : vector<16x8xf32>
    %c0_8 = arith.constant 0 : index
    %c0_9 = arith.constant 0 : index
    %c0_10 = arith.constant 0 : index
    %17 = vector.load %arg4[%c0_8, %c0_9, %c0_10] : memref<1x16x8xf32, #tpu.memory_space<vmem>>, vector<1x16x8xf32>
    %18 = vector.shape_cast %17 : vector<1x16x8xf32> to vector<16x8xf32>
    %19 = vector.shape_cast %16 : vector<16x8xf32> to vector<1x16x8xf32>
    tpu.vector_store %arg4[%c0_8, %c0_9, %c0_10], %19 {strides = array<i32>} : memref<1x16x8xf32, #tpu.memory_space<vmem>>, vector<1x16x8xf32>,
    %c0_11 = arith.constant 0 : index
    %c0_12 = arith.constant 0 : index
    %c0_13 = arith.constant 0 : index
    %20 = vector.load %arg2[%c0_11, %c0_12, %c0_13] : memref<1x16x16xbf16, #tpu.memory_space<vmem>>, vector<1x16x16xbf16>
    %21 = vector.shape_cast %20 : vector<1x16x16xbf16> to vector<16x16xbf16>
    %22 = arith.truncf %16 : vector<16x8xf32> to vector<16x8xbf16>
    %cst_14 = arith.constant dense<0.000000e+00> : vector<16x8xf32>
    %23 = tpu.matmul %21, %22, %cst_14 {dimension_numbers = #tpu.dot_dimension_numbers<[1], [0], [0], [1], [0, 0, 1, 1], [], []>} : vector<16x16xbf16>, vector<16x8xbf16>, vector<16x8xf32> -> vector<16x8xf32>
    %c0_15 = arith.constant 0 : index
    %c0_16 = arith.constant 0 : index
    %c0_17 = arith.constant 0 : index
    %24 = vector.load %arg5[%c0_15, %c0_16, %c0_17] : memref<1x16x8xf32, #tpu.memory_space<vmem>>, vector<1x16x8xf32>
    %25 = vector.shape_cast %24 : vector<1x16x8xf32> to vector<16x8xf32>
    %26 = vector.shape_cast %23 : vector<16x8xf32> to vector<1x16x8xf32>
    tpu.vector_store %arg5[%c0_15, %c0_16, %c0_17], %26 {strides = array<i32>} : memref<1x16x8xf32, #tpu.memory_space<vmem>>, vector<1x16x8xf32>,
    return
  }
  func.func @transform_0(%arg0: i32) -> (i32, i32, i32) {
    %c0_i32 = arith.constant 0 : i32
    %c0_i32_0 = arith.constant 0 : i32
    %c0_i32_1 = arith.constant 0 : i32
    return %arg0, %c0_i32, %c0_i32_0 : i32, i32, i32
  }
  func.func @transform_1(%arg0: i32) -> (i32, i32, i32) {
    %c0_i32 = arith.constant 0 : i32
    %c0_i32_0 = arith.constant 0 : i32
    %c0_i32_1 = arith.constant 0 : i32
    return %arg0, %c0_i32, %c0_i32_0 : i32, i32, i32
  }
  func.func @transform_2(%arg0: i32) -> (i32, i32, i32) {
    %c0_i32 = arith.constant 0 : i32
    %c0_i32_0 = arith.constant 0 : i32
    %c0_i32_1 = arith.constant 0 : i32
    return %arg0, %c0_i32, %c0_i32_0 : i32, i32, i32
  }
  func.func @transform_3(%arg0: i32) -> (i32, i32, i32) {
    %c0_i32 = arith.constant 0 : i32
    %c0_i32_0 = arith.constant 0 : i32
    %c0_i32_1 = arith.constant 0 : i32
    return %arg0, %c0_i32, %c0_i32_0 : i32, i32, i32
  }
  func.func @transform_4(%arg0: i32) -> (i32, i32, i32) {
    %c0_i32 = arith.constant 0 : i32
    %c0_i32_0 = arith.constant 0 : i32
    %c0_i32_1 = arith.constant 0 : i32
    return %arg0, %c0_i32, %c0_i32_0 : i32, i32, i32
  }
}

module attributes {stable_mosaic.version = 11 : i64} {
  func.func @kernel(%arg0: i32, %arg1: memref<1x32x8xf32, #tpu.memory_space<vmem>>, %arg2: memref<1x32x1xf32, #tpu.memory_space<vmem>>, %arg3: memref<32x32xbf16, #tpu.memory_space<vmem>>, %arg4: memref<2x64x96xbf16, #tpu.memory_space<vmem>>, %arg5: memref<2x64x1xf32, #tpu.memory_space<vmem>>, %arg6: memref<12x32xbf16, #tpu.memory_space<vmem>>, %arg7: memref<12x1xf32, #tpu.memory_space<vmem>>, %arg8: memref<1x12x8xf32, #tpu.memory_space<vmem>>, %arg9: memref<32x14xf32, #tpu.memory_space<vmem>>) attributes {dimension_semantics = [#tpu.dimension_semantics<parallel>], iteration_bounds = array<i64: 2>, scalar_prefetch = 0 : i64, scratch_operands = 1 : i64, tpu.core_type = #tpu.core_type<tc>, window_params = [{transform_indices = @transform_0, window_bounds = array<i64: 1, 32, 8>}, {transform_indices = @transform_1, window_bounds = array<i64: 1, 32, 1>}, {pipeline_mode = #tpu.pipeline_mode<synchronous>, transform_indices = @transform_2, window_bounds = array<i64: 32, 32>}, {pipeline_mode = #tpu.pipeline_mode<synchronous>, transform_indices = @transform_3, window_bounds = array<i64: 2, 64, 96>}, {pipeline_mode = #tpu.pipeline_mode<synchronous>, transform_indices = @transform_4, window_bounds = array<i64: 2, 64, 1>}, {pipeline_mode = #tpu.pipeline_mode<synchronous>, transform_indices = @transform_5, window_bounds = array<i64: 12, 32>}, {pipeline_mode = #tpu.pipeline_mode<synchronous>, transform_indices = @transform_6, window_bounds = array<i64: 12, 1>}, {transform_indices = @transform_7, window_bounds = array<i64: 1, 12, 8>}]} {
    %c0 = arith.constant 0 : index
    %c0_0 = arith.constant 0 : index
    %0 = vector.load %arg3[%c0, %c0_0] : memref<32x32xbf16, #tpu.memory_space<vmem>>, vector<32x32xbf16>
    %c0_1 = arith.constant 0 : index
    %c0_2 = arith.constant 0 : index
    %c0_3 = arith.constant 0 : index
    %1 = vector.load %arg1[%c0_1, %c0_2, %c0_3] : memref<1x32x8xf32, #tpu.memory_space<vmem>>, vector<1x32x8xf32>
    %2 = vector.shape_cast %1 : vector<1x32x8xf32> to vector<32x8xf32>
    %3 = arith.truncf %2 : vector<32x8xf32> to vector<32x8xbf16>
    %cst = arith.constant dense<0.000000e+00> : vector<32x8xf32>
    %4 = tpu.matmul %0, %3, %cst {dimension_numbers = #tpu.dot_dimension_numbers<[1], [0], [0], [1], [0, 0, 1, 1], [], []>} : vector<32x32xbf16>, vector<32x8xbf16>, vector<32x8xf32> -> vector<32x8xf32>
    %c0_4 = arith.constant 0 : index
    %c0_5 = arith.constant 0 : index
    %c0_6 = arith.constant 0 : index
    %5 = vector.load %arg2[%c0_4, %c0_5, %c0_6] : memref<1x32x1xf32, #tpu.memory_space<vmem>>, vector<1x32x1xf32>
    %6 = vector.shape_cast %5 : vector<1x32x1xf32> to vector<32x1xf32>
    %7 = vector.broadcast %6 : vector<32x1xf32> to vector<32x8xf32>
    %8 = arith.addf %4, %7 : vector<32x8xf32>
    %cst_7 = arith.constant 0.000000e+00 : f32
    %9 = vector.broadcast %cst_7 : f32 to vector<32x14xf32>
    %c0_8 = arith.constant 0 : index
    %c0_9 = arith.constant 0 : index
    %10 = vector.load %arg9[%c0_8, %c0_9] : memref<32x14xf32, #tpu.memory_space<vmem>>, vector<32x14xf32>
    tpu.vector_store %arg9[%c0_8, %c0_9], %9 {strides = array<i32>} : memref<32x14xf32, #tpu.memory_space<vmem>>, vector<32x14xf32>,
    %c0_10 = arith.constant 0 : index
    %c3 = arith.constant 3 : index
    %11 = vector.load %arg9[%c0_10, %c3] : memref<32x14xf32, #tpu.memory_space<vmem>>, vector<32x8xf32>
    tpu.vector_store %arg9[%c0_10, %c3], %8 {strides = array<i32>} : memref<32x14xf32, #tpu.memory_space<vmem>>, vector<32x8xf32>,
    %c0_11 = arith.constant 0 : index
    %c2 = arith.constant 2 : index
    %12 = vector.load %arg9[%c0_11, %c2] : memref<32x14xf32, #tpu.memory_space<vmem>>, vector<32x8xf32>
    %c0_12 = arith.constant 0 : index
    %c3_13 = arith.constant 3 : index
    %13 = vector.load %arg9[%c0_12, %c3_13] : memref<32x14xf32, #tpu.memory_space<vmem>>, vector<32x8xf32>
    %c0_14 = arith.constant 0 : index
    %c4 = arith.constant 4 : index
    %14 = vector.load %arg9[%c0_14, %c4] : memref<32x14xf32, #tpu.memory_space<vmem>>, vector<32x8xf32>
    %15 = tpu.concatenate %12, %13, %14 in 0 : vector<32x8xf32>, vector<32x8xf32>, vector<32x8xf32> -> vector<96x8xf32>
    %16 = arith.truncf %15 : vector<96x8xf32> to vector<96x8xbf16>
    %c0_15 = arith.constant 0 : index
    %c0_16 = arith.constant 0 : index
    %c0_17 = arith.constant 0 : index
    %17 = vector.load %arg4[%c0_15, %c0_16, %c0_17] : memref<2x64x96xbf16, #tpu.memory_space<vmem>>, vector<1x64x96xbf16>
    %18 = vector.shape_cast %17 : vector<1x64x96xbf16> to vector<64x96xbf16>
    %cst_18 = arith.constant dense<0.000000e+00> : vector<64x8xf32>
    %19 = tpu.matmul %18, %16, %cst_18 {dimension_numbers = #tpu.dot_dimension_numbers<[1], [0], [0], [1], [0, 0, 1, 1], [], []>} : vector<64x96xbf16>, vector<96x8xbf16>, vector<64x8xf32> -> vector<64x8xf32>
    %c0_19 = arith.constant 0 : index
    %c0_20 = arith.constant 0 : index
    %c0_21 = arith.constant 0 : index
    %20 = vector.load %arg5[%c0_19, %c0_20, %c0_21] : memref<2x64x1xf32, #tpu.memory_space<vmem>>, vector<1x64x1xf32>
    %21 = vector.shape_cast %20 : vector<1x64x1xf32> to vector<64x1xf32>
    %22 = vector.broadcast %21 : vector<64x1xf32> to vector<64x8xf32>
    %23 = arith.addf %19, %22 : vector<64x8xf32>
    %24 = vector.extract_strided_slice %23 {offsets = [0, 0], sizes = [32, 8], strides = [1, 1]} : vector<64x8xf32> to vector<32x8xf32>
    %25 = vector.extract_strided_slice %23 {offsets = [32, 0], sizes = [32, 8], strides = [1, 1]} : vector<64x8xf32> to vector<32x8xf32>
    %26 = arith.negf %25 : vector<32x8xf32>
    %27 = math.exp %26 : vector<32x8xf32>
    %cst_22 = arith.constant 1.000000e+00 : f32
    %28 = vector.broadcast %cst_22 : f32 to vector<32x8xf32>
    %29 = arith.addf %28, %27 : vector<32x8xf32>
    %30 = arith.divf %28, %29 : vector<32x8xf32>
    %31 = arith.mulf %24, %30 : vector<32x8xf32>
    %32 = arith.addf %31, %8 : vector<32x8xf32>
    %cst_23 = arith.constant 0.707106769 : f32
    %33 = vector.broadcast %cst_23 : f32 to vector<32x8xf32>
    %34 = arith.mulf %32, %33 : vector<32x8xf32>
    %c0_24 = arith.constant 0 : index
    %c3_25 = arith.constant 3 : index
    %35 = vector.load %arg9[%c0_24, %c3_25] : memref<32x14xf32, #tpu.memory_space<vmem>>, vector<32x8xf32>
    tpu.vector_store %arg9[%c0_24, %c3_25], %34 {strides = array<i32>} : memref<32x14xf32, #tpu.memory_space<vmem>>, vector<32x8xf32>,
    %c0_26 = arith.constant 0 : index
    %c0_27 = arith.constant 0 : index
    %36 = vector.load %arg9[%c0_26, %c0_27] : memref<32x14xf32, #tpu.memory_space<vmem>>, vector<32x8xf32>
    %c0_28 = arith.constant 0 : index
    %c3_29 = arith.constant 3 : index
    %37 = vector.load %arg9[%c0_28, %c3_29] : memref<32x14xf32, #tpu.memory_space<vmem>>, vector<32x8xf32>
    %c0_30 = arith.constant 0 : index
    %c6 = arith.constant 6 : index
    %38 = vector.load %arg9[%c0_30, %c6] : memref<32x14xf32, #tpu.memory_space<vmem>>, vector<32x8xf32>
    %39 = tpu.concatenate %36, %37, %38 in 0 : vector<32x8xf32>, vector<32x8xf32>, vector<32x8xf32> -> vector<96x8xf32>
    %40 = arith.truncf %39 : vector<96x8xf32> to vector<96x8xbf16>
    %c1 = arith.constant 1 : index
    %c0_31 = arith.constant 0 : index
    %c0_32 = arith.constant 0 : index
    %41 = vector.load %arg4[%c1, %c0_31, %c0_32] : memref<2x64x96xbf16, #tpu.memory_space<vmem>>, vector<1x64x96xbf16>
    %42 = vector.shape_cast %41 : vector<1x64x96xbf16> to vector<64x96xbf16>
    %cst_33 = arith.constant dense<0.000000e+00> : vector<64x8xf32>
    %43 = tpu.matmul %42, %40, %cst_33 {dimension_numbers = #tpu.dot_dimension_numbers<[1], [0], [0], [1], [0, 0, 1, 1], [], []>} : vector<64x96xbf16>, vector<96x8xbf16>, vector<64x8xf32> -> vector<64x8xf32>
    %c1_34 = arith.constant 1 : index
    %c0_35 = arith.constant 0 : index
    %c0_36 = arith.constant 0 : index
    %44 = vector.load %arg5[%c1_34, %c0_35, %c0_36] : memref<2x64x1xf32, #tpu.memory_space<vmem>>, vector<1x64x1xf32>
    %45 = vector.shape_cast %44 : vector<1x64x1xf32> to vector<64x1xf32>
    %46 = vector.broadcast %45 : vector<64x1xf32> to vector<64x8xf32>
    %47 = arith.addf %43, %46 : vector<64x8xf32>
    %48 = vector.extract_strided_slice %47 {offsets = [0, 0], sizes = [32, 8], strides = [1, 1]} : vector<64x8xf32> to vector<32x8xf32>
    %49 = vector.extract_strided_slice %47 {offsets = [32, 0], sizes = [32, 8], strides = [1, 1]} : vector<64x8xf32> to vector<32x8xf32>
    %50 = arith.negf %49 : vector<32x8xf32>
    %51 = math.exp %50 : vector<32x8xf32>
    %cst_37 = arith.constant 1.000000e+00 : f32
    %52 = vector.broadcast %cst_37 : f32 to vector<32x8xf32>
    %53 = arith.addf %52, %51 : vector<32x8xf32>
    %54 = arith.divf %52, %53 : vector<32x8xf32>
    %55 = arith.mulf %48, %54 : vector<32x8xf32>
    %56 = arith.addf %55, %34 : vector<32x8xf32>
    %cst_38 = arith.constant 0.707106769 : f32
    %57 = vector.broadcast %cst_38 : f32 to vector<32x8xf32>
    %58 = arith.mulf %56, %57 : vector<32x8xf32>
    %c0_39 = arith.constant 0 : index
    %c0_40 = arith.constant 0 : index
    %59 = vector.load %arg6[%c0_39, %c0_40] : memref<12x32xbf16, #tpu.memory_space<vmem>>, vector<12x32xbf16>
    %60 = arith.truncf %58 : vector<32x8xf32> to vector<32x8xbf16>
    %cst_41 = arith.constant dense<0.000000e+00> : vector<12x8xf32>
    %61 = tpu.matmul %59, %60, %cst_41 {dimension_numbers = #tpu.dot_dimension_numbers<[1], [0], [0], [1], [0, 0, 1, 1], [], []>} : vector<12x32xbf16>, vector<32x8xbf16>, vector<12x8xf32> -> vector<12x8xf32>
    %c0_42 = arith.constant 0 : index
    %c0_43 = arith.constant 0 : index
    %62 = vector.load %arg7[%c0_42, %c0_43] : memref<12x1xf32, #tpu.memory_space<vmem>>, vector<12x1xf32>
    %63 = vector.broadcast %62 : vector<12x1xf32> to vector<12x8xf32>
    %64 = arith.addf %61, %63 : vector<12x8xf32>
    %c0_44 = arith.constant 0 : index
    %c0_45 = arith.constant 0 : index
    %c0_46 = arith.constant 0 : index
    %65 = vector.load %arg8[%c0_44, %c0_45, %c0_46] : memref<1x12x8xf32, #tpu.memory_space<vmem>>, vector<1x12x8xf32>
    %66 = vector.shape_cast %65 : vector<1x12x8xf32> to vector<12x8xf32>
    %67 = vector.shape_cast %64 : vector<12x8xf32> to vector<1x12x8xf32>
    tpu.vector_store %arg8[%c0_44, %c0_45, %c0_46], %67 {strides = array<i32>} : memref<1x12x8xf32, #tpu.memory_space<vmem>>, vector<1x12x8xf32>,
    return
  }
  func.func @transform_0(%arg0: i32) -> (i32, i32, i32) {
    %c0_i32 = arith.constant 0 : i32
    %c0_i32_0 = arith.constant 0 : i32
    %c0_i32_1 = arith.constant 0 : i32
    return %arg0, %c0_i32, %c0_i32_0 : i32, i32, i32
  }
  func.func @transform_1(%arg0: i32) -> (i32, i32, i32) {
    %c0_i32 = arith.constant 0 : i32
    %c0_i32_0 = arith.constant 0 : i32
    %c0_i32_1 = arith.constant 0 : i32
    return %arg0, %c0_i32, %c0_i32_0 : i32, i32, i32
  }
  func.func @transform_2(%arg0: i32) -> (i32, i32) {
    %c0_i32 = arith.constant 0 : i32
    %c0_i32_0 = arith.constant 0 : i32
    %c0_i32_1 = arith.constant 0 : i32
    return %c0_i32, %c0_i32_0 : i32, i32
  }
  func.func @transform_3(%arg0: i32) -> (i32, i32, i32) {
    %c0_i32 = arith.constant 0 : i32
    %c0_i32_0 = arith.constant 0 : i32
    %c0_i32_1 = arith.constant 0 : i32
    %c0_i32_2 = arith.constant 0 : i32
    return %c0_i32, %c0_i32_0, %c0_i32_1 : i32, i32, i32
  }
  func.func @transform_4(%arg0: i32) -> (i32, i32, i32) {
    %c0_i32 = arith.constant 0 : i32
    %c0_i32_0 = arith.constant 0 : i32
    %c0_i32_1 = arith.constant 0 : i32
    %c0_i32_2 = arith.constant 0 : i32
    return %c0_i32, %c0_i32_0, %c0_i32_1 : i32, i32, i32
  }
  func.func @transform_5(%arg0: i32) -> (i32, i32) {
    %c0_i32 = arith.constant 0 : i32
    %c0_i32_0 = arith.constant 0 : i32
    %c0_i32_1 = arith.constant 0 : i32
    return %c0_i32, %c0_i32_0 : i32, i32
  }
  func.func @transform_6(%arg0: i32) -> (i32, i32) {
    %c0_i32 = arith.constant 0 : i32
    %c0_i32_0 = arith.constant 0 : i32
    %c0_i32_1 = arith.constant 0 : i32
    return %c0_i32, %c0_i32_0 : i32, i32
  }
  func.func @transform_7(%arg0: i32) -> (i32, i32, i32) {
    %c0_i32 = arith.constant 0 : i32
    %c0_i32_0 = arith.constant 0 : i32
    %c0_i32_1 = arith.constant 0 : i32
    return %arg0, %c0_i32, %c0_i32_0 : i32, i32, i32
  }
}

</mosaic_0001>

<llo_original>
// kernel: convs2s_a2m_forward.6
$region0: #{convs2s_a2m_forward.6}
  #allocation0 [shape = 'u32[]', space=smem, size = 0x4, offset = 0x4, fixed_abs, tag = 'smem constant byte address 0x4 - core index']
  #allocation1 [shape = 'u32[144,128]{1,0:T(1,128)}', space=vmem, size = 0x12000, scoped, tag = 'internal scratch']
  %s0 = inlined_call_operand.vmem [shape: bf16[2,16,16], index: 0, kind: input, shape index: {}]
  %s1 = inlined_call_operand.vmem [shape: bf16[2,16,16], index: 1, kind: input, shape index: {}]
  %s2 = inlined_call_operand.vmem [shape: bf16[2,16,8], index: 2, kind: input, shape index: {}]
  %s3 = inlined_call_operand.vmem [shape: f32[2,16,8], index: 3, kind: output, shape index: {0}]
  %s4 = inlined_call_operand.vmem [shape: f32[2,16,8], index: 4, kind: output, shape index: {1}]
  %5 = xla_tuple %s3, %s4
  %s6 = sld [smem:[#allocation0]]
  $region53: #{convs2s_a2m_forward.6} parent=0
    _
  %s8 = ssub.s32 1, %s6
  %s9 = scalar_select 0, %s8, %s6
  loop: start=0, step=1, limit=4
  $region2: #{convs2s_a2m_forward.6} parent=0 // loop_pre_header
    _
  $region3: #{convs2s_a2m_forward.6} parent=0 // loop_header
    %s11 = sphi 0, %s15
    %p12 = scmp.ge.s32.totalorder %s11, 4
    %s21 = sphi 0, %s23
    %s24 = sphi 0, %s21
    %s25 = sphi 0, %s24
    %s41 = sphi 0, %s25
    %s47 = sphi 0, %s49
    %s50 = sphi 0, %s47
    %s51 = sphi 0, %s50
    %s67 = sphi 0, %s51
    %s73 = sphi 0, %s75
    %s76 = sphi 0, %s73
    %s77 = sphi 0, %s76
    %s93 = sphi 0, %s77
    %s99 = sphi 0, %s101
    %s102 = sphi 0, %s99
    %s103 = sphi 0, %s102
    %s119 = sphi 0, %s103
    %s125 = sphi 0, %s127
    %s128 = sphi 0, %s125
    %s129 = sphi 0, %s128
    %s145 = sphi 0, %s129
  $region4: #{convs2s_a2m_forward.6} parent=0 // loop_header_branch
    %14 = sbr.rel (%p12) target = $region8
  $region5: #{convs2s_a2m_forward.6} parent=0 // loop_body
    %s16 = ssub.s32 %s11, 1
    %s17 = ssub.s32 %s11, 2
    %s18 = sadd.s32 %s11, 1
    %s19 = ssub.s32 %s11, %s18
    %p20 = scmp.eq.s32.totalorder %s19, 0
    %s22 = sadd.s32 %s21, 1
    %s23 = scalar_select %p20, %s21, %s22
    %p26 = pneg %p20
    %p27 = scmp.eq.s32.totalorder %s11, 1
    %p28 = por %p26, %p27
    %p29 = scmp.ne.s32.totalorder %s21, %s24
    %p30 = scmp.eq.s32.totalorder %s11, 0
    %p31 = por %p29, %p30
    %p32 = scmp.ne.s32.totalorder %s21, %s24
    %p33 = scmp.eq.s32.totalorder %s16, 1
    %p34 = por %p32, %p33
    %p35 = scmp.ne.s32.totalorder %s24, %s25
    %p36 = scmp.eq.s32.totalorder %s16, 0
    %p37 = por %p35, %p36
    %p38 = scmp.ne.s32.totalorder %s24, %s25
    %p39 = scmp.eq.s32.totalorder %s17, 1
    %p40 = por %p38, %p39
    %p42 = scmp.ne.s32.totalorder %s25, %s41
    %p43 = scmp.eq.s32.totalorder %s17, 0
    %p44 = por %p42, %p43
    %s45 = ssub.s32 %s11, %s18
    %p46 = scmp.eq.s32.totalorder %s45, 0
    %s48 = sadd.s32 %s47, 1
    %s49 = scalar_select %p46, %s47, %s48
    %p52 = pneg %p46
    %p53 = scmp.eq.s32.totalorder %s11, 1
    %p54 = por %p52, %p53
    %p55 = scmp.ne.s32.totalorder %s47, %s50
    %p56 = scmp.eq.s32.totalorder %s11, 0
    %p57 = por %p55, %p56
    %p58 = scmp.ne.s32.totalorder %s47, %s50
    %p59 = scmp.eq.s32.totalorder %s16, 1
    %p60 = por %p58, %p59
    %p61 = scmp.ne.s32.totalorder %s50, %s51
    %p62 = scmp.eq.s32.totalorder %s16, 0
    %p63 = por %p61, %p62
    %p64 = scmp.ne.s32.totalorder %s50, %s51
    %p65 = scmp.eq.s32.totalorder %s17, 1
    %p66 = por %p64, %p65
    %p68 = scmp.ne.s32.totalorder %s51, %s67
    %p69 = scmp.eq.s32.totalorder %s17, 0
    %p70 = por %p68, %p69
    %s71 = ssub.s32 %s11, %s18
    %p72 = scmp.eq.s32.totalorder %s71, 0
    %s74 = sadd.s32 %s73, 1
    %s75 = scalar_select %p72, %s73, %s74
    %p78 = pneg %p72
    %p79 = scmp.eq.s32.totalorder %s11, 1
    %p80 = por %p78, %p79
    %p81 = scmp.ne.s32.totalorder %s73, %s76
    %p82 = scmp.eq.s32.totalorder %s11, 0
    %p83 = por %p81, %p82
    %p84 = scmp.ne.s32.totalorder %s73, %s76
    %p85 = scmp.eq.s32.totalorder %s16, 1
    %p86 = por %p84, %p85
    %p87 = scmp.ne.s32.totalorder %s76, %s77
    %p88 = scmp.eq.s32.totalorder %s16, 0
    %p89 = por %p87, %p88
    %p90 = scmp.ne.s32.totalorder %s76, %s77
    %p91 = scmp.eq.s32.totalorder %s17, 1
    %p92 = por %p90, %p91
    %p94 = scmp.ne.s32.totalorder %s77, %s93
    %p95 = scmp.eq.s32.totalorder %s17, 0
    %p96 = por %p94, %p95
    %s97 = ssub.s32 %s11, %s18
    %p98 = scmp.eq.s32.totalorder %s97, 0
    %s100 = sadd.s32 %s99, 1
    %s101 = scalar_select %p98, %s99, %s100
    %p104 = pneg %p98
    %p105 = scmp.eq.s32.totalorder %s11, 1
    %p106 = por %p104, %p105
    %p107 = scmp.ne.s32.totalorder %s99, %s102
    %p108 = scmp.eq.s32.totalorder %s11, 0
    %p109 = por %p107, %p108
    %p110 = scmp.ne.s32.totalorder %s99, %s102
    %p111 = scmp.eq.s32.totalorder %s16, 1
    %p112 = por %p110, %p111
    %p113 = scmp.ne.s32.totalorder %s102, %s103
    %p114 = scmp.eq.s32.totalorder %s16, 0
    %p115 = por %p113, %p114
    %p116 = scmp.ne.s32.totalorder %s102, %s103
    %p117 = scmp.eq.s32.totalorder %s17, 1
    %p118 = por %p116, %p117
    %p120 = scmp.ne.s32.totalorder %s103, %s119
    %p121 = scmp.eq.s32.totalorder %s17, 0
    %p122 = por %p120, %p121
    %s123 = ssub.s32 %s11, %s18
    %p124 = scmp.eq.s32.totalorder %s123, 0
    %s126 = sadd.s32 %s125, 1
    %s127 = scalar_select %p124, %s125, %s126
    %p130 = pneg %p124
    %p131 = scmp.eq.s32.totalorder %s11, 1
    %p132 = por %p130, %p131
    %p133 = scmp.ne.s32.totalorder %s125, %s128
    %p134 = scmp.eq.s32.totalorder %s11, 0
    %p135 = por %p133, %p134
    %p136 = scmp.ne.s32.totalorder %s125, %s128
    %p137 = scmp.eq.s32.totalorder %s16, 1
    %p138 = por %p136, %p137
    %p139 = scmp.ne.s32.totalorder %s128, %s129
    %p140 = scmp.eq.s32.totalorder %s16, 0
    %p141 = por %p139, %p140
    %p142 = scmp.ne.s32.totalorder %s128, %s129
    %p143 = scmp.eq.s32.totalorder %s17, 1
    %p144 = por %p142, %p143
    %p146 = scmp.ne.s32.totalorder %s129, %s145
    %p147 = scmp.eq.s32.totalorder %s17, 0
    %p148 = por %p146, %p147
    %p149 = scmp.le.s32.totalorder 1, %s11
    %p150 = scmp.lt.s32.totalorder %s11, 3
    %p151 = pnand %p149, %p150
    %p152 = pneg %p151
    // Predicated region
    $region9: #{convs2s_a2m_forward.6} parent=5 // pred_check
      _
    $region10: #{convs2s_a2m_forward.6} parent=5 // pred_check_branch
      %154 = sbr.rel (%p151) target = $region12
    $region11: #{convs2s_a2m_forward.6} parent=5 // pred_region
      %s155 = ssub.s32 %s11, 1
    $region12: #{convs2s_a2m_forward.6} parent=5 // pred_fallthru
      _
    %p156 = scmp.lt.s32.totalorder %s11, 2
    // Predicated region
    $region13: #{convs2s_a2m_forward.6} parent=5 // pred_check
      %p157 = pneg %p156
    $region14: #{convs2s_a2m_forward.6} parent=5 // pred_check_branch
      %159 = sbr.rel (%p157) target = $region16
    $region15: #{convs2s_a2m_forward.6} parent=5 // pred_region
      // Predicated region
      $region17: #{convs2s_a2m_forward.6} parent=15 // pred_check
        %p160 = pneg %p31
      $region18: #{convs2s_a2m_forward.6} parent=15 // pred_check_branch
        %162 = sbr.rel (%p160) target = $region20
      $region19: #{convs2s_a2m_forward.6} parent=15 // pred_region
        %p163 = scmp.lt.s32.totalorder %s11, 1
        %s164 = scalar_select %p163, %s11, 1
        %s165 = smul.addr %s164, 2
        %s166 = smul.addr %s165, 4
        %s167 = scalar_lea.vmem %s0, %s166
      $region20: #{convs2s_a2m_forward.6} parent=15 // pred_fallthru
        _
      // Predicated region
      $region21: #{convs2s_a2m_forward.6} parent=15 // pred_check
        %p168 = pneg %p57
      $region22: #{convs2s_a2m_forward.6} parent=15 // pred_check_branch
        %170 = sbr.rel (%p168) target = $region24
      $region23: #{convs2s_a2m_forward.6} parent=15 // pred_region
        %p171 = scmp.lt.s32.totalorder %s11, 1
        %s172 = scalar_select %p171, %s11, 1
        %s173 = smul.addr %s172, 2
        %s174 = smul.addr %s173, 4
        %s175 = scalar_lea.vmem %s1, %s174
      $region24: #{convs2s_a2m_forward.6} parent=15 // pred_fallthru
        _
      // Predicated region
      $region25: #{convs2s_a2m_forward.6} parent=15 // pred_check
        %p176 = pneg %p83
      $region26: #{convs2s_a2m_forward.6} parent=15 // pred_check_branch
        %178 = sbr.rel (%p176) target = $region28
      $region27: #{convs2s_a2m_forward.6} parent=15 // pred_region
        %p179 = scmp.lt.s32.totalorder %s11, 1
        %s180 = scalar_select %p179, %s11, 1
        %s181 = smul.addr %s180, 2
        %s182 = smul.addr %s181, 4
        %s183 = scalar_lea.vmem %s2, %s182
      $region28: #{convs2s_a2m_forward.6} parent=15 // pred_fallthru
        _
    $region16: #{convs2s_a2m_forward.6} parent=5 // pred_fallthru
      _
    %p184 = scmp.le.s32.totalorder 1, %s11
    %p185 = scmp.lt.s32.totalorder %s11, 3
    %p186 = pnand %p184, %p185
    %p187 = pneg %p186
    // Predicated region
    $region29: #{convs2s_a2m_forward.6} parent=5 // pred_check
      _
    $region30: #{convs2s_a2m_forward.6} parent=5 // pred_check_branch
      %189 = sbr.rel (%p186) target = $region32
    $region31: #{convs2s_a2m_forward.6} parent=5 // pred_region
      %s190 = ssub.s32 %s11, 1
      %p191 = scmp.lt.s32.totalorder %s16, 1
      %s192 = scalar_select %p191, %s16, 1
      %s193 = smul.addr %s192, 2
      %s194 = smul.addr %s193, 4
      %s195 = scalar_lea.vmem %s0, %s194
      %p196 = pneg %p37
      %p197 = pneg %p34
      %p198 = scmp.lt.s32.totalorder %s16, 1
      %s199 = scalar_select %p198, %s16, 1
      %s200 = smul.addr %s199, 2
      %s201 = smul.addr %s200, 4
      %s202 = scalar_lea.vmem %s1, %s201
      %p203 = pneg %p63
      %p204 = pneg %p60
      %p205 = scmp.lt.s32.totalorder %s16, 1
      %s206 = scalar_select %p205, %s16, 1
      %s207 = smul.addr %s206, 2
      %s208 = smul.addr %s207, 4
      %s209 = scalar_lea.vmem %s2, %s208
      %p210 = pneg %p89
      %p211 = pneg %p86
      %p212 = pneg %p115
      %p213 = pneg %p112
      %p214 = scmp.lt.s32.totalorder %s16, 1
      %s215 = scalar_select %p214, %s16, 1
      %s216 = smul.addr %s215, 2
      %s217 = smul.addr %s216, 8
      %s218 = scalar_lea.vmem %s3, %s217
      %p219 = pneg %p141
      %p220 = pneg %p138
      %p221 = scmp.lt.s32.totalorder %s16, 1
      %s222 = scalar_select %p221, %s16, 1
      %s223 = smul.addr %s222, 2
      %s224 = smul.addr %s223, 8
      %s225 = scalar_lea.vmem %s4, %s224
      %p226 = scmp.lt.s32.totalorder %s16, 1
      %s227 = scalar_select %p226, %s16, 1
      %s228 = smul.addr %s227, 2
      %s229 = smul.addr %s228, 4
      %s230 = scalar_lea.vmem %s0, %s229
      %p231 = scmp.lt.s32.totalorder %s16, 1
      %s232 = scalar_select %p231, %s16, 1
      %s233 = smul.addr %s232, 2
      %s234 = smul.addr %s233, 4
      %s235 = scalar_lea.vmem %s1, %s234
      %p236 = scmp.lt.s32.totalorder %s16, 1
      %s237 = scalar_select %p236, %s16, 1
      %s238 = smul.addr %s237, 2
      %s239 = smul.addr %s238, 4
      %s240 = scalar_lea.vmem %s2, %s239
      %p241 = scmp.lt.s32.totalorder %s16, 1
      %s242 = scalar_select %p241, %s16, 1
      %s243 = smul.addr %s242, 2
      %s244 = smul.addr %s243, 8
      %s245 = scalar_lea.vmem %s3, %s244
      %p246 = scmp.lt.s32.totalorder %s16, 1
      %s247 = scalar_select %p246, %s16, 1
      %s248 = smul.addr %s247, 2
      %s249 = smul.addr %s248, 8
      %s250 = scalar_lea.vmem %s4, %s249
      %v252 = vld [vmem:[%s230] sm:$0xf]
      %v253 = vld [vmem:[%s230 + $0x4] sm:$0xf]
      %v254 = vld [vmem:[%s240] sm:$0xf]
      %v255 = vld [vmem:[%s240 + $0x4] sm:$0xf]
      %v258 = vunpack.c.l.b16 %v252
      %v259 = vunpack.c.l.b16 %v253
      %v260 = vpack.c.b16 %v259, %v258
      %262 = vxpose.xlu0.c.b16.start [1/8] %v260, 128
      %263 = vxpose.xlu0.c.b16.cont [2/8] 0, 128
      %264 = vxpose.xlu0.c.b16.cont [3/8] 0, 128
      %265 = vxpose.xlu0.c.b16.cont [4/8] 0, 128
      %266 = vxpose.xlu0.c.b16.cont [5/8] 0, 128
      %267 = vxpose.xlu0.c.b16.cont [6/8] 0, 128
      %268 = vxpose.xlu0.c.b16.cont [7/8] 0, 128
      %269 = vxpose.xlu0.c.b16.end [8/8] 0, 128
      %v270 = vpop.trf.xlu0
      %v271 = vpop.trf.xlu0
      %v272 = vpop.trf.xlu0
      %v273 = vpop.trf.xlu0
      %v274 = vpop.trf.xlu0
      %v275 = vpop.trf.xlu0
      %v276 = vpop.trf.xlu0
      %v277 = vpop.trf.xlu0
      %v280 = vunpack.c.l.b16 %v254
      %v281 = vunpack.c.l.b16 %v255
      %v282 = vpack.c.b16 %v281, %v280
      %vm284 = vcmask 130048
      %v286 = vsel %vm284, %v270, 0
      %288 = vmatprep.subr.bf16.mxu0 0
      %289 = vmatpush1.bf16.msra.mxu0 0
      %290 = vmatprep.subr.bf16.mxu0 0
      %291 = vmatpush1.bf16.msra.mxu0 0
      %292 = vmatprep.subr.bf16.mxu0 0
      %293 = vmatpush1.bf16.msra.mxu0 0
      %294 = vmatprep.subr.bf16.mxu0 0
      %295 = vmatpush1.bf16.msra.mxu0 0
      %296 = vmatprep.subr.bf16.mxu0 0
      %297 = vmatpush1.bf16.msra.mxu0 0
      %298 = vmatprep.subr.bf16.mxu0 0
      %299 = vmatpush1.bf16.msra.mxu0 0
      %300 = vmatprep.subr.bf16.mxu0 0
      %301 = vmatpush1.bf16.msra.mxu0 0
      %302 = vmatprep.subr.bf16.mxu0 0
      %303 = vmatpush1.bf16.msra.mxu0 %v282
      %304 = vmatprep.subr.bf16.mxu0 0
      %305 = vmatpush2.bf16.msra.mxu0 0
      %306 = vmatprep.subr.bf16.mxu0 0
      %307 = vmatpush2.bf16.msra.mxu0 0
      %308 = vmatprep.subr.bf16.mxu0 0
      %309 = vmatpush2.bf16.msra.mxu0 0
      %310 = vmatprep.subr.bf16.mxu0 0
      %311 = vmatpush2.bf16.msra.mxu0 0
      %312 = vmatprep.subr.bf16.mxu0 0
      %313 = vmatpush2.bf16.msra.mxu0 0
      %314 = vmatprep.subr.bf16.mxu0 0
      %315 = vmatpush2.bf16.msra.mxu0 0
      %316 = vmatprep.subr.bf16.mxu0 0
      %317 = vmatpush2.bf16.msra.mxu0 0
      %318 = vmatprep.subr.bf16.mxu0 0
      %319 = vmatpush2.bf16.msra.mxu0 0
      %320 = vmatprep.mubr.bf16.mxu0 0
      %321 = vmatmul.mubr.bf16.gmra.mxu0 %v286
      %v322 = vpop.f32.mrf.mxu0
      %v323 = vadd.f32 0.0, %v322
      %v324 = vpop.f32.mrf.mxu0
      %v325 = vpop.f32.mrf.mxu0
      %v326 = vadd.f32 0.0, %v325
      %v327 = vpop.f32.mrf.mxu0
      %328 = vdwg.mxu0
      %v329 = vmul.f32 %v323, 0.25
      %v330 = vmul.f32 %v326, 0.25
      %vm331 = vcmask 64512
      %v332 = vsel %vm331, %v329, -inf
      %v333 = vsel %vm331, %v330, -inf
      %v334 = vmax.f32 %v332, %v333
      %v335 = vrot.slane %v334, 4
      %v336 = vmax.f32 %v334, %v335
      %v337 = vrot.slane %v336, 2
      %v338 = vmax.f32 %v336, %v337
      %v339 = vrot.slane %v338, 1
      %v340 = vmax.f32 %v338, %v339
      %v341 = vsub.f32 %v329, %v340
      %v342 = vsub.f32 %v330, %v340
      %v343 = vmul.f32 %v341, 1.442695
      %v344 = vpow.pop %v343
      %v345 = vmul.f32 %v342, 1.442695
      %v346 = vpow.pop %v345
      %v347 = vsel %vm331, %v344, 0.0
      %v348 = vsel %vm331, %v346, 0.0
      %v349 = vadd.f32 %v347, %v348
      %v350 = vrot.slane %v349, 4
      %v351 = vadd.f32 %v349, %v350
      %v352 = vrot.slane %v351, 2
      %v353 = vadd.f32 %v351, %v352
      %v354 = vrot.slane %v353, 1
      %v355 = vadd.f32 %v353, %v354
      %v356 = vrcp.pop %v355
      %v357 = vmul.f32 %v344, %v356
      %v358 = vmul.f32 %v346, %v356
      %359 = vst.msk [vmem:[%s245] sm:$0xff] %vm331, %v357
      %360 = vst.msk [vmem:[%s245 + $0x8] sm:$0xff] %vm331, %v358
      %v361 = vld [vmem:[%s235] sm:$0xf]
      %v362 = vld [vmem:[%s235 + $0x4] sm:$0xf]
      %v363 = vpack.c.bf16 %v358, %v357
      %v366 = vunpack.c.l.b16 %v361
      %v367 = vunpack.c.l.b16 %v362
      %v368 = vpack.c.b16 %v367, %v366
      %v370 = vsel %vm284, %v368, 0
      %372 = vmatprep.subr.bf16.mxu0 0
      %373 = vmatpush1.bf16.msra.mxu0 0
      %374 = vmatprep.subr.bf16.mxu0 0
      %375 = vmatpush1.bf16.msra.mxu0 0
      %376 = vmatprep.subr.bf16.mxu0 0
      %377 = vmatpush1.bf16.msra.mxu0 0
      %378 = vmatprep.subr.bf16.mxu0 0
      %379 = vmatpush1.bf16.msra.mxu0 0
      %380 = vmatprep.subr.bf16.mxu0 0
      %381 = vmatpush1.bf16.msra.mxu0 0
      %382 = vmatprep.subr.bf16.mxu0 0
      %383 = vmatpush1.bf16.msra.mxu0 0
      %384 = vmatprep.subr.bf16.mxu0 0
      %385 = vmatpush1.bf16.msra.mxu0 0
      %386 = vmatprep.subr.bf16.mxu0 0
      %387 = vmatpush1.bf16.msra.mxu0 %v363
      %388 = vmatprep.subr.bf16.mxu0 0
      %389 = vmatpush2.bf16.msra.mxu0 0
      %390 = vmatprep.subr.bf16.mxu0 0
      %391 = vmatpush2.bf16.msra.mxu0 0
      %392 = vmatprep.subr.bf16.mxu0 0
      %393 = vmatpush2.bf16.msra.mxu0 0
      %394 = vmatprep.subr.bf16.mxu0 0
      %395 = vmatpush2.bf16.msra.mxu0 0
      %396 = vmatprep.subr.bf16.mxu0 0
      %397 = vmatpush2.bf16.msra.mxu0 0
      %398 = vmatprep.subr.bf16.mxu0 0
      %399 = vmatpush2.bf16.msra.mxu0 0
      %400 = vmatprep.subr.bf16.mxu0 0
      %401 = vmatpush2.bf16.msra.mxu0 0
      %402 = vmatprep.subr.bf16.mxu0 0
      %403 = vmatpush2.bf16.msra.mxu0 0
      %404 = vmatprep.mubr.bf16.mxu0 0
      %405 = vmatmul.mubr.bf16.gmra.mxu0 %v370
      %v406 = vpop.f32.mrf.mxu0
      %v407 = vadd.f32 0.0, %v406
      %v408 = vpop.f32.mrf.mxu0
      %v409 = vpop.f32.mrf.mxu0
      %v410 = vadd.f32 0.0, %v409
      %v411 = vpop.f32.mrf.mxu0
      %412 = vdwg.mxu0
      %413 = vst.msk [vmem:[%s250] sm:$0xff] %vm331, %v407
      %414 = vst.msk [vmem:[%s250 + $0x8] sm:$0xff] %vm331, %v410
      %p415 = scmp.lt.s32.totalorder %s16, 1
      %s416 = scalar_select %p415, %s16, 1
      %s417 = smul.addr %s416, 2
      %s418 = smul.addr %s417, 8
      %s419 = scalar_lea.vmem %s3, %s418
      %p420 = scmp.lt.s32.totalorder %s16, 1
      %s421 = scalar_select %p420, %s16, 1
      %s422 = smul.addr %s421, 2
      %s423 = smul.addr %s422, 8
      %s424 = scalar_lea.vmem %s4, %s423
      // Predicated region
      $region33: #{convs2s_a2m_forward.6} parent=31 // pred_check
        %p425 = pneg %p112
      $region34: #{convs2s_a2m_forward.6} parent=31 // pred_check_branch
        %427 = sbr.rel (%p425) target = $region36
      $region35: #{convs2s_a2m_forward.6} parent=31 // pred_region
        _
      $region36: #{convs2s_a2m_forward.6} parent=31 // pred_fallthru
        _
      // Predicated region
      $region37: #{convs2s_a2m_forward.6} parent=31 // pred_check
        %p428 = pneg %p138
      $region38: #{convs2s_a2m_forward.6} parent=31 // pred_check_branch
        %430 = sbr.rel (%p428) target = $region40
      $region39: #{convs2s_a2m_forward.6} parent=31 // pred_region
        _
      $region40: #{convs2s_a2m_forward.6} parent=31 // pred_fallthru
        _
    $region32: #{convs2s_a2m_forward.6} parent=5 // pred_fallthru
      _
    %p431 = scmp.le.s32.totalorder 2, %s11
    // Predicated region
    $region41: #{convs2s_a2m_forward.6} parent=5 // pred_check
      %p432 = pneg %p431
    $region42: #{convs2s_a2m_forward.6} parent=5 // pred_check_branch
      %434 = sbr.rel (%p432) target = $region44
    $region43: #{convs2s_a2m_forward.6} parent=5 // pred_region
      %s435 = ssub.s32 %s11, 2
      // Predicated region
      $region45: #{convs2s_a2m_forward.6} parent=43 // pred_check
        %p436 = pneg %p118
      $region46: #{convs2s_a2m_forward.6} parent=43 // pred_check_branch
        %438 = sbr.rel (%p436) target = $region48
      $region47: #{convs2s_a2m_forward.6} parent=43 // pred_region
        %p439 = scmp.lt.s32.totalorder %s17, 1
        %s440 = scalar_select %p439, %s17, 1
        %s441 = smul.addr %s440, 2
        %s442 = smul.addr %s441, 8
        %s443 = scalar_lea.vmem %s3, %s442
      $region48: #{convs2s_a2m_forward.6} parent=43 // pred_fallthru
        _
      // Predicated region
      $region49: #{convs2s_a2m_forward.6} parent=43 // pred_check
        %p444 = pneg %p144
      $region50: #{convs2s_a2m_forward.6} parent=43 // pred_check_branch
        %446 = sbr.rel (%p444) target = $region52
      $region51: #{convs2s_a2m_forward.6} parent=43 // pred_region
        %p447 = scmp.lt.s32.totalorder %s17, 1
        %s448 = scalar_select %p447, %s17, 1
        %s449 = smul.addr %s448, 2
        %s450 = smul.addr %s449, 8
        %s451 = scalar_lea.vmem %s4, %s450
      $region52: #{convs2s_a2m_forward.6} parent=43 // pred_fallthru
        _
    $region44: #{convs2s_a2m_forward.6} parent=5 // pred_fallthru
      _
  $region6: #{convs2s_a2m_forward.6} parent=0 // loop_footer
    %s15 = sadd.s32 1, %s11
  $region7: #{convs2s_a2m_forward.6} parent=0 // loop_footer_branch
    %10 = sbr.rel target = $region3
  $region8: #{convs2s_a2m_forward.6} parent=0 // loop_exit
    _

// kernel: convs2s_a2m_forward.5
$region0: #{convs2s_a2m_forward.5}
  #allocation0 [shape = 'u32[]', space=smem, size = 0x4, offset = 0x4, fixed_abs, tag = 'smem constant byte address 0x4 - core index']
  #allocation1 [shape = 'u32[144,128]{1,0:T(1,128)}', space=vmem, size = 0x12000, scoped, tag = 'internal scratch']
  #allocation2 [shape = 'f32[32,14]{1,0:T(8,128)}', space=vmem, size = 0x4000, scoped, tag = 'scratch operand']
  %s0 = inlined_call_operand.vmem [shape: f32[2,12,8], index: 0, kind: input, shape index: {}]
  %s1 = inlined_call_operand.vmem [shape: f32[2,32,1], index: 1, kind: input, shape index: {}]
  %s2 = inlined_call_operand.vmem [shape: bf16[32,12], index: 2, kind: input, shape index: {}]
  %s3 = inlined_call_operand.vmem [shape: bf16[2,64,96], index: 3, kind: input, shape index: {}]
  %s4 = inlined_call_operand.vmem [shape: f32[2,64,1], index: 4, kind: input, shape index: {}]
  %s5 = inlined_call_operand.vmem [shape: bf16[16,32], index: 5, kind: input, shape index: {}]
  %s6 = inlined_call_operand.vmem [shape: f32[16,1], index: 6, kind: input, shape index: {}]
  %s7 = inlined_call_operand.vmem [shape: f32[2,16,8], index: 7, kind: output, shape index: {}]
  %s8 = sld [smem:[#allocation0]]
  $region61: #{convs2s_a2m_forward.5} parent=0
    _
  %s10 = ssub.s32 1, %s8
  %s11 = scalar_select 0, %s10, %s8
  loop: start=0, step=1, limit=4
  $region2: #{convs2s_a2m_forward.5} parent=0 // loop_pre_header
    _
  $region3: #{convs2s_a2m_forward.5} parent=0 // loop_header
    %s13 = sphi 0, %s17
    %p14 = scmp.ge.s32.totalorder %s13, 4
    %s23 = sphi 0, %s25
    %s26 = sphi 0, %s23
    %s27 = sphi 0, %s26
    %s43 = sphi 0, %s27
    %s49 = sphi 0, %s51
    %s52 = sphi 0, %s49
    %s53 = sphi 0, %s52
    %s69 = sphi 0, %s53
    %s73 = sphi 0, %s73
    %s75 = sphi 0, %s73
    %s76 = sphi 0, %s75
    %s90 = sphi 0, %s76
    %s94 = sphi 0, %s94
    %s96 = sphi 0, %s94
    %s97 = sphi 0, %s96
    %s111 = sphi 0, %s97
    %s115 = sphi 0, %s115
    %s117 = sphi 0, %s115
    %s118 = sphi 0, %s117
    %s132 = sphi 0, %s118
    %s136 = sphi 0, %s136
    %s138 = sphi 0, %s136
    %s139 = sphi 0, %s138
    %s153 = sphi 0, %s139
    %s157 = sphi 0, %s157
    %s159 = sphi 0, %s157
    %s160 = sphi 0, %s159
    %s174 = sphi 0, %s160
    %s180 = sphi 0, %s182
    %s183 = sphi 0, %s180
    %s184 = sphi 0, %s183
    %s200 = sphi 0, %s184
  $region4: #{convs2s_a2m_forward.5} parent=0 // loop_header_branch
    %16 = sbr.rel (%p14) target = $region8
  $region5: #{convs2s_a2m_forward.5} parent=0 // loop_body
    %s18 = ssub.s32 %s13, 1
    %s19 = ssub.s32 %s13, 2
    %s20 = sadd.s32 %s13, 1
    %s21 = ssub.s32 %s13, %s20
    %p22 = scmp.eq.s32.totalorder %s21, 0
    %s24 = sadd.s32 %s23, 1
    %s25 = scalar_select %p22, %s23, %s24
    %p28 = pneg %p22
    %p29 = scmp.eq.s32.totalorder %s13, 1
    %p30 = por %p28, %p29
    %p31 = scmp.ne.s32.totalorder %s23, %s26
    %p32 = scmp.eq.s32.totalorder %s13, 0
    %p33 = por %p31, %p32
    %p34 = scmp.ne.s32.totalorder %s23, %s26
    %p35 = scmp.eq.s32.totalorder %s18, 1
    %p36 = por %p34, %p35
    %p37 = scmp.ne.s32.totalorder %s26, %s27
    %p38 = scmp.eq.s32.totalorder %s18, 0
    %p39 = por %p37, %p38
    %p40 = scmp.ne.s32.totalorder %s26, %s27
    %p41 = scmp.eq.s32.totalorder %s19, 1
    %p42 = por %p40, %p41
    %p44 = scmp.ne.s32.totalorder %s27, %s43
    %p45 = scmp.eq.s32.totalorder %s19, 0
    %p46 = por %p44, %p45
    %s47 = ssub.s32 %s13, %s20
    %p48 = scmp.eq.s32.totalorder %s47, 0
    %s50 = sadd.s32 %s49, 1
    %s51 = scalar_select %p48, %s49, %s50
    %p54 = pneg %p48
    %p55 = scmp.eq.s32.totalorder %s13, 1
    %p56 = por %p54, %p55
    %p57 = scmp.ne.s32.totalorder %s49, %s52
    %p58 = scmp.eq.s32.totalorder %s13, 0
    %p59 = por %p57, %p58
    %p60 = scmp.ne.s32.totalorder %s49, %s52
    %p61 = scmp.eq.s32.totalorder %s18, 1
    %p62 = por %p60, %p61
    %p63 = scmp.ne.s32.totalorder %s52, %s53
    %p64 = scmp.eq.s32.totalorder %s18, 0
    %p65 = por %p63, %p64
    %p66 = scmp.ne.s32.totalorder %s52, %s53
    %p67 = scmp.eq.s32.totalorder %s19, 1
    %p68 = por %p66, %p67
    %p70 = scmp.ne.s32.totalorder %s53, %s69
    %p71 = scmp.eq.s32.totalorder %s19, 0
    %p72 = por %p70, %p71
    %s74 = sadd.s32 %s73, 1
    %p77 = scmp.eq.s32.totalorder %s13, 1
    %p78 = scmp.ne.s32.totalorder %s73, %s75
    %p79 = scmp.eq.s32.totalorder %s13, 0
    %p80 = por %p78, %p79
    %p81 = scmp.ne.s32.totalorder %s73, %s75
    %p82 = scmp.eq.s32.totalorder %s18, 1
    %p83 = por %p81, %p82
    %p84 = scmp.ne.s32.totalorder %s75, %s76
    %p85 = scmp.eq.s32.totalorder %s18, 0
    %p86 = por %p84, %p85
    %p87 = scmp.ne.s32.totalorder %s75, %s76
    %p88 = scmp.eq.s32.totalorder %s19, 1
    %p89 = por %p87, %p88
    %p91 = scmp.ne.s32.totalorder %s76, %s90
    %p92 = scmp.eq.s32.totalorder %s19, 0
    %p93 = por %p91, %p92
    %s95 = sadd.s32 %s94, 1
    %p98 = scmp.eq.s32.totalorder %s13, 1
    %p99 = scmp.ne.s32.totalorder %s94, %s96
    %p100 = scmp.eq.s32.totalorder %s13, 0
    %p101 = por %p99, %p100
    %p102 = scmp.ne.s32.totalorder %s94, %s96
    %p103 = scmp.eq.s32.totalorder %s18, 1
    %p104 = por %p102, %p103
    %p105 = scmp.ne.s32.totalorder %s96, %s97
    %p106 = scmp.eq.s32.totalorder %s18, 0
    %p107 = por %p105, %p106
    %p108 = scmp.ne.s32.totalorder %s96, %s97
    %p109 = scmp.eq.s32.totalorder %s19, 1
    %p110 = por %p108, %p109
    %p112 = scmp.ne.s32.totalorder %s97, %s111
    %p113 = scmp.eq.s32.totalorder %s19, 0
    %p114 = por %p112, %p113
    %s116 = sadd.s32 %s115, 1
    %p119 = scmp.eq.s32.totalorder %s13, 1
    %p120 = scmp.ne.s32.totalorder %s115, %s117
    %p121 = scmp.eq.s32.totalorder %s13, 0
    %p122 = por %p120, %p121
    %p123 = scmp.ne.s32.totalorder %s115, %s117
    %p124 = scmp.eq.s32.totalorder %s18, 1
    %p125 = por %p123, %p124
    %p126 = scmp.ne.s32.totalorder %s117, %s118
    %p127 = scmp.eq.s32.totalorder %s18, 0
    %p128 = por %p126, %p127
    %p129 = scmp.ne.s32.totalorder %s117, %s118
    %p130 = scmp.eq.s32.totalorder %s19, 1
    %p131 = por %p129, %p130
    %p133 = scmp.ne.s32.totalorder %s118, %s132
    %p134 = scmp.eq.s32.totalorder %s19, 0
    %p135 = por %p133, %p134
    %s137 = sadd.s32 %s136, 1
    %p140 = scmp.eq.s32.totalorder %s13, 1
    %p141 = scmp.ne.s32.totalorder %s136, %s138
    %p142 = scmp.eq.s32.totalorder %s13, 0
    %p143 = por %p141, %p142
    %p144 = scmp.ne.s32.totalorder %s136, %s138
    %p145 = scmp.eq.s32.totalorder %s18, 1
    %p146 = por %p144, %p145
    %p147 = scmp.ne.s32.totalorder %s138, %s139
    %p148 = scmp.eq.s32.totalorder %s18, 0
    %p149 = por %p147, %p148
    %p150 = scmp.ne.s32.totalorder %s138, %s139
    %p151 = scmp.eq.s32.totalorder %s19, 1
    %p152 = por %p150, %p151
    %p154 = scmp.ne.s32.totalorder %s139, %s153
    %p155 = scmp.eq.s32.totalorder %s19, 0
    %p156 = por %p154, %p155
    %s158 = sadd.s32 %s157, 1
    %p161 = scmp.eq.s32.totalorder %s13, 1
    %p162 = scmp.ne.s32.totalorder %s157, %s159
    %p163 = scmp.eq.s32.totalorder %s13, 0
    %p164 = por %p162, %p163
    %p165 = scmp.ne.s32.totalorder %s157, %s159
    %p166 = scmp.eq.s32.totalorder %s18, 1
    %p167 = por %p165, %p166
    %p168 = scmp.ne.s32.totalorder %s159, %s160
    %p169 = scmp.eq.s32.totalorder %s18, 0
    %p170 = por %p168, %p169
    %p171 = scmp.ne.s32.totalorder %s159, %s160
    %p172 = scmp.eq.s32.totalorder %s19, 1
    %p173 = por %p171, %p172
    %p175 = scmp.ne.s32.totalorder %s160, %s174
    %p176 = scmp.eq.s32.totalorder %s19, 0
    %p177 = por %p175, %p176
    %s178 = ssub.s32 %s13, %s20
    %p179 = scmp.eq.s32.totalorder %s178, 0
    %s181 = sadd.s32 %s180, 1
    %s182 = scalar_select %p179, %s180, %s181
    %p185 = pneg %p179
    %p186 = scmp.eq.s32.totalorder %s13, 1
    %p187 = por %p185, %p186
    %p188 = scmp.ne.s32.totalorder %s180, %s183
    %p189 = scmp.eq.s32.totalorder %s13, 0
    %p190 = por %p188, %p189
    %p191 = scmp.ne.s32.totalorder %s180, %s183
    %p192 = scmp.eq.s32.totalorder %s18, 1
    %p193 = por %p191, %p192
    %p194 = scmp.ne.s32.totalorder %s183, %s184
    %p195 = scmp.eq.s32.totalorder %s18, 0
    %p196 = por %p194, %p195
    %p197 = scmp.ne.s32.totalorder %s183, %s184
    %p198 = scmp.eq.s32.totalorder %s19, 1
    %p199 = por %p197, %p198
    %p201 = scmp.ne.s32.totalorder %s184, %s200
    %p202 = scmp.eq.s32.totalorder %s19, 0
    %p203 = por %p201, %p202
    %p204 = scmp.le.s32.totalorder 1, %s13
    %p205 = scmp.lt.s32.totalorder %s13, 3
    %p206 = pnand %p204, %p205
    %p207 = pneg %p206
    // Predicated region
    $region9: #{convs2s_a2m_forward.5} parent=5 // pred_check
      _
    $region10: #{convs2s_a2m_forward.5} parent=5 // pred_check_branch
      %209 = sbr.rel (%p206) target = $region12
    $region11: #{convs2s_a2m_forward.5} parent=5 // pred_region
      %s210 = ssub.s32 %s13, 1
      // Predicated region
      $region13: #{convs2s_a2m_forward.5} parent=11 // pred_check
        %p211 = pneg %p86
      $region14: #{convs2s_a2m_forward.5} parent=11 // pred_check_branch
        %213 = sbr.rel (%p211) target = $region16
      $region15: #{convs2s_a2m_forward.5} parent=11 // pred_region
        _
      $region16: #{convs2s_a2m_forward.5} parent=11 // pred_fallthru
        _
      // Predicated region
      $region17: #{convs2s_a2m_forward.5} parent=11 // pred_check
        %p214 = pneg %p107
      $region18: #{convs2s_a2m_forward.5} parent=11 // pred_check_branch
        %216 = sbr.rel (%p214) target = $region20
      $region19: #{convs2s_a2m_forward.5} parent=11 // pred_region
        _
      $region20: #{convs2s_a2m_forward.5} parent=11 // pred_fallthru
        _
      // Predicated region
      $region21: #{convs2s_a2m_forward.5} parent=11 // pred_check
        %p217 = pneg %p128
      $region22: #{convs2s_a2m_forward.5} parent=11 // pred_check_branch
        %219 = sbr.rel (%p217) target = $region24
      $region23: #{convs2s_a2m_forward.5} parent=11 // pred_region
        _
      $region24: #{convs2s_a2m_forward.5} parent=11 // pred_fallthru
        _
      // Predicated region
      $region25: #{convs2s_a2m_forward.5} parent=11 // pred_check
        %p220 = pneg %p149
      $region26: #{convs2s_a2m_forward.5} parent=11 // pred_check_branch
        %222 = sbr.rel (%p220) target = $region28
      $region27: #{convs2s_a2m_forward.5} parent=11 // pred_region
        _
      $region28: #{convs2s_a2m_forward.5} parent=11 // pred_fallthru
        _
      // Predicated region
      $region29: #{convs2s_a2m_forward.5} parent=11 // pred_check
        %p223 = pneg %p170
      $region30: #{convs2s_a2m_forward.5} parent=11 // pred_check_branch
        %225 = sbr.rel (%p223) target = $region32
      $region31: #{convs2s_a2m_forward.5} parent=11 // pred_region
        _
      $region32: #{convs2s_a2m_forward.5} parent=11 // pred_fallthru
        _
    $region12: #{convs2s_a2m_forward.5} parent=5 // pred_fallthru
      _
    %p226 = scmp.lt.s32.totalorder %s13, 2
    // Predicated region
    $region33: #{convs2s_a2m_forward.5} parent=5 // pred_check
      %p227 = pneg %p226
    $region34: #{convs2s_a2m_forward.5} parent=5 // pred_check_branch
      %229 = sbr.rel (%p227) target = $region36
    $region35: #{convs2s_a2m_forward.5} parent=5 // pred_region
      // Predicated region
      $region37: #{convs2s_a2m_forward.5} parent=35 // pred_check
        %p230 = pneg %p33
      $region38: #{convs2s_a2m_forward.5} parent=35 // pred_check_branch
        %232 = sbr.rel (%p230) target = $region40
      $region39: #{convs2s_a2m_forward.5} parent=35 // pred_region
        %p233 = scmp.lt.s32.totalorder %s13, 1
        %s234 = scalar_select %p233, %s13, 1
        %s235 = smul.addr %s234, 2
        %s236 = smul.addr %s235, 8
        %s237 = scalar_lea.vmem %s0, %s236
      $region40: #{convs2s_a2m_forward.5} parent=35 // pred_fallthru
        _
      // Predicated region
      $region41: #{convs2s_a2m_forward.5} parent=35 // pred_check
        %p238 = pneg %p59
      $region42: #{convs2s_a2m_forward.5} parent=35 // pred_check_branch
        %240 = sbr.rel (%p238) target = $region44
      $region43: #{convs2s_a2m_forward.5} parent=35 // pred_region
        %p241 = scmp.lt.s32.totalorder %s13, 1
        %s242 = scalar_select %p241, %s13, 1
        %s243 = smul.addr %s242, 4
        %s244 = smul.addr %s243, 8
        %s245 = scalar_lea.vmem %s1, %s244
      $region44: #{convs2s_a2m_forward.5} parent=35 // pred_fallthru
        _
    $region36: #{convs2s_a2m_forward.5} parent=5 // pred_fallthru
      _
    %p246 = scmp.le.s32.totalorder 1, %s13
    %p247 = scmp.lt.s32.totalorder %s13, 3
    %p248 = pnand %p246, %p247
    %p249 = pneg %p248
    // Predicated region
    $region45: #{convs2s_a2m_forward.5} parent=5 // pred_check
      _
    $region46: #{convs2s_a2m_forward.5} parent=5 // pred_check_branch
      %251 = sbr.rel (%p248) target = $region48
    $region47: #{convs2s_a2m_forward.5} parent=5 // pred_region
      %s252 = ssub.s32 %s13, 1
      %p253 = scmp.lt.s32.totalorder %s18, 1
      %s254 = scalar_select %p253, %s18, 1
      %s255 = smul.addr %s254, 2
      %s256 = smul.addr %s255, 8
      %s257 = scalar_lea.vmem %s0, %s256
      %p258 = pneg %p39
      %p259 = pneg %p36
      %p260 = scmp.lt.s32.totalorder %s18, 1
      %s261 = scalar_select %p260, %s18, 1
      %s262 = smul.addr %s261, 4
      %s263 = smul.addr %s262, 8
      %s264 = scalar_lea.vmem %s1, %s263
      %p265 = pneg %p65
      %p266 = pneg %p62
      %p267 = pneg %p86
      %p268 = pneg %p83
      %p269 = pneg %p107
      %p270 = pneg %p104
      %p271 = pneg %p128
      %p272 = pneg %p125
      %p273 = pneg %p149
      %p274 = pneg %p146
      %p275 = pneg %p170
      %p276 = pneg %p167
      %p277 = pneg %p196
      %p278 = pneg %p193
      %p279 = scmp.lt.s32.totalorder %s18, 1
      %s280 = scalar_select %p279, %s18, 1
      %s281 = smul.addr %s280, 2
      %s282 = smul.addr %s281, 8
      %s283 = scalar_lea.vmem %s7, %s282
      %p284 = scmp.lt.s32.totalorder %s18, 1
      %s285 = scalar_select %p284, %s18, 1
      %s286 = smul.addr %s285, 2
      %s287 = smul.addr %s286, 8
      %s288 = scalar_lea.vmem %s0, %s287
      %p289 = scmp.lt.s32.totalorder %s18, 1
      %s290 = scalar_select %p289, %s18, 1
      %s291 = smul.addr %s290, 4
      %s292 = smul.addr %s291, 8
      %s293 = scalar_lea.vmem %s1, %s292
      %p294 = scmp.lt.s32.totalorder %s18, 1
      %s295 = scalar_select %p294, %s18, 1
      %s296 = smul.addr %s295, 2
      %s297 = smul.addr %s296, 8
      %s298 = scalar_lea.vmem %s7, %s297
      %v300 = vld [vmem:[%s2] sm:$0xf]
      %v301 = vld [vmem:[%s2 + $0x4] sm:$0xf]
      %v302 = vld [vmem:[%s2 + $0x8] sm:$0xf]
      %v303 = vld [vmem:[%s2 + $0xc] sm:$0xf]
      %v304 = vld [vmem:[%s288] sm:$0xff]
      %v305 = vld [vmem:[%s288 + $0x8] sm:$0xf]
      %v306 = vpack.c.bf16 %v305, %v304
      %v307 = vld [vmem:[%s293] sm:$0xff]
      %v308 = vld [vmem:[%s293 + $0x8] sm:$0xff]
      %v309 = vld [vmem:[%s293 + $0x10] sm:$0xff]
      %v310 = vld [vmem:[%s293 + $0x18] sm:$0xff]
      %312 = vset.pattern.permute.xlu0 0
      %313 = vperm.xlu0 %312, %v307
      %v314 = vpop.permute.xlu0 %313
      %317 = vset.pattern.permute.xlu0 0
      %318 = vperm.xlu0 %317, %v308
      %v319 = vpop.permute.xlu0 %318
      %322 = vset.pattern.permute.xlu0 0
      %323 = vperm.xlu0 %322, %v309
      %v324 = vpop.permute.xlu0 %323
      %327 = vset.pattern.permute.xlu0 0
      %328 = vperm.xlu0 %327, %v310
      %v329 = vpop.permute.xlu0 %328
      %v335 = vunpack.c.l.b16 %v300
      %v336 = vunpack.c.l.b16 %v301
      %v337 = vunpack.c.l.b16 %v302
      %v338 = vunpack.c.l.b16 %v303
      %v339 = vpack.c.b16 %v336, %v335
      %v340 = vpack.c.b16 %v338, %v337
      %vm341 = vcmask 97280
      %v343 = vsel %vm341, %v339, 0
      %v346 = vsel %vm341, %v340, 0
      %vm348 = vcmask 1045504
      %v350 = vsel %vm348, %v306, 0
      %352 = vmatprep.subr.bf16.mxu0 0
      %353 = vmatpush1.bf16.msra.mxu0 0
      %354 = vmatprep.subr.bf16.mxu0 0
      %355 = vmatpush1.bf16.msra.mxu0 0
      %356 = vmatprep.subr.bf16.mxu0 0
      %357 = vmatpush1.bf16.msra.mxu0 0
      %358 = vmatprep.subr.bf16.mxu0 0
      %359 = vmatpush1.bf16.msra.mxu0 0
      %360 = vmatprep.subr.bf16.mxu0 0
      %361 = vmatpush1.bf16.msra.mxu0 0
      %362 = vmatprep.subr.bf16.mxu0 0
      %363 = vmatpush1.bf16.msra.mxu0 0
      %364 = vmatprep.subr.bf16.mxu0 0
      %365 = vmatpush1.bf16.msra.mxu0 0
      %366 = vmatprep.subr.bf16.mxu0 0
      %367 = vmatpush1.bf16.msra.mxu0 %v350
      %368 = vmatprep.subr.bf16.mxu0 0
      %369 = vmatpush2.bf16.msra.mxu0 0
      %370 = vmatprep.subr.bf16.mxu0 0
      %371 = vmatpush2.bf16.msra.mxu0 0
      %372 = vmatprep.subr.bf16.mxu0 0
      %373 = vmatpush2.bf16.msra.mxu0 0
      %374 = vmatprep.subr.bf16.mxu0 0
      %375 = vmatpush2.bf16.msra.mxu0 0
      %376 = vmatprep.subr.bf16.mxu0 0
      %377 = vmatpush2.bf16.msra.mxu0 0
      %378 = vmatprep.subr.bf16.mxu0 0
      %379 = vmatpush2.bf16.msra.mxu0 0
      %380 = vmatprep.subr.bf16.mxu0 0
      %381 = vmatpush2.bf16.msra.mxu0 0
      %382 = vmatprep.subr.bf16.mxu0 0
      %383 = vmatpush2.bf16.msra.mxu0 0
      %384 = vmatprep.mubr.bf16.mxu0 0
      %385 = vmatmul.mubr.bf16.gmra.mxu0 %v343
      %v386 = vpop.f32.mrf.mxu0
      %v387 = vadd.f32 %v314, %v386
      %v388 = vpop.f32.mrf.mxu0
      %v389 = vpop.f32.mrf.mxu0
      %v390 = vadd.f32 %v319, %v389
      %v391 = vpop.f32.mrf.mxu0
      %392 = vmatprep.mubr.bf16.mxu0 0
      %393 = vmatmul.mubr.bf16.gmra.mxu0 %v346
      %v394 = vpop.f32.mrf.mxu0
      %v395 = vadd.f32 %v324, %v394
      %v396 = vpop.f32.mrf.mxu0
      %v397 = vpop.f32.mrf.mxu0
      %v398 = vadd.f32 %v329, %v397
      %v399 = vpop.f32.mrf.mxu0
      %400 = vdwg.mxu0
      %vm401 = vcmask 113664
      %402 = vst.msk [vmem:[#allocation2] sm:$0xff] %vm401, 0.0
      %403 = vst.msk [vmem:[#allocation2 + $0x8] sm:$0xff] %vm401, 0.0
      %404 = vst.msk [vmem:[#allocation2 + $0x10] sm:$0xff] %vm401, 0.0
      %405 = vst.msk [vmem:[#allocation2 + $0x18] sm:$0xff] %vm401, 0.0
      %410 = vrot.lane.b32.xlu0 %v387, 3
      %v411 = vpop.permute.xlu0 %410
      %412 = vrot.lane.b32.xlu0 %v390, 3
      %v413 = vpop.permute.xlu0 %412
      %414 = vrot.lane.b32.xlu0 %v395, 3
      %v415 = vpop.permute.xlu0 %414
      %416 = vrot.lane.b32.xlu0 %v398, 3
      %v417 = vpop.permute.xlu0 %416
      %vm422 = vcmask 89112
      %423 = vst.msk [vmem:[#allocation2] sm:$0xff] %vm422, %v411
      %424 = vst.msk [vmem:[#allocation2 + $0x8] sm:$0xff] %vm422, %v413
      %425 = vst.msk [vmem:[#allocation2 + $0x10] sm:$0xff] %vm422, %v415
      %426 = vst.msk [vmem:[#allocation2 + $0x18] sm:$0xff] %vm422, %v417
      %v427 = vld [vmem:[#allocation2] sm:$0xff]
      %v428 = vld [vmem:[#allocation2 + $0x8] sm:$0xff]
      %v429 = vld [vmem:[#allocation2 + $0x10] sm:$0xff]
      %v430 = vld [vmem:[#allocation2 + $0x18] sm:$0xff]
      %435 = vrot.lane.b32.xlu0 %v427, 127
      %v436 = vpop.permute.xlu0 %435
      %437 = vrot.lane.b32.xlu0 %v428, 127
      %v438 = vpop.permute.xlu0 %437
      %439 = vrot.lane.b32.xlu0 %v429, 127
      %v440 = vpop.permute.xlu0 %439
      %441 = vrot.lane.b32.xlu0 %v430, 127
      %v442 = vpop.permute.xlu0 %441
      %447 = vrot.lane.b32.xlu0 %v427, 126
      %v448 = vpop.permute.xlu0 %447
      %449 = vrot.lane.b32.xlu0 %v428, 126
      %v450 = vpop.permute.xlu0 %449
      %451 = vrot.lane.b32.xlu0 %v429, 126
      %v452 = vpop.permute.xlu0 %451
      %453 = vrot.lane.b32.xlu0 %v430, 126
      %v454 = vpop.permute.xlu0 %453
      %v459 = vpack.c.bf16 %v428, %v427
      %v460 = vpack.c.bf16 %v430, %v429
      %v461 = vpack.c.bf16 %v438, %v436
      %v462 = vpack.c.bf16 %v442, %v440
      %v463 = vpack.c.bf16 %v450, %v448
      %v464 = vpack.c.bf16 %v454, %v452
      %v465 = vld [vmem:[%s3] sm:$0xf]
      %v466 = vld [vmem:[%s3 + $0x4] sm:$0xf]
      %v467 = vld [vmem:[%s3 + $0x8] sm:$0xf]
      %v468 = vld [vmem:[%s3 + $0xc] sm:$0xf]
      %v469 = vld [vmem:[%s3 + $0x10] sm:$0xf]
      %v470 = vld [vmem:[%s3 + $0x14] sm:$0xf]
      %v471 = vld [vmem:[%s3 + $0x18] sm:$0xf]
      %v472 = vld [vmem:[%s3 + $0x1c] sm:$0xf]
      %v473 = vld [vmem:[%s4] sm:$0xff]
      %v474 = vld [vmem:[%s4 + $0x8] sm:$0xff]
      %v475 = vld [vmem:[%s4 + $0x10] sm:$0xff]
      %v476 = vld [vmem:[%s4 + $0x18] sm:$0xff]
      %v477 = vld [vmem:[%s4 + $0x20] sm:$0xff]
      %v478 = vld [vmem:[%s4 + $0x28] sm:$0xff]
      %v479 = vld [vmem:[%s4 + $0x30] sm:$0xff]
      %v480 = vld [vmem:[%s4 + $0x38] sm:$0xff]
      %482 = vset.pattern.permute.xlu0 0
      %483 = vperm.xlu0 %482, %v473
      %v484 = vpop.permute.xlu0 %483
      %487 = vset.pattern.permute.xlu0 0
      %488 = vperm.xlu0 %487, %v474
      %v489 = vpop.permute.xlu0 %488
      %492 = vset.pattern.permute.xlu0 0
      %493 = vperm.xlu0 %492, %v475
      %v494 = vpop.permute.xlu0 %493
      %497 = vset.pattern.permute.xlu0 0
      %498 = vperm.xlu0 %497, %v476
      %v499 = vpop.permute.xlu0 %498
      %502 = vset.pattern.permute.xlu0 0
      %503 = vperm.xlu0 %502, %v477
      %v504 = vpop.permute.xlu0 %503
      %507 = vset.pattern.permute.xlu0 0
      %508 = vperm.xlu0 %507, %v478
      %v509 = vpop.permute.xlu0 %508
      %512 = vset.pattern.permute.xlu0 0
      %513 = vperm.xlu0 %512, %v479
      %v514 = vpop.permute.xlu0 %513
      %517 = vset.pattern.permute.xlu0 0
      %518 = vperm.xlu0 %517, %v480
      %v519 = vpop.permute.xlu0 %518
      %v529 = vunpack.c.l.b16 %v465
      %v530 = vunpack.c.l.b16 %v466
      %v531 = vunpack.c.l.b16 %v467
      %v532 = vunpack.c.l.b16 %v468
      %v533 = vunpack.c.l.b16 %v469
      %v534 = vunpack.c.l.b16 %v470
      %v535 = vunpack.c.l.b16 %v471
      %v536 = vunpack.c.l.b16 %v472
      %v537 = vpack.c.b16 %v530, %v529
      %v538 = vpack.c.b16 %v532, %v531
      %v539 = vpack.c.b16 %v534, %v533
      %v540 = vpack.c.b16 %v536, %v535
      %547 = vrot.lane.b32.xlu0 %v459, 126
      %v548 = vpop.permute.xlu0 %547
      %549 = vrot.lane.b32.xlu0 %v460, 126
      %v550 = vpop.permute.xlu0 %549
      %551 = vrot.lane.b32.xlu0 %v461, 126
      %v552 = vpop.permute.xlu0 %551
      %553 = vrot.lane.b32.xlu0 %v462, 126
      %v554 = vpop.permute.xlu0 %553
      %555 = vrot.lane.b32.xlu0 %v463, 126
      %v556 = vpop.permute.xlu0 %555
      %557 = vrot.lane.b32.xlu0 %v464, 126
      %v558 = vpop.permute.xlu0 %557
      %vm565 = vcmask 785408
      %v567 = vsel %vm565, %v537, 0
      %v570 = vsel %vm565, %v538, 0
      %v573 = vsel %vm565, %v539, 0
      %v576 = vsel %vm565, %v540, 0
      %578 = vmatprep.subr.bf16.mxu0 0
      %579 = vmatpush1.bf16.msra.mxu0 0
      %580 = vmatprep.subr.bf16.mxu0 0
      %581 = vmatpush1.bf16.msra.mxu0 0
      %582 = vmatprep.subr.bf16.mxu0 0
      %583 = vmatpush1.bf16.msra.mxu0 %v558
      %584 = vmatprep.subr.bf16.mxu0 0
      %585 = vmatpush1.bf16.msra.mxu0 %v556
      %586 = vmatprep.subr.bf16.mxu0 0
      %587 = vmatpush1.bf16.msra.mxu0 %v554
      %588 = vmatprep.subr.bf16.mxu0 0
      %589 = vmatpush1.bf16.msra.mxu0 %v552
      %590 = vmatprep.subr.bf16.mxu0 0
      %591 = vmatpush1.bf16.msra.mxu0 %v550
      %592 = vmatprep.subr.bf16.mxu0 0
      %593 = vmatpush1.bf16.msra.mxu0 %v548
      %594 = vmatprep.subr.bf16.mxu0 0
      %595 = vmatpush2.bf16.msra.mxu0 0
      %596 = vmatprep.subr.bf16.mxu0 0
      %597 = vmatpush2.bf16.msra.mxu0 0
      %598 = vmatprep.subr.bf16.mxu0 0
      %599 = vmatpush2.bf16.msra.mxu0 0
      %600 = vmatprep.subr.bf16.mxu0 0
      %601 = vmatpush2.bf16.msra.mxu0 0
      %602 = vmatprep.subr.bf16.mxu0 0
      %603 = vmatpush2.bf16.msra.mxu0 0
      %604 = vmatprep.subr.bf16.mxu0 0
      %605 = vmatpush2.bf16.msra.mxu0 0
      %606 = vmatprep.subr.bf16.mxu0 0
      %607 = vmatpush2.bf16.msra.mxu0 0
      %608 = vmatprep.subr.bf16.mxu0 0
      %609 = vmatpush2.bf16.msra.mxu0 0
      %610 = vmatprep.mubr.bf16.mxu0 0
      %611 = vmatmul.mubr.bf16.gmra.mxu0 %v567
      %v612 = vpop.f32.mrf.mxu0
      %v613 = vadd.f32 %v484, %v612
      %v614 = vpop.f32.mrf.mxu0
      %v615 = vpop.f32.mrf.mxu0
      %v616 = vadd.f32 %v489, %v615
      %v617 = vpop.f32.mrf.mxu0
      %618 = vmatprep.mubr.bf16.mxu0 0
      %619 = vmatmul.mubr.bf16.gmra.mxu0 %v570
      %v620 = vpop.f32.mrf.mxu0
      %v621 = vadd.f32 %v494, %v620
      %v622 = vpop.f32.mrf.mxu0
      %v623 = vpop.f32.mrf.mxu0
      %v624 = vadd.f32 %v499, %v623
      %v625 = vpop.f32.mrf.mxu0
      %626 = vmatprep.mubr.bf16.mxu0 0
      %627 = vmatmul.mubr.bf16.gmra.mxu0 %v573
      %v628 = vpop.f32.mrf.mxu0
      %v629 = vadd.f32 %v504, %v628
      %v630 = vpop.f32.mrf.mxu0
      %v631 = vpop.f32.mrf.mxu0
      %v632 = vadd.f32 %v509, %v631
      %v633 = vpop.f32.mrf.mxu0
      %634 = vmatprep.mubr.bf16.mxu0 0
      %635 = vmatmul.mubr.bf16.gmra.mxu0 %v576
      %v636 = vpop.f32.mrf.mxu0
      %v637 = vadd.f32 %v514, %v636
      %v638 = vpop.f32.mrf.mxu0
      %v639 = vpop.f32.mrf.mxu0
      %v640 = vadd.f32 %v519, %v639
      %v641 = vpop.f32.mrf.mxu0
      %642 = vdwg.mxu0
      %v643 = vxor.u32 %v629, 2147483648
      %v644 = vxor.u32 %v632, 2147483648
      %v645 = vxor.u32 %v637, 2147483648
      %v646 = vxor.u32 %v640, 2147483648
      %v647 = vmul.f32 %v643, 1.442695
      %v648 = vpow.pop %v647
      %v649 = vmul.f32 %v644, 1.442695
      %v650 = vpow.pop %v649
      %v651 = vmul.f32 %v645, 1.442695
      %v652 = vpow.pop %v651
      %v653 = vmul.f32 %v646, 1.442695
      %v654 = vpow.pop %v653
      %v655 = vadd.f32 %v648, 1.0
      %v656 = vadd.f32 %v650, 1.0
      %v657 = vadd.f32 %v652, 1.0
      %v658 = vadd.f32 %v654, 1.0
      %v659 = vrcp.pop %v655
      %v660 = vmul.f32 1.0, %v659
      %v661 = vrcp.pop %v656
      %v662 = vmul.f32 1.0, %v661
      %v663 = vrcp.pop %v657
      %v664 = vmul.f32 1.0, %v663
      %v665 = vrcp.pop %v658
      %v666 = vmul.f32 1.0, %v665
      %v667 = vmul.f32 %v613, %v660
      %v668 = vmul.f32 %v616, %v662
      %v669 = vmul.f32 %v621, %v664
      %v670 = vmul.f32 %v624, %v666
      %v671 = vadd.f32 %v667, %v387
      %v672 = vadd.f32 %v668, %v390
      %v673 = vadd.f32 %v669, %v395
      %v674 = vadd.f32 %v670, %v398
      %v675 = vmul.f32 %v671, 0.70710677
      %v676 = vmul.f32 %v672, 0.70710677
      %v677 = vmul.f32 %v673, 0.70710677
      %v678 = vmul.f32 %v674, 0.70710677
      %683 = vrot.lane.b32.xlu0 %v675, 3
      %v684 = vpop.permute.xlu0 %683
      %685 = vrot.lane.b32.xlu0 %v676, 3
      %v686 = vpop.permute.xlu0 %685
      %687 = vrot.lane.b32.xlu0 %v677, 3
      %v688 = vpop.permute.xlu0 %687
      %689 = vrot.lane.b32.xlu0 %v678, 3
      %v690 = vpop.permute.xlu0 %689
      %695 = vst.msk [vmem:[#allocation2] sm:$0xff] %vm422, %v684
      %696 = vst.msk [vmem:[#allocation2 + $0x8] sm:$0xff] %vm422, %v686
      %697 = vst.msk [vmem:[#allocation2 + $0x10] sm:$0xff] %vm422, %v688
      %698 = vst.msk [vmem:[#allocation2 + $0x18] sm:$0xff] %vm422, %v690
      %v699 = vld [vmem:[#allocation2] sm:$0xff]
      %v700 = vld [vmem:[#allocation2 + $0x8] sm:$0xff]
      %v701 = vld [vmem:[#allocation2 + $0x10] sm:$0xff]
      %v702 = vld [vmem:[#allocation2 + $0x18] sm:$0xff]
      %707 = vrot.lane.b32.xlu0 %v699, 125
      %v708 = vpop.permute.xlu0 %707
      %709 = vrot.lane.b32.xlu0 %v700, 125
      %v710 = vpop.permute.xlu0 %709
      %711 = vrot.lane.b32.xlu0 %v701, 125
      %v712 = vpop.permute.xlu0 %711
      %713 = vrot.lane.b32.xlu0 %v702, 125
      %v714 = vpop.permute.xlu0 %713
      %719 = vrot.lane.b32.xlu0 %v699, 122
      %v720 = vpop.permute.xlu0 %719
      %721 = vrot.lane.b32.xlu0 %v700, 122
      %v722 = vpop.permute.xlu0 %721
      %723 = vrot.lane.b32.xlu0 %v701, 122
      %v724 = vpop.permute.xlu0 %723
      %725 = vrot.lane.b32.xlu0 %v702, 122
      %v726 = vpop.permute.xlu0 %725
      %v731 = vpack.c.bf16 %v700, %v699
      %v732 = vpack.c.bf16 %v702, %v701
      %v733 = vpack.c.bf16 %v710, %v708
      %v734 = vpack.c.bf16 %v714, %v712
      %v735 = vpack.c.bf16 %v722, %v720
      %v736 = vpack.c.bf16 %v726, %v724
      %s737 = scalar_lea.vmem %s3, 32
      %v738 = vld [vmem:[%s737] sm:$0xf]
      %v739 = vld [vmem:[%s737 + $0x4] sm:$0xf]
      %v740 = vld [vmem:[%s737 + $0x8] sm:$0xf]
      %v741 = vld [vmem:[%s737 + $0xc] sm:$0xf]
      %v742 = vld [vmem:[%s737 + $0x10] sm:$0xf]
      %v743 = vld [vmem:[%s737 + $0x14] sm:$0xf]
      %v744 = vld [vmem:[%s737 + $0x18] sm:$0xf]
      %v745 = vld [vmem:[%s737 + $0x1c] sm:$0xf]
      %s746 = scalar_lea.vmem %s4, 64
      %v747 = vld [vmem:[%s746] sm:$0xff]
      %v748 = vld [vmem:[%s746 + $0x8] sm:$0xff]
      %v749 = vld [vmem:[%s746 + $0x10] sm:$0xff]
      %v750 = vld [vmem:[%s746 + $0x18] sm:$0xff]
      %v751 = vld [vmem:[%s746 + $0x20] sm:$0xff]
      %v752 = vld [vmem:[%s746 + $0x28] sm:$0xff]
      %v753 = vld [vmem:[%s746 + $0x30] sm:$0xff]
      %v754 = vld [vmem:[%s746 + $0x38] sm:$0xff]
      %756 = vset.pattern.permute.xlu0 0
      %757 = vperm.xlu0 %756, %v747
      %v758 = vpop.permute.xlu0 %757
      %761 = vset.pattern.permute.xlu0 0
      %762 = vperm.xlu0 %761, %v748
      %v763 = vpop.permute.xlu0 %762
      %766 = vset.pattern.permute.xlu0 0
      %767 = vperm.xlu0 %766, %v749
      %v768 = vpop.permute.xlu0 %767
      %771 = vset.pattern.permute.xlu0 0
      %772 = vperm.xlu0 %771, %v750
      %v773 = vpop.permute.xlu0 %772
      %776 = vset.pattern.permute.xlu0 0
      %777 = vperm.xlu0 %776, %v751
      %v778 = vpop.permute.xlu0 %777
      %781 = vset.pattern.permute.xlu0 0
      %782 = vperm.xlu0 %781, %v752
      %v783 = vpop.permute.xlu0 %782
      %786 = vset.pattern.permute.xlu0 0
      %787 = vperm.xlu0 %786, %v753
      %v788 = vpop.permute.xlu0 %787
      %791 = vset.pattern.permute.xlu0 0
      %792 = vperm.xlu0 %791, %v754
      %v793 = vpop.permute.xlu0 %792
      %v803 = vunpack.c.l.b16 %v738
      %v804 = vunpack.c.l.b16 %v739
      %v805 = vunpack.c.l.b16 %v740
      %v806 = vunpack.c.l.b16 %v741
      %v807 = vunpack.c.l.b16 %v742
      %v808 = vunpack.c.l.b16 %v743
      %v809 = vunpack.c.l.b16 %v744
      %v810 = vunpack.c.l.b16 %v745
      %v811 = vpack.c.b16 %v804, %v803
      %v812 = vpack.c.b16 %v806, %v805
      %v813 = vpack.c.b16 %v808, %v807
      %v814 = vpack.c.b16 %v810, %v809
      %v816 = vsel %vm565, %v811, 0
      %v819 = vsel %vm565, %v812, 0
      %v822 = vsel %vm565, %v813, 0
      %v825 = vsel %vm565, %v814, 0
      %827 = vmatprep.subr.bf16.mxu0 0
      %828 = vmatpush1.bf16.msra.mxu0 0
      %829 = vmatprep.subr.bf16.mxu0 0
      %830 = vmatpush1.bf16.msra.mxu0 0
      %831 = vmatprep.subr.bf16.mxu0 0
      %832 = vmatpush1.bf16.msra.mxu0 %v736
      %833 = vmatprep.subr.bf16.mxu0 0
      %834 = vmatpush1.bf16.msra.mxu0 %v735
      %835 = vmatprep.subr.bf16.mxu0 0
      %836 = vmatpush1.bf16.msra.mxu0 %v734
      %837 = vmatprep.subr.bf16.mxu0 0
      %838 = vmatpush1.bf16.msra.mxu0 %v733
      %839 = vmatprep.subr.bf16.mxu0 0
      %840 = vmatpush1.bf16.msra.mxu0 %v732
      %841 = vmatprep.subr.bf16.mxu0 0
      %842 = vmatpush1.bf16.msra.mxu0 %v731
      %843 = vmatprep.subr.bf16.mxu0 0
      %844 = vmatpush2.bf16.msra.mxu0 0
      %845 = vmatprep.subr.bf16.mxu0 0
      %846 = vmatpush2.bf16.msra.mxu0 0
      %847 = vmatprep.subr.bf16.mxu0 0
      %848 = vmatpush2.bf16.msra.mxu0 0
      %849 = vmatprep.subr.bf16.mxu0 0
      %850 = vmatpush2.bf16.msra.mxu0 0
      %851 = vmatprep.subr.bf16.mxu0 0
      %852 = vmatpush2.bf16.msra.mxu0 0
      %853 = vmatprep.subr.bf16.mxu0 0
      %854 = vmatpush2.bf16.msra.mxu0 0
      %855 = vmatprep.subr.bf16.mxu0 0
      %856 = vmatpush2.bf16.msra.mxu0 0
      %857 = vmatprep.subr.bf16.mxu0 0
      %858 = vmatpush2.bf16.msra.mxu0 0
      %859 = vmatprep.mubr.bf16.mxu0 0
      %860 = vmatmul.mubr.bf16.gmra.mxu0 %v816
      %v861 = vpop.f32.mrf.mxu0
      %v862 = vadd.f32 %v758, %v861
      %v863 = vpop.f32.mrf.mxu0
      %v864 = vpop.f32.mrf.mxu0
      %v865 = vadd.f32 %v763, %v864
      %v866 = vpop.f32.mrf.mxu0
      %867 = vmatprep.mubr.bf16.mxu0 0
      %868 = vmatmul.mubr.bf16.gmra.mxu0 %v819
      %v869 = vpop.f32.mrf.mxu0
      %v870 = vadd.f32 %v768, %v869
      %v871 = vpop.f32.mrf.mxu0
      %v872 = vpop.f32.mrf.mxu0
      %v873 = vadd.f32 %v773, %v872
      %v874 = vpop.f32.mrf.mxu0
      %875 = vmatprep.mubr.bf16.mxu0 0
      %876 = vmatmul.mubr.bf16.gmra.mxu0 %v822
      %v877 = vpop.f32.mrf.mxu0
      %v878 = vadd.f32 %v778, %v877
      %v879 = vpop.f32.mrf.mxu0
      %v880 = vpop.f32.mrf.mxu0
      %v881 = vadd.f32 %v783, %v880
      %v882 = vpop.f32.mrf.mxu0
      %883 = vmatprep.mubr.bf16.mxu0 0
      %884 = vmatmul.mubr.bf16.gmra.mxu0 %v825
      %v885 = vpop.f32.mrf.mxu0
      %v886 = vadd.f32 %v788, %v885
      %v887 = vpop.f32.mrf.mxu0
      %v888 = vpop.f32.mrf.mxu0
      %v889 = vadd.f32 %v793, %v888
      %v890 = vpop.f32.mrf.mxu0
      %891 = vdwg.mxu0
      %v892 = vxor.u32 %v878, 2147483648
      %v893 = vxor.u32 %v881, 2147483648
      %v894 = vxor.u32 %v886, 2147483648
      %v895 = vxor.u32 %v889, 2147483648
      %v896 = vmul.f32 %v892, 1.442695
      %v897 = vpow.pop %v896
      %v898 = vmul.f32 %v893, 1.442695
      %v899 = vpow.pop %v898
      %v900 = vmul.f32 %v894, 1.442695
      %v901 = vpow.pop %v900
      %v902 = vmul.f32 %v895, 1.442695
      %v903 = vpow.pop %v902
      %v904 = vadd.f32 %v897, 1.0
      %v905 = vadd.f32 %v899, 1.0
      %v906 = vadd.f32 %v901, 1.0
      %v907 = vadd.f32 %v903, 1.0
      %v908 = vrcp.pop %v904
      %v909 = vmul.f32 1.0, %v908
      %v910 = vrcp.pop %v905
      %v911 = vmul.f32 1.0, %v910
      %v912 = vrcp.pop %v906
      %v913 = vmul.f32 1.0, %v912
      %v914 = vrcp.pop %v907
      %v915 = vmul.f32 1.0, %v914
      %v916 = vmul.f32 %v862, %v909
      %v917 = vmul.f32 %v865, %v911
      %v918 = vmul.f32 %v870, %v913
      %v919 = vmul.f32 %v873, %v915
      %v920 = vadd.f32 %v916, %v675
      %v921 = vadd.f32 %v917, %v676
      %v922 = vadd.f32 %v918, %v677
      %v923 = vadd.f32 %v919, %v678
      %v924 = vmul.f32 %v920, 0.70710677
      %v925 = vmul.f32 %v921, 0.70710677
      %v926 = vmul.f32 %v922, 0.70710677
      %v927 = vmul.f32 %v923, 0.70710677
      %v928 = vld [vmem:[%s5] sm:$0xf]
      %v929 = vld [vmem:[%s5 + $0x4] sm:$0xf]
      %v930 = vpack.c.bf16 %v925, %v924
      %v931 = vpack.c.bf16 %v927, %v926
      %v932 = vld [vmem:[%s6] sm:$0xff]
      %v933 = vld [vmem:[%s6 + $0x8] sm:$0xff]
      %935 = vset.pattern.permute.xlu0 0
      %936 = vperm.xlu0 %935, %v932
      %v937 = vpop.permute.xlu0 %936
      %940 = vset.pattern.permute.xlu0 0
      %941 = vperm.xlu0 %940, %v933
      %v942 = vpop.permute.xlu0 %941
      %v946 = vunpack.c.l.b16 %v928
      %v947 = vunpack.c.l.b16 %v929
      %v948 = vpack.c.b16 %v947, %v946
      %vm949 = vcmask 261120
      %v951 = vsel %vm949, %v948, 0
      %953 = vmatprep.subr.bf16.mxu0 0
      %954 = vmatpush1.bf16.msra.mxu0 0
      %955 = vmatprep.subr.bf16.mxu0 0
      %956 = vmatpush1.bf16.msra.mxu0 0
      %957 = vmatprep.subr.bf16.mxu0 0
      %958 = vmatpush1.bf16.msra.mxu0 0
      %959 = vmatprep.subr.bf16.mxu0 0
      %960 = vmatpush1.bf16.msra.mxu0 0
      %961 = vmatprep.subr.bf16.mxu0 0
      %962 = vmatpush1.bf16.msra.mxu0 0
      %963 = vmatprep.subr.bf16.mxu0 0
      %964 = vmatpush1.bf16.msra.mxu0 0
      %965 = vmatprep.subr.bf16.mxu0 0
      %966 = vmatpush1.bf16.msra.mxu0 %v931
      %967 = vmatprep.subr.bf16.mxu0 0
      %968 = vmatpush1.bf16.msra.mxu0 %v930
      %969 = vmatprep.subr.bf16.mxu0 0
      %970 = vmatpush2.bf16.msra.mxu0 0
      %971 = vmatprep.subr.bf16.mxu0 0
      %972 = vmatpush2.bf16.msra.mxu0 0
      %973 = vmatprep.subr.bf16.mxu0 0
      %974 = vmatpush2.bf16.msra.mxu0 0
      %975 = vmatprep.subr.bf16.mxu0 0
      %976 = vmatpush2.bf16.msra.mxu0 0
      %977 = vmatprep.subr.bf16.mxu0 0
      %978 = vmatpush2.bf16.msra.mxu0 0
      %979 = vmatprep.subr.bf16.mxu0 0
      %980 = vmatpush2.bf16.msra.mxu0 0
      %981 = vmatprep.subr.bf16.mxu0 0
      %982 = vmatpush2.bf16.msra.mxu0 0
      %983 = vmatprep.subr.bf16.mxu0 0
      %984 = vmatpush2.bf16.msra.mxu0 0
      %985 = vmatprep.mubr.bf16.mxu0 0
      %986 = vmatmul.mubr.bf16.gmra.mxu0 %v951
      %v987 = vpop.f32.mrf.mxu0
      %v988 = vadd.f32 %v937, %v987
      %v989 = vpop.f32.mrf.mxu0
      %v990 = vpop.f32.mrf.mxu0
      %v991 = vadd.f32 %v942, %v990
      %v992 = vpop.f32.mrf.mxu0
      %993 = vdwg.mxu0
      %vm994 = vcmask 64512
      %995 = vst.msk [vmem:[%s298] sm:$0xff] %vm994, %v988
      %996 = vst.msk [vmem:[%s298 + $0x8] sm:$0xff] %vm994, %v991
      %p997 = scmp.lt.s32.totalorder %s18, 1
      %s998 = scalar_select %p997, %s18, 1
      %s999 = smul.addr %s998, 2
      %s1000 = smul.addr %s999, 8
      %s1001 = scalar_lea.vmem %s7, %s1000
      // Predicated region
      $region49: #{convs2s_a2m_forward.5} parent=47 // pred_check
        %p1002 = pneg %p193
      $region50: #{convs2s_a2m_forward.5} parent=47 // pred_check_branch
        %1004 = sbr.rel (%p1002) target = $region52
      $region51: #{convs2s_a2m_forward.5} parent=47 // pred_region
        _
      $region52: #{convs2s_a2m_forward.5} parent=47 // pred_fallthru
        _
    $region48: #{convs2s_a2m_forward.5} parent=5 // pred_fallthru
      _
    %p1005 = scmp.le.s32.totalorder 2, %s13
    // Predicated region
    $region53: #{convs2s_a2m_forward.5} parent=5 // pred_check
      %p1006 = pneg %p1005
    $region54: #{convs2s_a2m_forward.5} parent=5 // pred_check_branch
      %1008 = sbr.rel (%p1006) target = $region56
    $region55: #{convs2s_a2m_forward.5} parent=5 // pred_region
      %s1009 = ssub.s32 %s13, 2
      // Predicated region
      $region57: #{convs2s_a2m_forward.5} parent=55 // pred_check
        %p1010 = pneg %p199
      $region58: #{convs2s_a2m_forward.5} parent=55 // pred_check_branch
        %1012 = sbr.rel (%p1010) target = $region60
      $region59: #{convs2s_a2m_forward.5} parent=55 // pred_region
        %p1013 = scmp.lt.s32.totalorder %s19, 1
        %s1014 = scalar_select %p1013, %s19, 1
        %s1015 = smul.addr %s1014, 2
        %s1016 = smul.addr %s1015, 8
        %s1017 = scalar_lea.vmem %s7, %s1016
      $region60: #{convs2s_a2m_forward.5} parent=55 // pred_fallthru
        _
    $region56: #{convs2s_a2m_forward.5} parent=5 // pred_fallthru
      _
  $region6: #{convs2s_a2m_forward.5} parent=0 // loop_footer
    %s17 = sadd.s32 1, %s13
  $region7: #{convs2s_a2m_forward.5} parent=0 // loop_footer_branch
    %12 = sbr.rel target = $region3
  $region8: #{convs2s_a2m_forward.5} parent=0 // loop_exit
    _

// kernel: convs2s_a2m_forward.7
$region0: #{convs2s_a2m_forward.7}
  #allocation0 [shape = 'u32[]', space=smem, size = 0x4, offset = 0x4, fixed_abs, tag = 'smem constant byte address 0x4 - core index']
  #allocation1 [shape = 'u32[144,128]{1,0:T(1,128)}', space=vmem, size = 0x12000, scoped, tag = 'internal scratch']
  #allocation2 [shape = 'f32[32,14]{1,0:T(8,128)}', space=vmem, size = 0x4000, scoped, tag = 'scratch operand']
  %s0 = inlined_call_operand.vmem [shape: f32[2,32,8], index: 0, kind: input, shape index: {}]
  %s1 = inlined_call_operand.vmem [shape: f32[2,32,1], index: 1, kind: input, shape index: {}]
  %s2 = inlined_call_operand.vmem [shape: bf16[32,32], index: 2, kind: input, shape index: {}]
  %s3 = inlined_call_operand.vmem [shape: bf16[2,64,96], index: 3, kind: input, shape index: {}]
  %s4 = inlined_call_operand.vmem [shape: f32[2,64,1], index: 4, kind: input, shape index: {}]
  %s5 = inlined_call_operand.vmem [shape: bf16[12,32], index: 5, kind: input, shape index: {}]
  %s6 = inlined_call_operand.vmem [shape: f32[12,1], index: 6, kind: input, shape index: {}]
  %s7 = inlined_call_operand.vmem [shape: f32[2,12,8], index: 7, kind: output, shape index: {}]
  %s8 = sld [smem:[#allocation0]]
  $region61: #{convs2s_a2m_forward.7} parent=0
    _
  %s10 = ssub.s32 1, %s8
  %s11 = scalar_select 0, %s10, %s8
  loop: start=0, step=1, limit=4
  $region2: #{convs2s_a2m_forward.7} parent=0 // loop_pre_header
    _
  $region3: #{convs2s_a2m_forward.7} parent=0 // loop_header
    %s13 = sphi 0, %s17
    %p14 = scmp.ge.s32.totalorder %s13, 4
    %s23 = sphi 0, %s25
    %s26 = sphi 0, %s23
    %s27 = sphi 0, %s26
    %s43 = sphi 0, %s27
    %s49 = sphi 0, %s51
    %s52 = sphi 0, %s49
    %s53 = sphi 0, %s52
    %s69 = sphi 0, %s53
    %s73 = sphi 0, %s73
    %s75 = sphi 0, %s73
    %s76 = sphi 0, %s75
    %s90 = sphi 0, %s76
    %s94 = sphi 0, %s94
    %s96 = sphi 0, %s94
    %s97 = sphi 0, %s96
    %s111 = sphi 0, %s97
    %s115 = sphi 0, %s115
    %s117 = sphi 0, %s115
    %s118 = sphi 0, %s117
    %s132 = sphi 0, %s118
    %s136 = sphi 0, %s136
    %s138 = sphi 0, %s136
    %s139 = sphi 0, %s138
    %s153 = sphi 0, %s139
    %s157 = sphi 0, %s157
    %s159 = sphi 0, %s157
    %s160 = sphi 0, %s159
    %s174 = sphi 0, %s160
    %s180 = sphi 0, %s182
    %s183 = sphi 0, %s180
    %s184 = sphi 0, %s183
    %s200 = sphi 0, %s184
  $region4: #{convs2s_a2m_forward.7} parent=0 // loop_header_branch
    %16 = sbr.rel (%p14) target = $region8
  $region5: #{convs2s_a2m_forward.7} parent=0 // loop_body
    %s18 = ssub.s32 %s13, 1
    %s19 = ssub.s32 %s13, 2
    %s20 = sadd.s32 %s13, 1
    %s21 = ssub.s32 %s13, %s20
    %p22 = scmp.eq.s32.totalorder %s21, 0
    %s24 = sadd.s32 %s23, 1
    %s25 = scalar_select %p22, %s23, %s24
    %p28 = pneg %p22
    %p29 = scmp.eq.s32.totalorder %s13, 1
    %p30 = por %p28, %p29
    %p31 = scmp.ne.s32.totalorder %s23, %s26
    %p32 = scmp.eq.s32.totalorder %s13, 0
    %p33 = por %p31, %p32
    %p34 = scmp.ne.s32.totalorder %s23, %s26
    %p35 = scmp.eq.s32.totalorder %s18, 1
    %p36 = por %p34, %p35
    %p37 = scmp.ne.s32.totalorder %s26, %s27
    %p38 = scmp.eq.s32.totalorder %s18, 0
    %p39 = por %p37, %p38
    %p40 = scmp.ne.s32.totalorder %s26, %s27
    %p41 = scmp.eq.s32.totalorder %s19, 1
    %p42 = por %p40, %p41
    %p44 = scmp.ne.s32.totalorder %s27, %s43
    %p45 = scmp.eq.s32.totalorder %s19, 0
    %p46 = por %p44, %p45
    %s47 = ssub.s32 %s13, %s20
    %p48 = scmp.eq.s32.totalorder %s47, 0
    %s50 = sadd.s32 %s49, 1
    %s51 = scalar_select %p48, %s49, %s50
    %p54 = pneg %p48
    %p55 = scmp.eq.s32.totalorder %s13, 1
    %p56 = por %p54, %p55
    %p57 = scmp.ne.s32.totalorder %s49, %s52
    %p58 = scmp.eq.s32.totalorder %s13, 0
    %p59 = por %p57, %p58
    %p60 = scmp.ne.s32.totalorder %s49, %s52
    %p61 = scmp.eq.s32.totalorder %s18, 1
    %p62 = por %p60, %p61
    %p63 = scmp.ne.s32.totalorder %s52, %s53
    %p64 = scmp.eq.s32.totalorder %s18, 0
    %p65 = por %p63, %p64
    %p66 = scmp.ne.s32.totalorder %s52, %s53
    %p67 = scmp.eq.s32.totalorder %s19, 1
    %p68 = por %p66, %p67
    %p70 = scmp.ne.s32.totalorder %s53, %s69
    %p71 = scmp.eq.s32.totalorder %s19, 0
    %p72 = por %p70, %p71
    %s74 = sadd.s32 %s73, 1
    %p77 = scmp.eq.s32.totalorder %s13, 1
    %p78 = scmp.ne.s32.totalorder %s73, %s75
    %p79 = scmp.eq.s32.totalorder %s13, 0
    %p80 = por %p78, %p79
    %p81 = scmp.ne.s32.totalorder %s73, %s75
    %p82 = scmp.eq.s32.totalorder %s18, 1
    %p83 = por %p81, %p82
    %p84 = scmp.ne.s32.totalorder %s75, %s76
    %p85 = scmp.eq.s32.totalorder %s18, 0
    %p86 = por %p84, %p85
    %p87 = scmp.ne.s32.totalorder %s75, %s76
    %p88 = scmp.eq.s32.totalorder %s19, 1
    %p89 = por %p87, %p88
    %p91 = scmp.ne.s32.totalorder %s76, %s90
    %p92 = scmp.eq.s32.totalorder %s19, 0
    %p93 = por %p91, %p92
    %s95 = sadd.s32 %s94, 1
    %p98 = scmp.eq.s32.totalorder %s13, 1
    %p99 = scmp.ne.s32.totalorder %s94, %s96
    %p100 = scmp.eq.s32.totalorder %s13, 0
    %p101 = por %p99, %p100
    %p102 = scmp.ne.s32.totalorder %s94, %s96
    %p103 = scmp.eq.s32.totalorder %s18, 1
    %p104 = por %p102, %p103
    %p105 = scmp.ne.s32.totalorder %s96, %s97
    %p106 = scmp.eq.s32.totalorder %s18, 0
    %p107 = por %p105, %p106
    %p108 = scmp.ne.s32.totalorder %s96, %s97
    %p109 = scmp.eq.s32.totalorder %s19, 1
    %p110 = por %p108, %p109
    %p112 = scmp.ne.s32.totalorder %s97, %s111
    %p113 = scmp.eq.s32.totalorder %s19, 0
    %p114 = por %p112, %p113
    %s116 = sadd.s32 %s115, 1
    %p119 = scmp.eq.s32.totalorder %s13, 1
    %p120 = scmp.ne.s32.totalorder %s115, %s117
    %p121 = scmp.eq.s32.totalorder %s13, 0
    %p122 = por %p120, %p121
    %p123 = scmp.ne.s32.totalorder %s115, %s117
    %p124 = scmp.eq.s32.totalorder %s18, 1
    %p125 = por %p123, %p124
    %p126 = scmp.ne.s32.totalorder %s117, %s118
    %p127 = scmp.eq.s32.totalorder %s18, 0
    %p128 = por %p126, %p127
    %p129 = scmp.ne.s32.totalorder %s117, %s118
    %p130 = scmp.eq.s32.totalorder %s19, 1
    %p131 = por %p129, %p130
    %p133 = scmp.ne.s32.totalorder %s118, %s132
    %p134 = scmp.eq.s32.totalorder %s19, 0
    %p135 = por %p133, %p134
    %s137 = sadd.s32 %s136, 1
    %p140 = scmp.eq.s32.totalorder %s13, 1
    %p141 = scmp.ne.s32.totalorder %s136, %s138
    %p142 = scmp.eq.s32.totalorder %s13, 0
    %p143 = por %p141, %p142
    %p144 = scmp.ne.s32.totalorder %s136, %s138
    %p145 = scmp.eq.s32.totalorder %s18, 1
    %p146 = por %p144, %p145
    %p147 = scmp.ne.s32.totalorder %s138, %s139
    %p148 = scmp.eq.s32.totalorder %s18, 0
    %p149 = por %p147, %p148
    %p150 = scmp.ne.s32.totalorder %s138, %s139
    %p151 = scmp.eq.s32.totalorder %s19, 1
    %p152 = por %p150, %p151
    %p154 = scmp.ne.s32.totalorder %s139, %s153
    %p155 = scmp.eq.s32.totalorder %s19, 0
    %p156 = por %p154, %p155
    %s158 = sadd.s32 %s157, 1
    %p161 = scmp.eq.s32.totalorder %s13, 1
    %p162 = scmp.ne.s32.totalorder %s157, %s159
    %p163 = scmp.eq.s32.totalorder %s13, 0
    %p164 = por %p162, %p163
    %p165 = scmp.ne.s32.totalorder %s157, %s159
    %p166 = scmp.eq.s32.totalorder %s18, 1
    %p167 = por %p165, %p166
    %p168 = scmp.ne.s32.totalorder %s159, %s160
    %p169 = scmp.eq.s32.totalorder %s18, 0
    %p170 = por %p168, %p169
    %p171 = scmp.ne.s32.totalorder %s159, %s160
    %p172 = scmp.eq.s32.totalorder %s19, 1
    %p173 = por %p171, %p172
    %p175 = scmp.ne.s32.totalorder %s160, %s174
    %p176 = scmp.eq.s32.totalorder %s19, 0
    %p177 = por %p175, %p176
    %s178 = ssub.s32 %s13, %s20
    %p179 = scmp.eq.s32.totalorder %s178, 0
    %s181 = sadd.s32 %s180, 1
    %s182 = scalar_select %p179, %s180, %s181
    %p185 = pneg %p179
    %p186 = scmp.eq.s32.totalorder %s13, 1
    %p187 = por %p185, %p186
    %p188 = scmp.ne.s32.totalorder %s180, %s183
    %p189 = scmp.eq.s32.totalorder %s13, 0
    %p190 = por %p188, %p189
    %p191 = scmp.ne.s32.totalorder %s180, %s183
    %p192 = scmp.eq.s32.totalorder %s18, 1
    %p193 = por %p191, %p192
    %p194 = scmp.ne.s32.totalorder %s183, %s184
    %p195 = scmp.eq.s32.totalorder %s18, 0
    %p196 = por %p194, %p195
    %p197 = scmp.ne.s32.totalorder %s183, %s184
    %p198 = scmp.eq.s32.totalorder %s19, 1
    %p199 = por %p197, %p198
    %p201 = scmp.ne.s32.totalorder %s184, %s200
    %p202 = scmp.eq.s32.totalorder %s19, 0
    %p203 = por %p201, %p202
    %p204 = scmp.le.s32.totalorder 1, %s13
    %p205 = scmp.lt.s32.totalorder %s13, 3
    %p206 = pnand %p204, %p205
    %p207 = pneg %p206
    // Predicated region
    $region9: #{convs2s_a2m_forward.7} parent=5 // pred_check
      _
    $region10: #{convs2s_a2m_forward.7} parent=5 // pred_check_branch
      %209 = sbr.rel (%p206) target = $region12
    $region11: #{convs2s_a2m_forward.7} parent=5 // pred_region
      %s210 = ssub.s32 %s13, 1
      // Predicated region
      $region13: #{convs2s_a2m_forward.7} parent=11 // pred_check
        %p211 = pneg %p86
      $region14: #{convs2s_a2m_forward.7} parent=11 // pred_check_branch
        %213 = sbr.rel (%p211) target = $region16
      $region15: #{convs2s_a2m_forward.7} parent=11 // pred_region
        _
      $region16: #{convs2s_a2m_forward.7} parent=11 // pred_fallthru
        _
      // Predicated region
      $region17: #{convs2s_a2m_forward.7} parent=11 // pred_check
        %p214 = pneg %p107
      $region18: #{convs2s_a2m_forward.7} parent=11 // pred_check_branch
        %216 = sbr.rel (%p214) target = $region20
      $region19: #{convs2s_a2m_forward.7} parent=11 // pred_region
        _
      $region20: #{convs2s_a2m_forward.7} parent=11 // pred_fallthru
        _
      // Predicated region
      $region21: #{convs2s_a2m_forward.7} parent=11 // pred_check
        %p217 = pneg %p128
      $region22: #{convs2s_a2m_forward.7} parent=11 // pred_check_branch
        %219 = sbr.rel (%p217) target = $region24
      $region23: #{convs2s_a2m_forward.7} parent=11 // pred_region
        _
      $region24: #{convs2s_a2m_forward.7} parent=11 // pred_fallthru
        _
      // Predicated region
      $region25: #{convs2s_a2m_forward.7} parent=11 // pred_check
        %p220 = pneg %p149
      $region26: #{convs2s_a2m_forward.7} parent=11 // pred_check_branch
        %222 = sbr.rel (%p220) target = $region28
      $region27: #{convs2s_a2m_forward.7} parent=11 // pred_region
        _
      $region28: #{convs2s_a2m_forward.7} parent=11 // pred_fallthru
        _
      // Predicated region
      $region29: #{convs2s_a2m_forward.7} parent=11 // pred_check
        %p223 = pneg %p170
      $region30: #{convs2s_a2m_forward.7} parent=11 // pred_check_branch
        %225 = sbr.rel (%p223) target = $region32
      $region31: #{convs2s_a2m_forward.7} parent=11 // pred_region
        _
      $region32: #{convs2s_a2m_forward.7} parent=11 // pred_fallthru
        _
    $region12: #{convs2s_a2m_forward.7} parent=5 // pred_fallthru
      _
    %p226 = scmp.lt.s32.totalorder %s13, 2
    // Predicated region
    $region33: #{convs2s_a2m_forward.7} parent=5 // pred_check
      %p227 = pneg %p226
    $region34: #{convs2s_a2m_forward.7} parent=5 // pred_check_branch
      %229 = sbr.rel (%p227) target = $region36
    $region35: #{convs2s_a2m_forward.7} parent=5 // pred_region
      // Predicated region
      $region37: #{convs2s_a2m_forward.7} parent=35 // pred_check
        %p230 = pneg %p33
      $region38: #{convs2s_a2m_forward.7} parent=35 // pred_check_branch
        %232 = sbr.rel (%p230) target = $region40
      $region39: #{convs2s_a2m_forward.7} parent=35 // pred_region
        %p233 = scmp.lt.s32.totalorder %s13, 1
        %s234 = scalar_select %p233, %s13, 1
        %s235 = smul.addr %s234, 4
        %s236 = smul.addr %s235, 8
        %s237 = scalar_lea.vmem %s0, %s236
      $region40: #{convs2s_a2m_forward.7} parent=35 // pred_fallthru
        _
      // Predicated region
      $region41: #{convs2s_a2m_forward.7} parent=35 // pred_check
        %p238 = pneg %p59
      $region42: #{convs2s_a2m_forward.7} parent=35 // pred_check_branch
        %240 = sbr.rel (%p238) target = $region44
      $region43: #{convs2s_a2m_forward.7} parent=35 // pred_region
        %p241 = scmp.lt.s32.totalorder %s13, 1
        %s242 = scalar_select %p241, %s13, 1
        %s243 = smul.addr %s242, 4
        %s244 = smul.addr %s243, 8
        %s245 = scalar_lea.vmem %s1, %s244
      $region44: #{convs2s_a2m_forward.7} parent=35 // pred_fallthru
        _
    $region36: #{convs2s_a2m_forward.7} parent=5 // pred_fallthru
      _
    %p246 = scmp.le.s32.totalorder 1, %s13
    %p247 = scmp.lt.s32.totalorder %s13, 3
    %p248 = pnand %p246, %p247
    %p249 = pneg %p248
    // Predicated region
    $region45: #{convs2s_a2m_forward.7} parent=5 // pred_check
      _
    $region46: #{convs2s_a2m_forward.7} parent=5 // pred_check_branch
      %251 = sbr.rel (%p248) target = $region48
    $region47: #{convs2s_a2m_forward.7} parent=5 // pred_region
      %s252 = ssub.s32 %s13, 1
      %p253 = scmp.lt.s32.totalorder %s18, 1
      %s254 = scalar_select %p253, %s18, 1
      %s255 = smul.addr %s254, 4
      %s256 = smul.addr %s255, 8
      %s257 = scalar_lea.vmem %s0, %s256
      %p258 = pneg %p39
      %p259 = pneg %p36
      %p260 = scmp.lt.s32.totalorder %s18, 1
      %s261 = scalar_select %p260, %s18, 1
      %s262 = smul.addr %s261, 4
      %s263 = smul.addr %s262, 8
      %s264 = scalar_lea.vmem %s1, %s263
      %p265 = pneg %p65
      %p266 = pneg %p62
      %p267 = pneg %p86
      %p268 = pneg %p83
      %p269 = pneg %p107
      %p270 = pneg %p104
      %p271 = pneg %p128
      %p272 = pneg %p125
      %p273 = pneg %p149
      %p274 = pneg %p146
      %p275 = pneg %p170
      %p276 = pneg %p167
      %p277 = pneg %p196
      %p278 = pneg %p193
      %p279 = scmp.lt.s32.totalorder %s18, 1
      %s280 = scalar_select %p279, %s18, 1
      %s281 = smul.addr %s280, 2
      %s282 = smul.addr %s281, 8
      %s283 = scalar_lea.vmem %s7, %s282
      %p284 = scmp.lt.s32.totalorder %s18, 1
      %s285 = scalar_select %p284, %s18, 1
      %s286 = smul.addr %s285, 4
      %s287 = smul.addr %s286, 8
      %s288 = scalar_lea.vmem %s0, %s287
      %p289 = scmp.lt.s32.totalorder %s18, 1
      %s290 = scalar_select %p289, %s18, 1
      %s291 = smul.addr %s290, 4
      %s292 = smul.addr %s291, 8
      %s293 = scalar_lea.vmem %s1, %s292
      %p294 = scmp.lt.s32.totalorder %s18, 1
      %s295 = scalar_select %p294, %s18, 1
      %s296 = smul.addr %s295, 2
      %s297 = smul.addr %s296, 8
      %s298 = scalar_lea.vmem %s7, %s297
      %v300 = vld [vmem:[%s2] sm:$0xf]
      %v301 = vld [vmem:[%s2 + $0x4] sm:$0xf]
      %v302 = vld [vmem:[%s2 + $0x8] sm:$0xf]
      %v303 = vld [vmem:[%s2 + $0xc] sm:$0xf]
      %v304 = vld [vmem:[%s288] sm:$0xff]
      %v305 = vld [vmem:[%s288 + $0x8] sm:$0xff]
      %v306 = vld [vmem:[%s288 + $0x10] sm:$0xff]
      %v307 = vld [vmem:[%s288 + $0x18] sm:$0xff]
      %v308 = vpack.c.bf16 %v305, %v304
      %v309 = vpack.c.bf16 %v307, %v306
      %v310 = vld [vmem:[%s293] sm:$0xff]
      %v311 = vld [vmem:[%s293 + $0x8] sm:$0xff]
      %v312 = vld [vmem:[%s293 + $0x10] sm:$0xff]
      %v313 = vld [vmem:[%s293 + $0x18] sm:$0xff]
      %315 = vset.pattern.permute.xlu0 0
      %316 = vperm.xlu0 %315, %v310
      %v317 = vpop.permute.xlu0 %316
      %320 = vset.pattern.permute.xlu0 0
      %321 = vperm.xlu0 %320, %v311
      %v322 = vpop.permute.xlu0 %321
      %325 = vset.pattern.permute.xlu0 0
      %326 = vperm.xlu0 %325, %v312
      %v327 = vpop.permute.xlu0 %326
      %330 = vset.pattern.permute.xlu0 0
      %331 = vperm.xlu0 %330, %v313
      %v332 = vpop.permute.xlu0 %331
      %v338 = vunpack.c.l.b16 %v300
      %v339 = vunpack.c.l.b16 %v301
      %v340 = vunpack.c.l.b16 %v302
      %v341 = vunpack.c.l.b16 %v303
      %v342 = vpack.c.b16 %v339, %v338
      %v343 = vpack.c.b16 %v341, %v340
      %vm344 = vcmask 261120
      %v346 = vsel %vm344, %v342, 0
      %v349 = vsel %vm344, %v343, 0
      %351 = vmatprep.subr.bf16.mxu0 0
      %352 = vmatpush1.bf16.msra.mxu0 0
      %353 = vmatprep.subr.bf16.mxu0 0
      %354 = vmatpush1.bf16.msra.mxu0 0
      %355 = vmatprep.subr.bf16.mxu0 0
      %356 = vmatpush1.bf16.msra.mxu0 0
      %357 = vmatprep.subr.bf16.mxu0 0
      %358 = vmatpush1.bf16.msra.mxu0 0
      %359 = vmatprep.subr.bf16.mxu0 0
      %360 = vmatpush1.bf16.msra.mxu0 0
      %361 = vmatprep.subr.bf16.mxu0 0
      %362 = vmatpush1.bf16.msra.mxu0 0
      %363 = vmatprep.subr.bf16.mxu0 0
      %364 = vmatpush1.bf16.msra.mxu0 %v309
      %365 = vmatprep.subr.bf16.mxu0 0
      %366 = vmatpush1.bf16.msra.mxu0 %v308
      %367 = vmatprep.subr.bf16.mxu0 0
      %368 = vmatpush2.bf16.msra.mxu0 0
      %369 = vmatprep.subr.bf16.mxu0 0
      %370 = vmatpush2.bf16.msra.mxu0 0
      %371 = vmatprep.subr.bf16.mxu0 0
      %372 = vmatpush2.bf16.msra.mxu0 0
      %373 = vmatprep.subr.bf16.mxu0 0
      %374 = vmatpush2.bf16.msra.mxu0 0
      %375 = vmatprep.subr.bf16.mxu0 0
      %376 = vmatpush2.bf16.msra.mxu0 0
      %377 = vmatprep.subr.bf16.mxu0 0
      %378 = vmatpush2.bf16.msra.mxu0 0
      %379 = vmatprep.subr.bf16.mxu0 0
      %380 = vmatpush2.bf16.msra.mxu0 0
      %381 = vmatprep.subr.bf16.mxu0 0
      %382 = vmatpush2.bf16.msra.mxu0 0
      %383 = vmatprep.mubr.bf16.mxu0 0
      %384 = vmatmul.mubr.bf16.gmra.mxu0 %v346
      %v385 = vpop.f32.mrf.mxu0
      %v386 = vadd.f32 %v317, %v385
      %v387 = vpop.f32.mrf.mxu0
      %v388 = vpop.f32.mrf.mxu0
      %v389 = vadd.f32 %v322, %v388
      %v390 = vpop.f32.mrf.mxu0
      %391 = vmatprep.mubr.bf16.mxu0 0
      %392 = vmatmul.mubr.bf16.gmra.mxu0 %v349
      %v393 = vpop.f32.mrf.mxu0
      %v394 = vadd.f32 %v327, %v393
      %v395 = vpop.f32.mrf.mxu0
      %v396 = vpop.f32.mrf.mxu0
      %v397 = vadd.f32 %v332, %v396
      %v398 = vpop.f32.mrf.mxu0
      %399 = vdwg.mxu0
      %vm400 = vcmask 113664
      %401 = vst.msk [vmem:[#allocation2] sm:$0xff] %vm400, 0.0
      %402 = vst.msk [vmem:[#allocation2 + $0x8] sm:$0xff] %vm400, 0.0
      %403 = vst.msk [vmem:[#allocation2 + $0x10] sm:$0xff] %vm400, 0.0
      %404 = vst.msk [vmem:[#allocation2 + $0x18] sm:$0xff] %vm400, 0.0
      %409 = vrot.lane.b32.xlu0 %v386, 3
      %v410 = vpop.permute.xlu0 %409
      %411 = vrot.lane.b32.xlu0 %v389, 3
      %v412 = vpop.permute.xlu0 %411
      %413 = vrot.lane.b32.xlu0 %v394, 3
      %v414 = vpop.permute.xlu0 %413
      %415 = vrot.lane.b32.xlu0 %v397, 3
      %v416 = vpop.permute.xlu0 %415
      %vm421 = vcmask 89112
      %422 = vst.msk [vmem:[#allocation2] sm:$0xff] %vm421, %v410
      %423 = vst.msk [vmem:[#allocation2 + $0x8] sm:$0xff] %vm421, %v412
      %424 = vst.msk [vmem:[#allocation2 + $0x10] sm:$0xff] %vm421, %v414
      %425 = vst.msk [vmem:[#allocation2 + $0x18] sm:$0xff] %vm421, %v416
      %v426 = vld [vmem:[#allocation2] sm:$0xff]
      %v427 = vld [vmem:[#allocation2 + $0x8] sm:$0xff]
      %v428 = vld [vmem:[#allocation2 + $0x10] sm:$0xff]
      %v429 = vld [vmem:[#allocation2 + $0x18] sm:$0xff]
      %434 = vrot.lane.b32.xlu0 %v426, 127
      %v435 = vpop.permute.xlu0 %434
      %436 = vrot.lane.b32.xlu0 %v427, 127
      %v437 = vpop.permute.xlu0 %436
      %438 = vrot.lane.b32.xlu0 %v428, 127
      %v439 = vpop.permute.xlu0 %438
      %440 = vrot.lane.b32.xlu0 %v429, 127
      %v441 = vpop.permute.xlu0 %440
      %446 = vrot.lane.b32.xlu0 %v426, 126
      %v447 = vpop.permute.xlu0 %446
      %448 = vrot.lane.b32.xlu0 %v427, 126
      %v449 = vpop.permute.xlu0 %448
      %450 = vrot.lane.b32.xlu0 %v428, 126
      %v451 = vpop.permute.xlu0 %450
      %452 = vrot.lane.b32.xlu0 %v429, 126
      %v453 = vpop.permute.xlu0 %452
      %v458 = vpack.c.bf16 %v427, %v426
      %v459 = vpack.c.bf16 %v429, %v428
      %v460 = vpack.c.bf16 %v437, %v435
      %v461 = vpack.c.bf16 %v441, %v439
      %v462 = vpack.c.bf16 %v449, %v447
      %v463 = vpack.c.bf16 %v453, %v451
      %v464 = vld [vmem:[%s3] sm:$0xf]
      %v465 = vld [vmem:[%s3 + $0x4] sm:$0xf]
      %v466 = vld [vmem:[%s3 + $0x8] sm:$0xf]
      %v467 = vld [vmem:[%s3 + $0xc] sm:$0xf]
      %v468 = vld [vmem:[%s3 + $0x10] sm:$0xf]
      %v469 = vld [vmem:[%s3 + $0x14] sm:$0xf]
      %v470 = vld [vmem:[%s3 + $0x18] sm:$0xf]
      %v471 = vld [vmem:[%s3 + $0x1c] sm:$0xf]
      %v472 = vld [vmem:[%s4] sm:$0xff]
      %v473 = vld [vmem:[%s4 + $0x8] sm:$0xff]
      %v474 = vld [vmem:[%s4 + $0x10] sm:$0xff]
      %v475 = vld [vmem:[%s4 + $0x18] sm:$0xff]
      %v476 = vld [vmem:[%s4 + $0x20] sm:$0xff]
      %v477 = vld [vmem:[%s4 + $0x28] sm:$0xff]
      %v478 = vld [vmem:[%s4 + $0x30] sm:$0xff]
      %v479 = vld [vmem:[%s4 + $0x38] sm:$0xff]
      %481 = vset.pattern.permute.xlu0 0
      %482 = vperm.xlu0 %481, %v472
      %v483 = vpop.permute.xlu0 %482
      %486 = vset.pattern.permute.xlu0 0
      %487 = vperm.xlu0 %486, %v473
      %v488 = vpop.permute.xlu0 %487
      %491 = vset.pattern.permute.xlu0 0
      %492 = vperm.xlu0 %491, %v474
      %v493 = vpop.permute.xlu0 %492
      %496 = vset.pattern.permute.xlu0 0
      %497 = vperm.xlu0 %496, %v475
      %v498 = vpop.permute.xlu0 %497
      %501 = vset.pattern.permute.xlu0 0
      %502 = vperm.xlu0 %501, %v476
      %v503 = vpop.permute.xlu0 %502
      %506 = vset.pattern.permute.xlu0 0
      %507 = vperm.xlu0 %506, %v477
      %v508 = vpop.permute.xlu0 %507
      %511 = vset.pattern.permute.xlu0 0
      %512 = vperm.xlu0 %511, %v478
      %v513 = vpop.permute.xlu0 %512
      %516 = vset.pattern.permute.xlu0 0
      %517 = vperm.xlu0 %516, %v479
      %v518 = vpop.permute.xlu0 %517
      %v528 = vunpack.c.l.b16 %v464
      %v529 = vunpack.c.l.b16 %v465
      %v530 = vunpack.c.l.b16 %v466
      %v531 = vunpack.c.l.b16 %v467
      %v532 = vunpack.c.l.b16 %v468
      %v533 = vunpack.c.l.b16 %v469
      %v534 = vunpack.c.l.b16 %v470
      %v535 = vunpack.c.l.b16 %v471
      %v536 = vpack.c.b16 %v529, %v528
      %v537 = vpack.c.b16 %v531, %v530
      %v538 = vpack.c.b16 %v533, %v532
      %v539 = vpack.c.b16 %v535, %v534
      %546 = vrot.lane.b32.xlu0 %v458, 126
      %v547 = vpop.permute.xlu0 %546
      %548 = vrot.lane.b32.xlu0 %v459, 126
      %v549 = vpop.permute.xlu0 %548
      %550 = vrot.lane.b32.xlu0 %v460, 126
      %v551 = vpop.permute.xlu0 %550
      %552 = vrot.lane.b32.xlu0 %v461, 126
      %v553 = vpop.permute.xlu0 %552
      %554 = vrot.lane.b32.xlu0 %v462, 126
      %v555 = vpop.permute.xlu0 %554
      %556 = vrot.lane.b32.xlu0 %v463, 126
      %v557 = vpop.permute.xlu0 %556
      %vm564 = vcmask 785408
      %v566 = vsel %vm564, %v536, 0
      %v569 = vsel %vm564, %v537, 0
      %v572 = vsel %vm564, %v538, 0
      %v575 = vsel %vm564, %v539, 0
      %577 = vmatprep.subr.bf16.mxu0 0
      %578 = vmatpush1.bf16.msra.mxu0 0
      %579 = vmatprep.subr.bf16.mxu0 0
      %580 = vmatpush1.bf16.msra.mxu0 0
      %581 = vmatprep.subr.bf16.mxu0 0
      %582 = vmatpush1.bf16.msra.mxu0 %v557
      %583 = vmatprep.subr.bf16.mxu0 0
      %584 = vmatpush1.bf16.msra.mxu0 %v555
      %585 = vmatprep.subr.bf16.mxu0 0
      %586 = vmatpush1.bf16.msra.mxu0 %v553
      %587 = vmatprep.subr.bf16.mxu0 0
      %588 = vmatpush1.bf16.msra.mxu0 %v551
      %589 = vmatprep.subr.bf16.mxu0 0
      %590 = vmatpush1.bf16.msra.mxu0 %v549
      %591 = vmatprep.subr.bf16.mxu0 0
      %592 = vmatpush1.bf16.msra.mxu0 %v547
      %593 = vmatprep.subr.bf16.mxu0 0
      %594 = vmatpush2.bf16.msra.mxu0 0
      %595 = vmatprep.subr.bf16.mxu0 0
      %596 = vmatpush2.bf16.msra.mxu0 0
      %597 = vmatprep.subr.bf16.mxu0 0
      %598 = vmatpush2.bf16.msra.mxu0 0
      %599 = vmatprep.subr.bf16.mxu0 0
      %600 = vmatpush2.bf16.msra.mxu0 0
      %601 = vmatprep.subr.bf16.mxu0 0
      %602 = vmatpush2.bf16.msra.mxu0 0
      %603 = vmatprep.subr.bf16.mxu0 0
      %604 = vmatpush2.bf16.msra.mxu0 0
      %605 = vmatprep.subr.bf16.mxu0 0
      %606 = vmatpush2.bf16.msra.mxu0 0
      %607 = vmatprep.subr.bf16.mxu0 0
      %608 = vmatpush2.bf16.msra.mxu0 0
      %609 = vmatprep.mubr.bf16.mxu0 0
      %610 = vmatmul.mubr.bf16.gmra.mxu0 %v566
      %v611 = vpop.f32.mrf.mxu0
      %v612 = vadd.f32 %v483, %v611
      %v613 = vpop.f32.mrf.mxu0
      %v614 = vpop.f32.mrf.mxu0
      %v615 = vadd.f32 %v488, %v614
      %v616 = vpop.f32.mrf.mxu0
      %617 = vmatprep.mubr.bf16.mxu0 0
      %618 = vmatmul.mubr.bf16.gmra.mxu0 %v569
      %v619 = vpop.f32.mrf.mxu0
      %v620 = vadd.f32 %v493, %v619
      %v621 = vpop.f32.mrf.mxu0
      %v622 = vpop.f32.mrf.mxu0
      %v623 = vadd.f32 %v498, %v622
      %v624 = vpop.f32.mrf.mxu0
      %625 = vmatprep.mubr.bf16.mxu0 0
      %626 = vmatmul.mubr.bf16.gmra.mxu0 %v572
      %v627 = vpop.f32.mrf.mxu0
      %v628 = vadd.f32 %v503, %v627
      %v629 = vpop.f32.mrf.mxu0
      %v630 = vpop.f32.mrf.mxu0
      %v631 = vadd.f32 %v508, %v630
      %v632 = vpop.f32.mrf.mxu0
      %633 = vmatprep.mubr.bf16.mxu0 0
      %634 = vmatmul.mubr.bf16.gmra.mxu0 %v575
      %v635 = vpop.f32.mrf.mxu0
      %v636 = vadd.f32 %v513, %v635
      %v637 = vpop.f32.mrf.mxu0
      %v638 = vpop.f32.mrf.mxu0
      %v639 = vadd.f32 %v518, %v638
      %v640 = vpop.f32.mrf.mxu0
      %641 = vdwg.mxu0
      %v642 = vxor.u32 %v628, 2147483648
      %v643 = vxor.u32 %v631, 2147483648
      %v644 = vxor.u32 %v636, 2147483648
      %v645 = vxor.u32 %v639, 2147483648
      %v646 = vmul.f32 %v642, 1.442695
      %v647 = vpow.pop %v646
      %v648 = vmul.f32 %v643, 1.442695
      %v649 = vpow.pop %v648
      %v650 = vmul.f32 %v644, 1.442695
      %v651 = vpow.pop %v650
      %v652 = vmul.f32 %v645, 1.442695
      %v653 = vpow.pop %v652
      %v654 = vadd.f32 %v647, 1.0
      %v655 = vadd.f32 %v649, 1.0
      %v656 = vadd.f32 %v651, 1.0
      %v657 = vadd.f32 %v653, 1.0
      %v658 = vrcp.pop %v654
      %v659 = vmul.f32 1.0, %v658
      %v660 = vrcp.pop %v655
      %v661 = vmul.f32 1.0, %v660
      %v662 = vrcp.pop %v656
      %v663 = vmul.f32 1.0, %v662
      %v664 = vrcp.pop %v657
      %v665 = vmul.f32 1.0, %v664
      %v666 = vmul.f32 %v612, %v659
      %v667 = vmul.f32 %v615, %v661
      %v668 = vmul.f32 %v620, %v663
      %v669 = vmul.f32 %v623, %v665
      %v670 = vadd.f32 %v666, %v386
      %v671 = vadd.f32 %v667, %v389
      %v672 = vadd.f32 %v668, %v394
      %v673 = vadd.f32 %v669, %v397
      %v674 = vmul.f32 %v670, 0.70710677
      %v675 = vmul.f32 %v671, 0.70710677
      %v676 = vmul.f32 %v672, 0.70710677
      %v677 = vmul.f32 %v673, 0.70710677
      %682 = vrot.lane.b32.xlu0 %v674, 3
      %v683 = vpop.permute.xlu0 %682
      %684 = vrot.lane.b32.xlu0 %v675, 3
      %v685 = vpop.permute.xlu0 %684
      %686 = vrot.lane.b32.xlu0 %v676, 3
      %v687 = vpop.permute.xlu0 %686
      %688 = vrot.lane.b32.xlu0 %v677, 3
      %v689 = vpop.permute.xlu0 %688
      %694 = vst.msk [vmem:[#allocation2] sm:$0xff] %vm421, %v683
      %695 = vst.msk [vmem:[#allocation2 + $0x8] sm:$0xff] %vm421, %v685
      %696 = vst.msk [vmem:[#allocation2 + $0x10] sm:$0xff] %vm421, %v687
      %697 = vst.msk [vmem:[#allocation2 + $0x18] sm:$0xff] %vm421, %v689
      %v698 = vld [vmem:[#allocation2] sm:$0xff]
      %v699 = vld [vmem:[#allocation2 + $0x8] sm:$0xff]
      %v700 = vld [vmem:[#allocation2 + $0x10] sm:$0xff]
      %v701 = vld [vmem:[#allocation2 + $0x18] sm:$0xff]
      %706 = vrot.lane.b32.xlu0 %v698, 125
      %v707 = vpop.permute.xlu0 %706
      %708 = vrot.lane.b32.xlu0 %v699, 125
      %v709 = vpop.permute.xlu0 %708
      %710 = vrot.lane.b32.xlu0 %v700, 125
      %v711 = vpop.permute.xlu0 %710
      %712 = vrot.lane.b32.xlu0 %v701, 125
      %v713 = vpop.permute.xlu0 %712
      %718 = vrot.lane.b32.xlu0 %v698, 122
      %v719 = vpop.permute.xlu0 %718
      %720 = vrot.lane.b32.xlu0 %v699, 122
      %v721 = vpop.permute.xlu0 %720
      %722 = vrot.lane.b32.xlu0 %v700, 122
      %v723 = vpop.permute.xlu0 %722
      %724 = vrot.lane.b32.xlu0 %v701, 122
      %v725 = vpop.permute.xlu0 %724
      %v730 = vpack.c.bf16 %v699, %v698
      %v731 = vpack.c.bf16 %v701, %v700
      %v732 = vpack.c.bf16 %v709, %v707
      %v733 = vpack.c.bf16 %v713, %v711
      %v734 = vpack.c.bf16 %v721, %v719
      %v735 = vpack.c.bf16 %v725, %v723
      %s736 = scalar_lea.vmem %s3, 32
      %v737 = vld [vmem:[%s736] sm:$0xf]
      %v738 = vld [vmem:[%s736 + $0x4] sm:$0xf]
      %v739 = vld [vmem:[%s736 + $0x8] sm:$0xf]
      %v740 = vld [vmem:[%s736 + $0xc] sm:$0xf]
      %v741 = vld [vmem:[%s736 + $0x10] sm:$0xf]
      %v742 = vld [vmem:[%s736 + $0x14] sm:$0xf]
      %v743 = vld [vmem:[%s736 + $0x18] sm:$0xf]
      %v744 = vld [vmem:[%s736 + $0x1c] sm:$0xf]
      %s745 = scalar_lea.vmem %s4, 64
      %v746 = vld [vmem:[%s745] sm:$0xff]
      %v747 = vld [vmem:[%s745 + $0x8] sm:$0xff]
      %v748 = vld [vmem:[%s745 + $0x10] sm:$0xff]
      %v749 = vld [vmem:[%s745 + $0x18] sm:$0xff]
      %v750 = vld [vmem:[%s745 + $0x20] sm:$0xff]
      %v751 = vld [vmem:[%s745 + $0x28] sm:$0xff]
      %v752 = vld [vmem:[%s745 + $0x30] sm:$0xff]
      %v753 = vld [vmem:[%s745 + $0x38] sm:$0xff]
      %755 = vset.pattern.permute.xlu0 0
      %756 = vperm.xlu0 %755, %v746
      %v757 = vpop.permute.xlu0 %756
      %760 = vset.pattern.permute.xlu0 0
      %761 = vperm.xlu0 %760, %v747
      %v762 = vpop.permute.xlu0 %761
      %765 = vset.pattern.permute.xlu0 0
      %766 = vperm.xlu0 %765, %v748
      %v767 = vpop.permute.xlu0 %766
      %770 = vset.pattern.permute.xlu0 0
      %771 = vperm.xlu0 %770, %v749
      %v772 = vpop.permute.xlu0 %771
      %775 = vset.pattern.permute.xlu0 0
      %776 = vperm.xlu0 %775, %v750
      %v777 = vpop.permute.xlu0 %776
      %780 = vset.pattern.permute.xlu0 0
      %781 = vperm.xlu0 %780, %v751
      %v782 = vpop.permute.xlu0 %781
      %785 = vset.pattern.permute.xlu0 0
      %786 = vperm.xlu0 %785, %v752
      %v787 = vpop.permute.xlu0 %786
      %790 = vset.pattern.permute.xlu0 0
      %791 = vperm.xlu0 %790, %v753
      %v792 = vpop.permute.xlu0 %791
      %v802 = vunpack.c.l.b16 %v737
      %v803 = vunpack.c.l.b16 %v738
      %v804 = vunpack.c.l.b16 %v739
      %v805 = vunpack.c.l.b16 %v740
      %v806 = vunpack.c.l.b16 %v741
      %v807 = vunpack.c.l.b16 %v742
      %v808 = vunpack.c.l.b16 %v743
      %v809 = vunpack.c.l.b16 %v744
      %v810 = vpack.c.b16 %v803, %v802
      %v811 = vpack.c.b16 %v805, %v804
      %v812 = vpack.c.b16 %v807, %v806
      %v813 = vpack.c.b16 %v809, %v808
      %v815 = vsel %vm564, %v810, 0
      %v818 = vsel %vm564, %v811, 0
      %v821 = vsel %vm564, %v812, 0
      %v824 = vsel %vm564, %v813, 0
      %826 = vmatprep.subr.bf16.mxu0 0
      %827 = vmatpush1.bf16.msra.mxu0 0
      %828 = vmatprep.subr.bf16.mxu0 0
      %829 = vmatpush1.bf16.msra.mxu0 0
      %830 = vmatprep.subr.bf16.mxu0 0
      %831 = vmatpush1.bf16.msra.mxu0 %v735
      %832 = vmatprep.subr.bf16.mxu0 0
      %833 = vmatpush1.bf16.msra.mxu0 %v734
      %834 = vmatprep.subr.bf16.mxu0 0
      %835 = vmatpush1.bf16.msra.mxu0 %v733
      %836 = vmatprep.subr.bf16.mxu0 0
      %837 = vmatpush1.bf16.msra.mxu0 %v732
      %838 = vmatprep.subr.bf16.mxu0 0
      %839 = vmatpush1.bf16.msra.mxu0 %v731
      %840 = vmatprep.subr.bf16.mxu0 0
      %841 = vmatpush1.bf16.msra.mxu0 %v730
      %842 = vmatprep.subr.bf16.mxu0 0
      %843 = vmatpush2.bf16.msra.mxu0 0
      %844 = vmatprep.subr.bf16.mxu0 0
      %845 = vmatpush2.bf16.msra.mxu0 0
      %846 = vmatprep.subr.bf16.mxu0 0
      %847 = vmatpush2.bf16.msra.mxu0 0
      %848 = vmatprep.subr.bf16.mxu0 0
      %849 = vmatpush2.bf16.msra.mxu0 0
      %850 = vmatprep.subr.bf16.mxu0 0
      %851 = vmatpush2.bf16.msra.mxu0 0
      %852 = vmatprep.subr.bf16.mxu0 0
      %853 = vmatpush2.bf16.msra.mxu0 0
      %854 = vmatprep.subr.bf16.mxu0 0
      %855 = vmatpush2.bf16.msra.mxu0 0
      %856 = vmatprep.subr.bf16.mxu0 0
      %857 = vmatpush2.bf16.msra.mxu0 0
      %858 = vmatprep.mubr.bf16.mxu0 0
      %859 = vmatmul.mubr.bf16.gmra.mxu0 %v815
      %v860 = vpop.f32.mrf.mxu0
      %v861 = vadd.f32 %v757, %v860
      %v862 = vpop.f32.mrf.mxu0
      %v863 = vpop.f32.mrf.mxu0
      %v864 = vadd.f32 %v762, %v863
      %v865 = vpop.f32.mrf.mxu0
      %866 = vmatprep.mubr.bf16.mxu0 0
      %867 = vmatmul.mubr.bf16.gmra.mxu0 %v818
      %v868 = vpop.f32.mrf.mxu0
      %v869 = vadd.f32 %v767, %v868
      %v870 = vpop.f32.mrf.mxu0
      %v871 = vpop.f32.mrf.mxu0
      %v872 = vadd.f32 %v772, %v871
      %v873 = vpop.f32.mrf.mxu0
      %874 = vmatprep.mubr.bf16.mxu0 0
      %875 = vmatmul.mubr.bf16.gmra.mxu0 %v821
      %v876 = vpop.f32.mrf.mxu0
      %v877 = vadd.f32 %v777, %v876
      %v878 = vpop.f32.mrf.mxu0
      %v879 = vpop.f32.mrf.mxu0
      %v880 = vadd.f32 %v782, %v879
      %v881 = vpop.f32.mrf.mxu0
      %882 = vmatprep.mubr.bf16.mxu0 0
      %883 = vmatmul.mubr.bf16.gmra.mxu0 %v824
      %v884 = vpop.f32.mrf.mxu0
      %v885 = vadd.f32 %v787, %v884
      %v886 = vpop.f32.mrf.mxu0
      %v887 = vpop.f32.mrf.mxu0
      %v888 = vadd.f32 %v792, %v887
      %v889 = vpop.f32.mrf.mxu0
      %890 = vdwg.mxu0
      %v891 = vxor.u32 %v877, 2147483648
      %v892 = vxor.u32 %v880, 2147483648
      %v893 = vxor.u32 %v885, 2147483648
      %v894 = vxor.u32 %v888, 2147483648
      %v895 = vmul.f32 %v891, 1.442695
      %v896 = vpow.pop %v895
      %v897 = vmul.f32 %v892, 1.442695
      %v898 = vpow.pop %v897
      %v899 = vmul.f32 %v893, 1.442695
      %v900 = vpow.pop %v899
      %v901 = vmul.f32 %v894, 1.442695
      %v902 = vpow.pop %v901
      %v903 = vadd.f32 %v896, 1.0
      %v904 = vadd.f32 %v898, 1.0
      %v905 = vadd.f32 %v900, 1.0
      %v906 = vadd.f32 %v902, 1.0
      %v907 = vrcp.pop %v903
      %v908 = vmul.f32 1.0, %v907
      %v909 = vrcp.pop %v904
      %v910 = vmul.f32 1.0, %v909
      %v911 = vrcp.pop %v905
      %v912 = vmul.f32 1.0, %v911
      %v913 = vrcp.pop %v906
      %v914 = vmul.f32 1.0, %v913
      %v915 = vmul.f32 %v861, %v908
      %v916 = vmul.f32 %v864, %v910
      %v917 = vmul.f32 %v869, %v912
      %v918 = vmul.f32 %v872, %v914
      %v919 = vadd.f32 %v915, %v674
      %v920 = vadd.f32 %v916, %v675
      %v921 = vadd.f32 %v917, %v676
      %v922 = vadd.f32 %v918, %v677
      %v923 = vmul.f32 %v919, 0.70710677
      %v924 = vmul.f32 %v920, 0.70710677
      %v925 = vmul.f32 %v921, 0.70710677
      %v926 = vmul.f32 %v922, 0.70710677
      %v927 = vld [vmem:[%s5] sm:$0xf]
      %v928 = vld [vmem:[%s5 + $0x4] sm:$0x3]
      %v929 = vpack.c.bf16 %v924, %v923
      %v930 = vpack.c.bf16 %v926, %v925
      %v931 = vld [vmem:[%s6] sm:$0xff]
      %v932 = vld [vmem:[%s6 + $0x8] sm:$0xf]
      %934 = vset.pattern.permute.xlu0 0
      %935 = vperm.xlu0 %934, %v931
      %v936 = vpop.permute.xlu0 %935
      %939 = vset.pattern.permute.xlu0 0
      %940 = vperm.xlu0 %939, %v932
      %v941 = vpop.permute.xlu0 %940
      %v945 = vunpack.c.l.b16 %v927
      %v946 = vunpack.c.l.b16 %v928
      %v947 = vpack.c.b16 %v946, %v945
      %v949 = vsel %vm344, %v947, 0
      %951 = vmatprep.subr.bf16.mxu0 0
      %952 = vmatpush1.bf16.msra.mxu0 0
      %953 = vmatprep.subr.bf16.mxu0 0
      %954 = vmatpush1.bf16.msra.mxu0 0
      %955 = vmatprep.subr.bf16.mxu0 0
      %956 = vmatpush1.bf16.msra.mxu0 0
      %957 = vmatprep.subr.bf16.mxu0 0
      %958 = vmatpush1.bf16.msra.mxu0 0
      %959 = vmatprep.subr.bf16.mxu0 0
      %960 = vmatpush1.bf16.msra.mxu0 0
      %961 = vmatprep.subr.bf16.mxu0 0
      %962 = vmatpush1.bf16.msra.mxu0 0
      %963 = vmatprep.subr.bf16.mxu0 0
      %964 = vmatpush1.bf16.msra.mxu0 %v930
      %965 = vmatprep.subr.bf16.mxu0 0
      %966 = vmatpush1.bf16.msra.mxu0 %v929
      %967 = vmatprep.subr.bf16.mxu0 0
      %968 = vmatpush2.bf16.msra.mxu0 0
      %969 = vmatprep.subr.bf16.mxu0 0
      %970 = vmatpush2.bf16.msra.mxu0 0
      %971 = vmatprep.subr.bf16.mxu0 0
      %972 = vmatpush2.bf16.msra.mxu0 0
      %973 = vmatprep.subr.bf16.mxu0 0
      %974 = vmatpush2.bf16.msra.mxu0 0
      %975 = vmatprep.subr.bf16.mxu0 0
      %976 = vmatpush2.bf16.msra.mxu0 0
      %977 = vmatprep.subr.bf16.mxu0 0
      %978 = vmatpush2.bf16.msra.mxu0 0
      %979 = vmatprep.subr.bf16.mxu0 0
      %980 = vmatpush2.bf16.msra.mxu0 0
      %981 = vmatprep.subr.bf16.mxu0 0
      %982 = vmatpush2.bf16.msra.mxu0 0
      %983 = vmatprep.mubr.bf16.mxu0 0
      %984 = vmatmul.mubr.bf16.gmra.mxu0 %v949
      %v985 = vpop.f32.mrf.mxu0
      %v986 = vadd.f32 %v936, %v985
      %v987 = vpop.f32.mrf.mxu0
      %v988 = vpop.f32.mrf.mxu0
      %v989 = vadd.f32 %v941, %v988
      %v990 = vpop.f32.mrf.mxu0
      %991 = vdwg.mxu0
      %vm992 = vcmask 64512
      %993 = vst.msk [vmem:[%s298] sm:$0xff] %vm992, %v986
      %vm994 = vcmask 60416
      %995 = vst.msk [vmem:[%s298 + $0x8] sm:$0xf] %vm994, %v989
      %p996 = scmp.lt.s32.totalorder %s18, 1
      %s997 = scalar_select %p996, %s18, 1
      %s998 = smul.addr %s997, 2
      %s999 = smul.addr %s998, 8
      %s1000 = scalar_lea.vmem %s7, %s999
      // Predicated region
      $region49: #{convs2s_a2m_forward.7} parent=47 // pred_check
        %p1001 = pneg %p193
      $region50: #{convs2s_a2m_forward.7} parent=47 // pred_check_branch
        %1003 = sbr.rel (%p1001) target = $region52
      $region51: #{convs2s_a2m_forward.7} parent=47 // pred_region
        _
      $region52: #{convs2s_a2m_forward.7} parent=47 // pred_fallthru
        _
    $region48: #{convs2s_a2m_forward.7} parent=5 // pred_fallthru
      _
    %p1004 = scmp.le.s32.totalorder 2, %s13
    // Predicated region
    $region53: #{convs2s_a2m_forward.7} parent=5 // pred_check
      %p1005 = pneg %p1004
    $region54: #{convs2s_a2m_forward.7} parent=5 // pred_check_branch
      %1007 = sbr.rel (%p1005) target = $region56
    $region55: #{convs2s_a2m_forward.7} parent=5 // pred_region
      %s1008 = ssub.s32 %s13, 2
      // Predicated region
      $region57: #{convs2s_a2m_forward.7} parent=55 // pred_check
        %p1009 = pneg %p199
      $region58: #{convs2s_a2m_forward.7} parent=55 // pred_check_branch
        %1011 = sbr.rel (%p1009) target = $region60
      $region59: #{convs2s_a2m_forward.7} parent=55 // pred_region
        %p1012 = scmp.lt.s32.totalorder %s19, 1
        %s1013 = scalar_select %p1012, %s19, 1
        %s1014 = smul.addr %s1013, 2
        %s1015 = smul.addr %s1014, 8
        %s1016 = scalar_lea.vmem %s7, %s1015
      $region60: #{convs2s_a2m_forward.7} parent=55 // pred_fallthru
        _
    $region56: #{convs2s_a2m_forward.7} parent=5 // pred_fallthru
      _
  $region6: #{convs2s_a2m_forward.7} parent=0 // loop_footer
    %s17 = sadd.s32 1, %s13
  $region7: #{convs2s_a2m_forward.7} parent=0 // loop_footer_branch
    %12 = sbr.rel target = $region3
  $region8: #{convs2s_a2m_forward.7} parent=0 // loop_exit
    _

// kernel: convs2s_a2m_forward.4
$region0: #{convs2s_a2m_forward.4}
  #allocation0 [shape = 'u32[]', space=smem, size = 0x4, offset = 0x4, fixed_abs, tag = 'smem constant byte address 0x4 - core index']
  #allocation1 [shape = 'u32[144,128]{1,0:T(1,128)}', space=vmem, size = 0x12000, scoped, tag = 'internal scratch']
  #allocation2 [shape = 'f32[32,124]{1,0:T(8,128)}', space=vmem, size = 0x4000, scoped, tag = 'scratch operand']
  %s0 = inlined_call_operand.vmem [shape: f32[2,12,16], index: 0, kind: input, shape index: {}]
  %s1 = inlined_call_operand.vmem [shape: f32[2,32,1], index: 1, kind: input, shape index: {}]
  %s2 = inlined_call_operand.vmem [shape: bf16[32,12], index: 2, kind: input, shape index: {}]
  %s3 = inlined_call_operand.vmem [shape: bf16[4,64,160], index: 3, kind: input, shape index: {}]
  %s4 = inlined_call_operand.vmem [shape: f32[4,64,1], index: 4, kind: input, shape index: {}]
  %s5 = inlined_call_operand.vmem [shape: bf16[32,32], index: 5, kind: input, shape index: {}]
  %s6 = inlined_call_operand.vmem [shape: f32[32,1], index: 6, kind: input, shape index: {}]
  %s7 = inlined_call_operand.vmem [shape: f32[2,32,16], index: 7, kind: output, shape index: {}]
  %s8 = sld [smem:[#allocation0]]
  $region61: #{convs2s_a2m_forward.4} parent=0
    _
  %s10 = ssub.s32 1, %s8
  %s11 = scalar_select 0, %s10, %s8
  loop: start=0, step=1, limit=4
  $region2: #{convs2s_a2m_forward.4} parent=0 // loop_pre_header
    _
  $region3: #{convs2s_a2m_forward.4} parent=0 // loop_header
    %s13 = sphi 0, %s17
    %p14 = scmp.ge.s32.totalorder %s13, 4
    %s23 = sphi 0, %s25
    %s26 = sphi 0, %s23
    %s27 = sphi 0, %s26
    %s43 = sphi 0, %s27
    %s49 = sphi 0, %s51
    %s52 = sphi 0, %s49
    %s53 = sphi 0, %s52
    %s69 = sphi 0, %s53
    %s73 = sphi 0, %s73
    %s75 = sphi 0, %s73
    %s76 = sphi 0, %s75
    %s90 = sphi 0, %s76
    %s94 = sphi 0, %s94
    %s96 = sphi 0, %s94
    %s97 = sphi 0, %s96
    %s111 = sphi 0, %s97
    %s115 = sphi 0, %s115
    %s117 = sphi 0, %s115
    %s118 = sphi 0, %s117
    %s132 = sphi 0, %s118
    %s136 = sphi 0, %s136
    %s138 = sphi 0, %s136
    %s139 = sphi 0, %s138
    %s153 = sphi 0, %s139
    %s157 = sphi 0, %s157
    %s159 = sphi 0, %s157
    %s160 = sphi 0, %s159
    %s174 = sphi 0, %s160
    %s180 = sphi 0, %s182
    %s183 = sphi 0, %s180
    %s184 = sphi 0, %s183
    %s200 = sphi 0, %s184
  $region4: #{convs2s_a2m_forward.4} parent=0 // loop_header_branch
    %16 = sbr.rel (%p14) target = $region8
  $region5: #{convs2s_a2m_forward.4} parent=0 // loop_body
    %s18 = ssub.s32 %s13, 1
    %s19 = ssub.s32 %s13, 2
    %s20 = sadd.s32 %s13, 1
    %s21 = ssub.s32 %s13, %s20
    %p22 = scmp.eq.s32.totalorder %s21, 0
    %s24 = sadd.s32 %s23, 1
    %s25 = scalar_select %p22, %s23, %s24
    %p28 = pneg %p22
    %p29 = scmp.eq.s32.totalorder %s13, 1
    %p30 = por %p28, %p29
    %p31 = scmp.ne.s32.totalorder %s23, %s26
    %p32 = scmp.eq.s32.totalorder %s13, 0
    %p33 = por %p31, %p32
    %p34 = scmp.ne.s32.totalorder %s23, %s26
    %p35 = scmp.eq.s32.totalorder %s18, 1
    %p36 = por %p34, %p35
    %p37 = scmp.ne.s32.totalorder %s26, %s27
    %p38 = scmp.eq.s32.totalorder %s18, 0
    %p39 = por %p37, %p38
    %p40 = scmp.ne.s32.totalorder %s26, %s27
    %p41 = scmp.eq.s32.totalorder %s19, 1
    %p42 = por %p40, %p41
    %p44 = scmp.ne.s32.totalorder %s27, %s43
    %p45 = scmp.eq.s32.totalorder %s19, 0
    %p46 = por %p44, %p45
    %s47 = ssub.s32 %s13, %s20
    %p48 = scmp.eq.s32.totalorder %s47, 0
    %s50 = sadd.s32 %s49, 1
    %s51 = scalar_select %p48, %s49, %s50
    %p54 = pneg %p48
    %p55 = scmp.eq.s32.totalorder %s13, 1
    %p56 = por %p54, %p55
    %p57 = scmp.ne.s32.totalorder %s49, %s52
    %p58 = scmp.eq.s32.totalorder %s13, 0
    %p59 = por %p57, %p58
    %p60 = scmp.ne.s32.totalorder %s49, %s52
    %p61 = scmp.eq.s32.totalorder %s18, 1
    %p62 = por %p60, %p61
    %p63 = scmp.ne.s32.totalorder %s52, %s53
    %p64 = scmp.eq.s32.totalorder %s18, 0
    %p65 = por %p63, %p64
    %p66 = scmp.ne.s32.totalorder %s52, %s53
    %p67 = scmp.eq.s32.totalorder %s19, 1
    %p68 = por %p66, %p67
    %p70 = scmp.ne.s32.totalorder %s53, %s69
    %p71 = scmp.eq.s32.totalorder %s19, 0
    %p72 = por %p70, %p71
    %s74 = sadd.s32 %s73, 1
    %p77 = scmp.eq.s32.totalorder %s13, 1
    %p78 = scmp.ne.s32.totalorder %s73, %s75
    %p79 = scmp.eq.s32.totalorder %s13, 0
    %p80 = por %p78, %p79
    %p81 = scmp.ne.s32.totalorder %s73, %s75
    %p82 = scmp.eq.s32.totalorder %s18, 1
    %p83 = por %p81, %p82
    %p84 = scmp.ne.s32.totalorder %s75, %s76
    %p85 = scmp.eq.s32.totalorder %s18, 0
    %p86 = por %p84, %p85
    %p87 = scmp.ne.s32.totalorder %s75, %s76
    %p88 = scmp.eq.s32.totalorder %s19, 1
    %p89 = por %p87, %p88
    %p91 = scmp.ne.s32.totalorder %s76, %s90
    %p92 = scmp.eq.s32.totalorder %s19, 0
    %p93 = por %p91, %p92
    %s95 = sadd.s32 %s94, 1
    %p98 = scmp.eq.s32.totalorder %s13, 1
    %p99 = scmp.ne.s32.totalorder %s94, %s96
    %p100 = scmp.eq.s32.totalorder %s13, 0
    %p101 = por %p99, %p100
    %p102 = scmp.ne.s32.totalorder %s94, %s96
    %p103 = scmp.eq.s32.totalorder %s18, 1
    %p104 = por %p102, %p103
    %p105 = scmp.ne.s32.totalorder %s96, %s97
    %p106 = scmp.eq.s32.totalorder %s18, 0
    %p107 = por %p105, %p106
    %p108 = scmp.ne.s32.totalorder %s96, %s97
    %p109 = scmp.eq.s32.totalorder %s19, 1
    %p110 = por %p108, %p109
    %p112 = scmp.ne.s32.totalorder %s97, %s111
    %p113 = scmp.eq.s32.totalorder %s19, 0
    %p114 = por %p112, %p113
    %s116 = sadd.s32 %s115, 1
    %p119 = scmp.eq.s32.totalorder %s13, 1
    %p120 = scmp.ne.s32.totalorder %s115, %s117
    %p121 = scmp.eq.s32.totalorder %s13, 0
    %p122 = por %p120, %p121
    %p123 = scmp.ne.s32.totalorder %s115, %s117
    %p124 = scmp.eq.s32.totalorder %s18, 1
    %p125 = por %p123, %p124
    %p126 = scmp.ne.s32.totalorder %s117, %s118
    %p127 = scmp.eq.s32.totalorder %s18, 0
    %p128 = por %p126, %p127
    %p129 = scmp.ne.s32.totalorder %s117, %s118
    %p130 = scmp.eq.s32.totalorder %s19, 1
    %p131 = por %p129, %p130
    %p133 = scmp.ne.s32.totalorder %s118, %s132
    %p134 = scmp.eq.s32.totalorder %s19, 0
    %p135 = por %p133, %p134
    %s137 = sadd.s32 %s136, 1
    %p140 = scmp.eq.s32.totalorder %s13, 1
    %p141 = scmp.ne.s32.totalorder %s136, %s138
    %p142 = scmp.eq.s32.totalorder %s13, 0
    %p143 = por %p141, %p142
    %p144 = scmp.ne.s32.totalorder %s136, %s138
    %p145 = scmp.eq.s32.totalorder %s18, 1
    %p146 = por %p144, %p145
    %p147 = scmp.ne.s32.totalorder %s138, %s139
    %p148 = scmp.eq.s32.totalorder %s18, 0
    %p149 = por %p147, %p148
    %p150 = scmp.ne.s32.totalorder %s138, %s139
    %p151 = scmp.eq.s32.totalorder %s19, 1
    %p152 = por %p150, %p151
    %p154 = scmp.ne.s32.totalorder %s139, %s153
    %p155 = scmp.eq.s32.totalorder %s19, 0
    %p156 = por %p154, %p155
    %s158 = sadd.s32 %s157, 1
    %p161 = scmp.eq.s32.totalorder %s13, 1
    %p162 = scmp.ne.s32.totalorder %s157, %s159
    %p163 = scmp.eq.s32.totalorder %s13, 0
    %p164 = por %p162, %p163
    %p165 = scmp.ne.s32.totalorder %s157, %s159
    %p166 = scmp.eq.s32.totalorder %s18, 1
    %p167 = por %p165, %p166
    %p168 = scmp.ne.s32.totalorder %s159, %s160
    %p169 = scmp.eq.s32.totalorder %s18, 0
    %p170 = por %p168, %p169
    %p171 = scmp.ne.s32.totalorder %s159, %s160
    %p172 = scmp.eq.s32.totalorder %s19, 1
    %p173 = por %p171, %p172
    %p175 = scmp.ne.s32.totalorder %s160, %s174
    %p176 = scmp.eq.s32.totalorder %s19, 0
    %p177 = por %p175, %p176
    %s178 = ssub.s32 %s13, %s20
    %p179 = scmp.eq.s32.totalorder %s178, 0
    %s181 = sadd.s32 %s180, 1
    %s182 = scalar_select %p179, %s180, %s181
    %p185 = pneg %p179
    %p186 = scmp.eq.s32.totalorder %s13, 1
    %p187 = por %p185, %p186
    %p188 = scmp.ne.s32.totalorder %s180, %s183
    %p189 = scmp.eq.s32.totalorder %s13, 0
    %p190 = por %p188, %p189
    %p191 = scmp.ne.s32.totalorder %s180, %s183
    %p192 = scmp.eq.s32.totalorder %s18, 1
    %p193 = por %p191, %p192
    %p194 = scmp.ne.s32.totalorder %s183, %s184
    %p195 = scmp.eq.s32.totalorder %s18, 0
    %p196 = por %p194, %p195
    %p197 = scmp.ne.s32.totalorder %s183, %s184
    %p198 = scmp.eq.s32.totalorder %s19, 1
    %p199 = por %p197, %p198
    %p201 = scmp.ne.s32.totalorder %s184, %s200
    %p202 = scmp.eq.s32.totalorder %s19, 0
    %p203 = por %p201, %p202
    %p204 = scmp.le.s32.totalorder 1, %s13
    %p205 = scmp.lt.s32.totalorder %s13, 3
    %p206 = pnand %p204, %p205
    %p207 = pneg %p206
    // Predicated region
    $region9: #{convs2s_a2m_forward.4} parent=5 // pred_check
      _
    $region10: #{convs2s_a2m_forward.4} parent=5 // pred_check_branch
      %209 = sbr.rel (%p206) target = $region12
    $region11: #{convs2s_a2m_forward.4} parent=5 // pred_region
      %s210 = ssub.s32 %s13, 1
      // Predicated region
      $region13: #{convs2s_a2m_forward.4} parent=11 // pred_check
        %p211 = pneg %p86
      $region14: #{convs2s_a2m_forward.4} parent=11 // pred_check_branch
        %213 = sbr.rel (%p211) target = $region16
      $region15: #{convs2s_a2m_forward.4} parent=11 // pred_region
        _
      $region16: #{convs2s_a2m_forward.4} parent=11 // pred_fallthru
        _
      // Predicated region
      $region17: #{convs2s_a2m_forward.4} parent=11 // pred_check
        %p214 = pneg %p107
      $region18: #{convs2s_a2m_forward.4} parent=11 // pred_check_branch
        %216 = sbr.rel (%p214) target = $region20
      $region19: #{convs2s_a2m_forward.4} parent=11 // pred_region
        _
      $region20: #{convs2s_a2m_forward.4} parent=11 // pred_fallthru
        _
      // Predicated region
      $region21: #{convs2s_a2m_forward.4} parent=11 // pred_check
        %p217 = pneg %p128
      $region22: #{convs2s_a2m_forward.4} parent=11 // pred_check_branch
        %219 = sbr.rel (%p217) target = $region24
      $region23: #{convs2s_a2m_forward.4} parent=11 // pred_region
        _
      $region24: #{convs2s_a2m_forward.4} parent=11 // pred_fallthru
        _
      // Predicated region
      $region25: #{convs2s_a2m_forward.4} parent=11 // pred_check
        %p220 = pneg %p149
      $region26: #{convs2s_a2m_forward.4} parent=11 // pred_check_branch
        %222 = sbr.rel (%p220) target = $region28
      $region27: #{convs2s_a2m_forward.4} parent=11 // pred_region
        _
      $region28: #{convs2s_a2m_forward.4} parent=11 // pred_fallthru
        _
      // Predicated region
      $region29: #{convs2s_a2m_forward.4} parent=11 // pred_check
        %p223 = pneg %p170
      $region30: #{convs2s_a2m_forward.4} parent=11 // pred_check_branch
        %225 = sbr.rel (%p223) target = $region32
      $region31: #{convs2s_a2m_forward.4} parent=11 // pred_region
        _
      $region32: #{convs2s_a2m_forward.4} parent=11 // pred_fallthru
        _
    $region12: #{convs2s_a2m_forward.4} parent=5 // pred_fallthru
      _
    %p226 = scmp.lt.s32.totalorder %s13, 2
    // Predicated region
    $region33: #{convs2s_a2m_forward.4} parent=5 // pred_check
      %p227 = pneg %p226
    $region34: #{convs2s_a2m_forward.4} parent=5 // pred_check_branch
      %229 = sbr.rel (%p227) target = $region36
    $region35: #{convs2s_a2m_forward.4} parent=5 // pred_region
      // Predicated region
      $region37: #{convs2s_a2m_forward.4} parent=35 // pred_check
        %p230 = pneg %p33
      $region38: #{convs2s_a2m_forward.4} parent=35 // pred_check_branch
        %232 = sbr.rel (%p230) target = $region40
      $region39: #{convs2s_a2m_forward.4} parent=35 // pred_region
        %p233 = scmp.lt.s32.totalorder %s13, 1
        %s234 = scalar_select %p233, %s13, 1
        %s235 = smul.addr %s234, 2
        %s236 = smul.addr %s235, 8
        %s237 = scalar_lea.vmem %s0, %s236
      $region40: #{convs2s_a2m_forward.4} parent=35 // pred_fallthru
        _
      // Predicated region
      $region41: #{convs2s_a2m_forward.4} parent=35 // pred_check
        %p238 = pneg %p59
      $region42: #{convs2s_a2m_forward.4} parent=35 // pred_check_branch
        %240 = sbr.rel (%p238) target = $region44
      $region43: #{convs2s_a2m_forward.4} parent=35 // pred_region
        %p241 = scmp.lt.s32.totalorder %s13, 1
        %s242 = scalar_select %p241, %s13, 1
        %s243 = smul.addr %s242, 4
        %s244 = smul.addr %s243, 8
        %s245 = scalar_lea.vmem %s1, %s244
      $region44: #{convs2s_a2m_forward.4} parent=35 // pred_fallthru
        _
    $region36: #{convs2s_a2m_forward.4} parent=5 // pred_fallthru
      _
    %p246 = scmp.le.s32.totalorder 1, %s13
    %p247 = scmp.lt.s32.totalorder %s13, 3
    %p248 = pnand %p246, %p247
    %p249 = pneg %p248
    // Predicated region
    $region45: #{convs2s_a2m_forward.4} parent=5 // pred_check
      _
    $region46: #{convs2s_a2m_forward.4} parent=5 // pred_check_branch
      %251 = sbr.rel (%p248) target = $region48
    $region47: #{convs2s_a2m_forward.4} parent=5 // pred_region
      %s252 = ssub.s32 %s13, 1
      %p253 = scmp.lt.s32.totalorder %s18, 1
      %s254 = scalar_select %p253, %s18, 1
      %s255 = smul.addr %s254, 2
      %s256 = smul.addr %s255, 8
      %s257 = scalar_lea.vmem %s0, %s256
      %p258 = pneg %p39
      %p259 = pneg %p36
      %p260 = scmp.lt.s32.totalorder %s18, 1
      %s261 = scalar_select %p260, %s18, 1
      %s262 = smul.addr %s261, 4
      %s263 = smul.addr %s262, 8
      %s264 = scalar_lea.vmem %s1, %s263
      %p265 = pneg %p65
      %p266 = pneg %p62
      %p267 = pneg %p86
      %p268 = pneg %p83
      %p269 = pneg %p107
      %p270 = pneg %p104
      %p271 = pneg %p128
      %p272 = pneg %p125
      %p273 = pneg %p149
      %p274 = pneg %p146
      %p275 = pneg %p170
      %p276 = pneg %p167
      %p277 = pneg %p196
      %p278 = pneg %p193
      %p279 = scmp.lt.s32.totalorder %s18, 1
      %s280 = scalar_select %p279, %s18, 1
      %s281 = smul.addr %s280, 4
      %s282 = smul.addr %s281, 8
      %s283 = scalar_lea.vmem %s7, %s282
      %p284 = scmp.lt.s32.totalorder %s18, 1
      %s285 = scalar_select %p284, %s18, 1
      %s286 = smul.addr %s285, 2
      %s287 = smul.addr %s286, 8
      %s288 = scalar_lea.vmem %s0, %s287
      %p289 = scmp.lt.s32.totalorder %s18, 1
      %s290 = scalar_select %p289, %s18, 1
      %s291 = smul.addr %s290, 4
      %s292 = smul.addr %s291, 8
      %s293 = scalar_lea.vmem %s1, %s292
      %p294 = scmp.lt.s32.totalorder %s18, 1
      %s295 = scalar_select %p294, %s18, 1
      %s296 = smul.addr %s295, 4
      %s297 = smul.addr %s296, 8
      %s298 = scalar_lea.vmem %s7, %s297
      %v300 = vld [vmem:[%s2] sm:$0xf]
      %v301 = vld [vmem:[%s2 + $0x4] sm:$0xf]
      %v302 = vld [vmem:[%s2 + $0x8] sm:$0xf]
      %v303 = vld [vmem:[%s2 + $0xc] sm:$0xf]
      %v304 = vld [vmem:[%s288] sm:$0xff]
      %v305 = vld [vmem:[%s288 + $0x8] sm:$0xf]
      %v306 = vpack.c.bf16 %v305, %v304
      %v307 = vld [vmem:[%s293] sm:$0xff]
      %v308 = vld [vmem:[%s293 + $0x8] sm:$0xff]
      %v309 = vld [vmem:[%s293 + $0x10] sm:$0xff]
      %v310 = vld [vmem:[%s293 + $0x18] sm:$0xff]
      %312 = vset.pattern.permute.xlu0 0
      %313 = vperm.xlu0 %312, %v307
      %v314 = vpop.permute.xlu0 %313
      %317 = vset.pattern.permute.xlu0 0
      %318 = vperm.xlu0 %317, %v308
      %v319 = vpop.permute.xlu0 %318
      %322 = vset.pattern.permute.xlu0 0
      %323 = vperm.xlu0 %322, %v309
      %v324 = vpop.permute.xlu0 %323
      %327 = vset.pattern.permute.xlu0 0
      %328 = vperm.xlu0 %327, %v310
      %v329 = vpop.permute.xlu0 %328
      %v335 = vunpack.c.l.b16 %v300
      %v336 = vunpack.c.l.b16 %v301
      %v337 = vunpack.c.l.b16 %v302
      %v338 = vunpack.c.l.b16 %v303
      %v339 = vpack.c.b16 %v336, %v335
      %v340 = vpack.c.b16 %v338, %v337
      %vm341 = vcmask 97280
      %v343 = vsel %vm341, %v339, 0
      %v346 = vsel %vm341, %v340, 0
      %vm348 = vcmask 1045504
      %v350 = vsel %vm348, %v306, 0
      %352 = vmatprep.subr.bf16.mxu0 0
      %353 = vmatpush1.bf16.msra.mxu0 0
      %354 = vmatprep.subr.bf16.mxu0 0
      %355 = vmatpush1.bf16.msra.mxu0 0
      %356 = vmatprep.subr.bf16.mxu0 0
      %357 = vmatpush1.bf16.msra.mxu0 0
      %358 = vmatprep.subr.bf16.mxu0 0
      %359 = vmatpush1.bf16.msra.mxu0 0
      %360 = vmatprep.subr.bf16.mxu0 0
      %361 = vmatpush1.bf16.msra.mxu0 0
      %362 = vmatprep.subr.bf16.mxu0 0
      %363 = vmatpush1.bf16.msra.mxu0 0
      %364 = vmatprep.subr.bf16.mxu0 0
      %365 = vmatpush1.bf16.msra.mxu0 0
      %366 = vmatprep.subr.bf16.mxu0 0
      %367 = vmatpush1.bf16.msra.mxu0 %v350
      %368 = vmatprep.subr.bf16.mxu0 0
      %369 = vmatpush2.bf16.msra.mxu0 0
      %370 = vmatprep.subr.bf16.mxu0 0
      %371 = vmatpush2.bf16.msra.mxu0 0
      %372 = vmatprep.subr.bf16.mxu0 0
      %373 = vmatpush2.bf16.msra.mxu0 0
      %374 = vmatprep.subr.bf16.mxu0 0
      %375 = vmatpush2.bf16.msra.mxu0 0
      %376 = vmatprep.subr.bf16.mxu0 0
      %377 = vmatpush2.bf16.msra.mxu0 0
      %378 = vmatprep.subr.bf16.mxu0 0
      %379 = vmatpush2.bf16.msra.mxu0 0
      %380 = vmatprep.subr.bf16.mxu0 0
      %381 = vmatpush2.bf16.msra.mxu0 0
      %382 = vmatprep.subr.bf16.mxu0 0
      %383 = vmatpush2.bf16.msra.mxu0 0
      %384 = vmatprep.mubr.bf16.mxu0 0
      %385 = vmatmul.mubr.bf16.gmra.mxu0 %v343
      %v386 = vpop.f32.mrf.mxu0
      %v387 = vadd.f32 %v314, %v386
      %v388 = vpop.f32.mrf.mxu0
      %v389 = vpop.f32.mrf.mxu0
      %v390 = vadd.f32 %v319, %v389
      %v391 = vpop.f32.mrf.mxu0
      %392 = vmatprep.mubr.bf16.mxu0 0
      %393 = vmatmul.mubr.bf16.gmra.mxu0 %v346
      %v394 = vpop.f32.mrf.mxu0
      %v395 = vadd.f32 %v324, %v394
      %v396 = vpop.f32.mrf.mxu0
      %v397 = vpop.f32.mrf.mxu0
      %v398 = vadd.f32 %v329, %v397
      %v399 = vpop.f32.mrf.mxu0
      %400 = vdwg.mxu0
      %vm401 = vcmask 1014784
      %402 = vst.msk [vmem:[#allocation2] sm:$0xff] %vm401, 0.0
      %403 = vst.msk [vmem:[#allocation2 + $0x8] sm:$0xff] %vm401, 0.0
      %404 = vst.msk [vmem:[#allocation2 + $0x10] sm:$0xff] %vm401, 0.0
      %405 = vst.msk [vmem:[#allocation2 + $0x18] sm:$0xff] %vm401, 0.0
      %410 = vrot.lane.b32.xlu0 %v387, 54
      %v411 = vpop.permute.xlu0 %410
      %412 = vrot.lane.b32.xlu0 %v390, 54
      %v413 = vpop.permute.xlu0 %412
      %414 = vrot.lane.b32.xlu0 %v395, 54
      %v415 = vpop.permute.xlu0 %414
      %416 = vrot.lane.b32.xlu0 %v398, 54
      %v417 = vpop.permute.xlu0 %416
      %vm422 = vcmask 572848
      %423 = vst.msk [vmem:[#allocation2] sm:$0xff] %vm422, %v411
      %424 = vst.msk [vmem:[#allocation2 + $0x8] sm:$0xff] %vm422, %v413
      %425 = vst.msk [vmem:[#allocation2 + $0x10] sm:$0xff] %vm422, %v415
      %426 = vst.msk [vmem:[#allocation2 + $0x18] sm:$0xff] %vm422, %v417
      %v427 = vld [vmem:[#allocation2] sm:$0xff]
      %v428 = vld [vmem:[#allocation2 + $0x8] sm:$0xff]
      %v429 = vld [vmem:[#allocation2 + $0x10] sm:$0xff]
      %v430 = vld [vmem:[#allocation2 + $0x18] sm:$0xff]
      %435 = vrot.lane.b32.xlu0 %v427, 127
      %v436 = vpop.permute.xlu0 %435
      %437 = vrot.lane.b32.xlu0 %v428, 127
      %v438 = vpop.permute.xlu0 %437
      %439 = vrot.lane.b32.xlu0 %v429, 127
      %v440 = vpop.permute.xlu0 %439
      %441 = vrot.lane.b32.xlu0 %v430, 127
      %v442 = vpop.permute.xlu0 %441
      %447 = vrot.lane.b32.xlu0 %v427, 126
      %v448 = vpop.permute.xlu0 %447
      %449 = vrot.lane.b32.xlu0 %v428, 126
      %v450 = vpop.permute.xlu0 %449
      %451 = vrot.lane.b32.xlu0 %v429, 126
      %v452 = vpop.permute.xlu0 %451
      %453 = vrot.lane.b32.xlu0 %v430, 126
      %v454 = vpop.permute.xlu0 %453
      %459 = vrot.lane.b32.xlu0 %v427, 125
      %v460 = vpop.permute.xlu0 %459
      %461 = vrot.lane.b32.xlu0 %v428, 125
      %v462 = vpop.permute.xlu0 %461
      %463 = vrot.lane.b32.xlu0 %v429, 125
      %v464 = vpop.permute.xlu0 %463
      %465 = vrot.lane.b32.xlu0 %v430, 125
      %v466 = vpop.permute.xlu0 %465
      %471 = vrot.lane.b32.xlu0 %v427, 124
      %v472 = vpop.permute.xlu0 %471
      %473 = vrot.lane.b32.xlu0 %v428, 124
      %v474 = vpop.permute.xlu0 %473
      %475 = vrot.lane.b32.xlu0 %v429, 124
      %v476 = vpop.permute.xlu0 %475
      %477 = vrot.lane.b32.xlu0 %v430, 124
      %v478 = vpop.permute.xlu0 %477
      %v483 = vpack.c.bf16 %v428, %v427
      %v484 = vpack.c.bf16 %v430, %v429
      %v485 = vpack.c.bf16 %v438, %v436
      %v486 = vpack.c.bf16 %v442, %v440
      %v487 = vpack.c.bf16 %v450, %v448
      %v488 = vpack.c.bf16 %v454, %v452
      %v489 = vpack.c.bf16 %v462, %v460
      %v490 = vpack.c.bf16 %v466, %v464
      %v491 = vpack.c.bf16 %v474, %v472
      %v492 = vpack.c.bf16 %v478, %v476
      %v493 = vld [vmem:[%s3] sm:$0xff]
      %v494 = vld [vmem:[%s3 + $0x8] sm:$0xff]
      %v495 = vld [vmem:[%s3 + $0x10] sm:$0xff]
      %v496 = vld [vmem:[%s3 + $0x18] sm:$0xff]
      %v497 = vld [vmem:[%s3 + $0x20] sm:$0xff]
      %v498 = vld [vmem:[%s3 + $0x28] sm:$0xff]
      %v499 = vld [vmem:[%s3 + $0x30] sm:$0xff]
      %v500 = vld [vmem:[%s3 + $0x38] sm:$0xff]
      %v501 = vld [vmem:[%s4] sm:$0xff]
      %v502 = vld [vmem:[%s4 + $0x8] sm:$0xff]
      %v503 = vld [vmem:[%s4 + $0x10] sm:$0xff]
      %v504 = vld [vmem:[%s4 + $0x18] sm:$0xff]
      %v505 = vld [vmem:[%s4 + $0x20] sm:$0xff]
      %v506 = vld [vmem:[%s4 + $0x28] sm:$0xff]
      %v507 = vld [vmem:[%s4 + $0x30] sm:$0xff]
      %v508 = vld [vmem:[%s4 + $0x38] sm:$0xff]
      %510 = vset.pattern.permute.xlu0 0
      %511 = vperm.xlu0 %510, %v501
      %v512 = vpop.permute.xlu0 %511
      %515 = vset.pattern.permute.xlu0 0
      %516 = vperm.xlu0 %515, %v502
      %v517 = vpop.permute.xlu0 %516
      %520 = vset.pattern.permute.xlu0 0
      %521 = vperm.xlu0 %520, %v503
      %v522 = vpop.permute.xlu0 %521
      %525 = vset.pattern.permute.xlu0 0
      %526 = vperm.xlu0 %525, %v504
      %v527 = vpop.permute.xlu0 %526
      %530 = vset.pattern.permute.xlu0 0
      %531 = vperm.xlu0 %530, %v505
      %v532 = vpop.permute.xlu0 %531
      %535 = vset.pattern.permute.xlu0 0
      %536 = vperm.xlu0 %535, %v506
      %v537 = vpop.permute.xlu0 %536
      %540 = vset.pattern.permute.xlu0 0
      %541 = vperm.xlu0 %540, %v507
      %v542 = vpop.permute.xlu0 %541
      %545 = vset.pattern.permute.xlu0 0
      %546 = vperm.xlu0 %545, %v508
      %v547 = vpop.permute.xlu0 %546
      %v557 = vunpack.c.l.b16 %v493
      %v558 = vunpack.c.h.b16 %v493
      %v559 = vunpack.c.l.b16 %v494
      %v560 = vunpack.c.h.b16 %v494
      %v561 = vunpack.c.l.b16 %v495
      %v562 = vunpack.c.h.b16 %v495
      %v563 = vunpack.c.l.b16 %v496
      %v564 = vunpack.c.h.b16 %v496
      %v565 = vunpack.c.l.b16 %v497
      %v566 = vunpack.c.h.b16 %v497
      %v567 = vunpack.c.l.b16 %v498
      %v568 = vunpack.c.h.b16 %v498
      %v569 = vunpack.c.l.b16 %v499
      %v570 = vunpack.c.h.b16 %v499
      %v571 = vunpack.c.l.b16 %v500
      %v572 = vunpack.c.h.b16 %v500
      %v573 = vpack.c.b16 %v559, %v557
      %v574 = vpack.c.b16 %v560, %v558
      %v575 = vpack.c.b16 %v563, %v561
      %v576 = vpack.c.b16 %v564, %v562
      %v577 = vpack.c.b16 %v567, %v565
      %v578 = vpack.c.b16 %v568, %v566
      %v579 = vpack.c.b16 %v571, %v569
      %v580 = vpack.c.b16 %v572, %v570
      %595 = vrot.lane.b32.xlu0 %v483, 76
      %v596 = vpop.permute.xlu0 %595
      %597 = vrot.lane.b32.xlu0 %v484, 76
      %v598 = vpop.permute.xlu0 %597
      %599 = vrot.lane.b32.xlu0 %v485, 76
      %v600 = vpop.permute.xlu0 %599
      %601 = vrot.lane.b32.xlu0 %v486, 76
      %v602 = vpop.permute.xlu0 %601
      %603 = vrot.lane.b32.xlu0 %v487, 76
      %v604 = vpop.permute.xlu0 %603
      %605 = vrot.lane.b32.xlu0 %v488, 76
      %v606 = vpop.permute.xlu0 %605
      %607 = vrot.lane.b32.xlu0 %v489, 76
      %v608 = vpop.permute.xlu0 %607
      %609 = vrot.lane.b32.xlu0 %v490, 76
      %v610 = vpop.permute.xlu0 %609
      %611 = vrot.lane.b32.xlu0 %v491, 76
      %v612 = vpop.permute.xlu0 %611
      %613 = vrot.lane.b32.xlu0 %v492, 76
      %v614 = vpop.permute.xlu0 %613
      %vm625 = vcmask 261120
      %v627 = vsel %vm625, %v574, 0
      %v630 = vsel %vm625, %v576, 0
      %v633 = vsel %vm625, %v578, 0
      %v636 = vsel %vm625, %v580, 0
      %638 = vmatprep.subr.bf16.mxu0 0
      %639 = vmatpush1.bf16.msra.mxu0 %v610
      %640 = vmatprep.subr.bf16.mxu0 0
      %641 = vmatpush1.bf16.msra.mxu0 %v608
      %642 = vmatprep.subr.bf16.mxu0 0
      %643 = vmatpush1.bf16.msra.mxu0 %v606
      %644 = vmatprep.subr.bf16.mxu0 0
      %645 = vmatpush1.bf16.msra.mxu0 %v604
      %646 = vmatprep.subr.bf16.mxu0 0
      %647 = vmatpush1.bf16.msra.mxu0 %v602
      %648 = vmatprep.subr.bf16.mxu0 0
      %649 = vmatpush1.bf16.msra.mxu0 %v600
      %650 = vmatprep.subr.bf16.mxu0 0
      %651 = vmatpush1.bf16.msra.mxu0 %v598
      %652 = vmatprep.subr.bf16.mxu0 0
      %653 = vmatpush1.bf16.msra.mxu0 %v596
      %654 = vmatprep.subr.bf16.mxu0 0
      %655 = vmatpush2.bf16.msra.mxu0 0
      %656 = vmatprep.subr.bf16.mxu0 0
      %657 = vmatpush2.bf16.msra.mxu0 0
      %658 = vmatprep.subr.bf16.mxu0 0
      %659 = vmatpush2.bf16.msra.mxu0 0
      %660 = vmatprep.subr.bf16.mxu0 0
      %661 = vmatpush2.bf16.msra.mxu0 0
      %662 = vmatprep.subr.bf16.mxu0 0
      %663 = vmatpush2.bf16.msra.mxu0 0
      %664 = vmatprep.subr.bf16.mxu0 0
      %665 = vmatpush2.bf16.msra.mxu0 0
      %666 = vmatprep.subr.bf16.mxu0 0
      %667 = vmatpush2.bf16.msra.mxu0 %v614
      %668 = vmatprep.subr.bf16.mxu0 0
      %669 = vmatpush2.bf16.msra.mxu0 %v612
      %670 = vmatprep.mubr.bf16.mxu0 %v627
      %671 = vmatmul.mubr.bf16.gmra.mxu0 %v573
      %v672 = vpop.f32.mrf.mxu0
      %v673 = vadd.f32 %v512, %v672
      %v674 = vpop.f32.mrf.mxu0
      %v675 = vpop.f32.mrf.mxu0
      %v676 = vadd.f32 %v517, %v675
      %v677 = vpop.f32.mrf.mxu0
      %678 = vmatprep.mubr.bf16.mxu0 %v630
      %679 = vmatmul.mubr.bf16.gmra.mxu0 %v575
      %v680 = vpop.f32.mrf.mxu0
      %v681 = vadd.f32 %v522, %v680
      %v682 = vpop.f32.mrf.mxu0
      %v683 = vpop.f32.mrf.mxu0
      %v684 = vadd.f32 %v527, %v683
      %v685 = vpop.f32.mrf.mxu0
      %686 = vmatprep.mubr.bf16.mxu0 %v633
      %687 = vmatmul.mubr.bf16.gmra.mxu0 %v577
      %v688 = vpop.f32.mrf.mxu0
      %v689 = vadd.f32 %v532, %v688
      %v690 = vpop.f32.mrf.mxu0
      %v691 = vpop.f32.mrf.mxu0
      %v692 = vadd.f32 %v537, %v691
      %v693 = vpop.f32.mrf.mxu0
      %694 = vmatprep.mubr.bf16.mxu0 %v636
      %695 = vmatmul.mubr.bf16.gmra.mxu0 %v579
      %v696 = vpop.f32.mrf.mxu0
      %v697 = vadd.f32 %v542, %v696
      %v698 = vpop.f32.mrf.mxu0
      %v699 = vpop.f32.mrf.mxu0
      %v700 = vadd.f32 %v547, %v699
      %v701 = vpop.f32.mrf.mxu0
      %702 = vdwg.mxu0
      %v703 = vxor.u32 %v689, 2147483648
      %v704 = vxor.u32 %v692, 2147483648
      %v705 = vxor.u32 %v697, 2147483648
      %v706 = vxor.u32 %v700, 2147483648
      %v707 = vmul.f32 %v703, 1.442695
      %v708 = vpow.pop %v707
      %v709 = vmul.f32 %v704, 1.442695
      %v710 = vpow.pop %v709
      %v711 = vmul.f32 %v705, 1.442695
      %v712 = vpow.pop %v711
      %v713 = vmul.f32 %v706, 1.442695
      %v714 = vpow.pop %v713
      %v715 = vadd.f32 %v708, 1.0
      %v716 = vadd.f32 %v710, 1.0
      %v717 = vadd.f32 %v712, 1.0
      %v718 = vadd.f32 %v714, 1.0
      %v719 = vrcp.pop %v715
      %v720 = vmul.f32 1.0, %v719
      %v721 = vrcp.pop %v716
      %v722 = vmul.f32 1.0, %v721
      %v723 = vrcp.pop %v717
      %v724 = vmul.f32 1.0, %v723
      %v725 = vrcp.pop %v718
      %v726 = vmul.f32 1.0, %v725
      %v727 = vmul.f32 %v673, %v720
      %v728 = vmul.f32 %v676, %v722
      %v729 = vmul.f32 %v681, %v724
      %v730 = vmul.f32 %v684, %v726
      %v731 = vadd.f32 %v727, %v387
      %v732 = vadd.f32 %v728, %v390
      %v733 = vadd.f32 %v729, %v395
      %v734 = vadd.f32 %v730, %v398
      %v735 = vmul.f32 %v731, 0.70710677
      %v736 = vmul.f32 %v732, 0.70710677
      %v737 = vmul.f32 %v733, 0.70710677
      %v738 = vmul.f32 %v734, 0.70710677
      %743 = vrot.lane.b32.xlu0 %v735, 54
      %v744 = vpop.permute.xlu0 %743
      %745 = vrot.lane.b32.xlu0 %v736, 54
      %v746 = vpop.permute.xlu0 %745
      %747 = vrot.lane.b32.xlu0 %v737, 54
      %v748 = vpop.permute.xlu0 %747
      %749 = vrot.lane.b32.xlu0 %v738, 54
      %v750 = vpop.permute.xlu0 %749
      %755 = vst.msk [vmem:[#allocation2] sm:$0xff] %vm422, %v744
      %756 = vst.msk [vmem:[#allocation2 + $0x8] sm:$0xff] %vm422, %v746
      %757 = vst.msk [vmem:[#allocation2 + $0x10] sm:$0xff] %vm422, %v748
      %758 = vst.msk [vmem:[#allocation2 + $0x18] sm:$0xff] %vm422, %v750
      %v759 = vld [vmem:[#allocation2] sm:$0xff]
      %v760 = vld [vmem:[#allocation2 + $0x8] sm:$0xff]
      %v761 = vld [vmem:[#allocation2 + $0x10] sm:$0xff]
      %v762 = vld [vmem:[#allocation2 + $0x18] sm:$0xff]
      %767 = vrot.lane.b32.xlu0 %v759, 125
      %v768 = vpop.permute.xlu0 %767
      %769 = vrot.lane.b32.xlu0 %v760, 125
      %v770 = vpop.permute.xlu0 %769
      %771 = vrot.lane.b32.xlu0 %v761, 125
      %v772 = vpop.permute.xlu0 %771
      %773 = vrot.lane.b32.xlu0 %v762, 125
      %v774 = vpop.permute.xlu0 %773
      %779 = vrot.lane.b32.xlu0 %v759, 122
      %v780 = vpop.permute.xlu0 %779
      %781 = vrot.lane.b32.xlu0 %v760, 122
      %v782 = vpop.permute.xlu0 %781
      %783 = vrot.lane.b32.xlu0 %v761, 122
      %v784 = vpop.permute.xlu0 %783
      %785 = vrot.lane.b32.xlu0 %v762, 122
      %v786 = vpop.permute.xlu0 %785
      %791 = vrot.lane.b32.xlu0 %v759, 119
      %v792 = vpop.permute.xlu0 %791
      %793 = vrot.lane.b32.xlu0 %v760, 119
      %v794 = vpop.permute.xlu0 %793
      %795 = vrot.lane.b32.xlu0 %v761, 119
      %v796 = vpop.permute.xlu0 %795
      %797 = vrot.lane.b32.xlu0 %v762, 119
      %v798 = vpop.permute.xlu0 %797
      %803 = vrot.lane.b32.xlu0 %v759, 116
      %v804 = vpop.permute.xlu0 %803
      %805 = vrot.lane.b32.xlu0 %v760, 116
      %v806 = vpop.permute.xlu0 %805
      %807 = vrot.lane.b32.xlu0 %v761, 116
      %v808 = vpop.permute.xlu0 %807
      %809 = vrot.lane.b32.xlu0 %v762, 116
      %v810 = vpop.permute.xlu0 %809
      %v815 = vpack.c.bf16 %v760, %v759
      %v816 = vpack.c.bf16 %v762, %v761
      %v817 = vpack.c.bf16 %v770, %v768
      %v818 = vpack.c.bf16 %v774, %v772
      %v819 = vpack.c.bf16 %v782, %v780
      %v820 = vpack.c.bf16 %v786, %v784
      %v821 = vpack.c.bf16 %v794, %v792
      %v822 = vpack.c.bf16 %v798, %v796
      %v823 = vpack.c.bf16 %v806, %v804
      %v824 = vpack.c.bf16 %v810, %v808
      %s825 = scalar_lea.vmem %s3, 64
      %v826 = vld [vmem:[%s825] sm:$0xff]
      %v827 = vld [vmem:[%s825 + $0x8] sm:$0xff]
      %v828 = vld [vmem:[%s825 + $0x10] sm:$0xff]
      %v829 = vld [vmem:[%s825 + $0x18] sm:$0xff]
      %v830 = vld [vmem:[%s825 + $0x20] sm:$0xff]
      %v831 = vld [vmem:[%s825 + $0x28] sm:$0xff]
      %v832 = vld [vmem:[%s825 + $0x30] sm:$0xff]
      %v833 = vld [vmem:[%s825 + $0x38] sm:$0xff]
      %s834 = scalar_lea.vmem %s4, 64
      %v835 = vld [vmem:[%s834] sm:$0xff]
      %v836 = vld [vmem:[%s834 + $0x8] sm:$0xff]
      %v837 = vld [vmem:[%s834 + $0x10] sm:$0xff]
      %v838 = vld [vmem:[%s834 + $0x18] sm:$0xff]
      %v839 = vld [vmem:[%s834 + $0x20] sm:$0xff]
      %v840 = vld [vmem:[%s834 + $0x28] sm:$0xff]
      %v841 = vld [vmem:[%s834 + $0x30] sm:$0xff]
      %v842 = vld [vmem:[%s834 + $0x38] sm:$0xff]
      %844 = vset.pattern.permute.xlu0 0
      %845 = vperm.xlu0 %844, %v835
      %v846 = vpop.permute.xlu0 %845
      %849 = vset.pattern.permute.xlu0 0
      %850 = vperm.xlu0 %849, %v836
      %v851 = vpop.permute.xlu0 %850
      %854 = vset.pattern.permute.xlu0 0
      %855 = vperm.xlu0 %854, %v837
      %v856 = vpop.permute.xlu0 %855
      %859 = vset.pattern.permute.xlu0 0
      %860 = vperm.xlu0 %859, %v838
      %v861 = vpop.permute.xlu0 %860
      %864 = vset.pattern.permute.xlu0 0
      %865 = vperm.xlu0 %864, %v839
      %v866 = vpop.permute.xlu0 %865
      %869 = vset.pattern.permute.xlu0 0
      %870 = vperm.xlu0 %869, %v840
      %v871 = vpop.permute.xlu0 %870
      %874 = vset.pattern.permute.xlu0 0
      %875 = vperm.xlu0 %874, %v841
      %v876 = vpop.permute.xlu0 %875
      %879 = vset.pattern.permute.xlu0 0
      %880 = vperm.xlu0 %879, %v842
      %v881 = vpop.permute.xlu0 %880
      %v891 = vunpack.c.l.b16 %v826
      %v892 = vunpack.c.h.b16 %v826
      %v893 = vunpack.c.l.b16 %v827
      %v894 = vunpack.c.h.b16 %v827
      %v895 = vunpack.c.l.b16 %v828
      %v896 = vunpack.c.h.b16 %v828
      %v897 = vunpack.c.l.b16 %v829
      %v898 = vunpack.c.h.b16 %v829
      %v899 = vunpack.c.l.b16 %v830
      %v900 = vunpack.c.h.b16 %v830
      %v901 = vunpack.c.l.b16 %v831
      %v902 = vunpack.c.h.b16 %v831
      %v903 = vunpack.c.l.b16 %v832
      %v904 = vunpack.c.h.b16 %v832
      %v905 = vunpack.c.l.b16 %v833
      %v906 = vunpack.c.h.b16 %v833
      %v907 = vpack.c.b16 %v893, %v891
      %v908 = vpack.c.b16 %v894, %v892
      %v909 = vpack.c.b16 %v897, %v895
      %v910 = vpack.c.b16 %v898, %v896
      %v911 = vpack.c.b16 %v901, %v899
      %v912 = vpack.c.b16 %v902, %v900
      %v913 = vpack.c.b16 %v905, %v903
      %v914 = vpack.c.b16 %v906, %v904
      %929 = vrot.lane.b32.xlu0 %v815, 80
      %v930 = vpop.permute.xlu0 %929
      %931 = vrot.lane.b32.xlu0 %v816, 80
      %v932 = vpop.permute.xlu0 %931
      %933 = vrot.lane.b32.xlu0 %v817, 80
      %v934 = vpop.permute.xlu0 %933
      %935 = vrot.lane.b32.xlu0 %v818, 80
      %v936 = vpop.permute.xlu0 %935
      %937 = vrot.lane.b32.xlu0 %v819, 80
      %v938 = vpop.permute.xlu0 %937
      %939 = vrot.lane.b32.xlu0 %v820, 80
      %v940 = vpop.permute.xlu0 %939
      %941 = vrot.lane.b32.xlu0 %v821, 80
      %v942 = vpop.permute.xlu0 %941
      %943 = vrot.lane.b32.xlu0 %v822, 80
      %v944 = vpop.permute.xlu0 %943
      %945 = vrot.lane.b32.xlu0 %v823, 80
      %v946 = vpop.permute.xlu0 %945
      %947 = vrot.lane.b32.xlu0 %v824, 80
      %v948 = vpop.permute.xlu0 %947
      %v960 = vsel %vm625, %v908, 0
      %v963 = vsel %vm625, %v910, 0
      %v966 = vsel %vm625, %v912, 0
      %v969 = vsel %vm625, %v914, 0
      %971 = vmatprep.subr.bf16.mxu0 0
      %972 = vmatpush1.bf16.msra.mxu0 %v944
      %973 = vmatprep.subr.bf16.mxu0 0
      %974 = vmatpush1.bf16.msra.mxu0 %v942
      %975 = vmatprep.subr.bf16.mxu0 0
      %976 = vmatpush1.bf16.msra.mxu0 %v940
      %977 = vmatprep.subr.bf16.mxu0 0
      %978 = vmatpush1.bf16.msra.mxu0 %v938
      %979 = vmatprep.subr.bf16.mxu0 0
      %980 = vmatpush1.bf16.msra.mxu0 %v936
      %981 = vmatprep.subr.bf16.mxu0 0
      %982 = vmatpush1.bf16.msra.mxu0 %v934
      %983 = vmatprep.subr.bf16.mxu0 0
      %984 = vmatpush1.bf16.msra.mxu0 %v932
      %985 = vmatprep.subr.bf16.mxu0 0
      %986 = vmatpush1.bf16.msra.mxu0 %v930
      %987 = vmatprep.subr.bf16.mxu0 0
      %988 = vmatpush2.bf16.msra.mxu0 0
      %989 = vmatprep.subr.bf16.mxu0 0
      %990 = vmatpush2.bf16.msra.mxu0 0
      %991 = vmatprep.subr.bf16.mxu0 0
      %992 = vmatpush2.bf16.msra.mxu0 0
      %993 = vmatprep.subr.bf16.mxu0 0
      %994 = vmatpush2.bf16.msra.mxu0 0
      %995 = vmatprep.subr.bf16.mxu0 0
      %996 = vmatpush2.bf16.msra.mxu0 0
      %997 = vmatprep.subr.bf16.mxu0 0
      %998 = vmatpush2.bf16.msra.mxu0 0
      %999 = vmatprep.subr.bf16.mxu0 0
      %1000 = vmatpush2.bf16.msra.mxu0 %v948
      %1001 = vmatprep.subr.bf16.mxu0 0
      %1002 = vmatpush2.bf16.msra.mxu0 %v946
      %1003 = vmatprep.mubr.bf16.mxu0 %v960
      %1004 = vmatmul.mubr.bf16.gmra.mxu0 %v907
      %v1005 = vpop.f32.mrf.mxu0
      %v1006 = vadd.f32 %v846, %v1005
      %v1007 = vpop.f32.mrf.mxu0
      %v1008 = vpop.f32.mrf.mxu0
      %v1009 = vadd.f32 %v851, %v1008
      %v1010 = vpop.f32.mrf.mxu0
      %1011 = vmatprep.mubr.bf16.mxu0 %v963
      %1012 = vmatmul.mubr.bf16.gmra.mxu0 %v909
      %v1013 = vpop.f32.mrf.mxu0
      %v1014 = vadd.f32 %v856, %v1013
      %v1015 = vpop.f32.mrf.mxu0
      %v1016 = vpop.f32.mrf.mxu0
      %v1017 = vadd.f32 %v861, %v1016
      %v1018 = vpop.f32.mrf.mxu0
      %1019 = vmatprep.mubr.bf16.mxu0 %v966
      %1020 = vmatmul.mubr.bf16.gmra.mxu0 %v911
      %v1021 = vpop.f32.mrf.mxu0
      %v1022 = vadd.f32 %v866, %v1021
      %v1023 = vpop.f32.mrf.mxu0
      %v1024 = vpop.f32.mrf.mxu0
      %v1025 = vadd.f32 %v871, %v1024
      %v1026 = vpop.f32.mrf.mxu0
      %1027 = vmatprep.mubr.bf16.mxu0 %v969
      %1028 = vmatmul.mubr.bf16.gmra.mxu0 %v913
      %v1029 = vpop.f32.mrf.mxu0
      %v1030 = vadd.f32 %v876, %v1029
      %v1031 = vpop.f32.mrf.mxu0
      %v1032 = vpop.f32.mrf.mxu0
      %v1033 = vadd.f32 %v881, %v1032
      %v1034 = vpop.f32.mrf.mxu0
      %1035 = vdwg.mxu0
      %v1036 = vxor.u32 %v1022, 2147483648
      %v1037 = vxor.u32 %v1025, 2147483648
      %v1038 = vxor.u32 %v1030, 2147483648
      %v1039 = vxor.u32 %v1033, 2147483648
      %v1040 = vmul.f32 %v1036, 1.442695
      %v1041 = vpow.pop %v1040
      %v1042 = vmul.f32 %v1037, 1.442695
      %v1043 = vpow.pop %v1042
      %v1044 = vmul.f32 %v1038, 1.442695
      %v1045 = vpow.pop %v1044
      %v1046 = vmul.f32 %v1039, 1.442695
      %v1047 = vpow.pop %v1046
      %v1048 = vadd.f32 %v1041, 1.0
      %v1049 = vadd.f32 %v1043, 1.0
      %v1050 = vadd.f32 %v1045, 1.0
      %v1051 = vadd.f32 %v1047, 1.0
      %v1052 = vrcp.pop %v1048
      %v1053 = vmul.f32 1.0, %v1052
      %v1054 = vrcp.pop %v1049
      %v1055 = vmul.f32 1.0, %v1054
      %v1056 = vrcp.pop %v1050
      %v1057 = vmul.f32 1.0, %v1056
      %v1058 = vrcp.pop %v1051
      %v1059 = vmul.f32 1.0, %v1058
      %v1060 = vmul.f32 %v1006, %v1053
      %v1061 = vmul.f32 %v1009, %v1055
      %v1062 = vmul.f32 %v1014, %v1057
      %v1063 = vmul.f32 %v1017, %v1059
      %v1064 = vadd.f32 %v1060, %v735
      %v1065 = vadd.f32 %v1061, %v736
      %v1066 = vadd.f32 %v1062, %v737
      %v1067 = vadd.f32 %v1063, %v738
      %v1068 = vmul.f32 %v1064, 0.70710677
      %v1069 = vmul.f32 %v1065, 0.70710677
      %v1070 = vmul.f32 %v1066, 0.70710677
      %v1071 = vmul.f32 %v1067, 0.70710677
      %1076 = vrot.lane.b32.xlu0 %v1068, 54
      %v1077 = vpop.permute.xlu0 %1076
      %1078 = vrot.lane.b32.xlu0 %v1069, 54
      %v1079 = vpop.permute.xlu0 %1078
      %1080 = vrot.lane.b32.xlu0 %v1070, 54
      %v1081 = vpop.permute.xlu0 %1080
      %1082 = vrot.lane.b32.xlu0 %v1071, 54
      %v1083 = vpop.permute.xlu0 %1082
      %1088 = vst.msk [vmem:[#allocation2] sm:$0xff] %vm422, %v1077
      %1089 = vst.msk [vmem:[#allocation2 + $0x8] sm:$0xff] %vm422, %v1079
      %1090 = vst.msk [vmem:[#allocation2 + $0x10] sm:$0xff] %vm422, %v1081
      %1091 = vst.msk [vmem:[#allocation2 + $0x18] sm:$0xff] %vm422, %v1083
      %v1092 = vld [vmem:[#allocation2] sm:$0xff]
      %v1093 = vld [vmem:[#allocation2 + $0x8] sm:$0xff]
      %v1094 = vld [vmem:[#allocation2 + $0x10] sm:$0xff]
      %v1095 = vld [vmem:[#allocation2 + $0x18] sm:$0xff]
      %1100 = vrot.lane.b32.xlu0 %v1092, 119
      %v1101 = vpop.permute.xlu0 %1100
      %1102 = vrot.lane.b32.xlu0 %v1093, 119
      %v1103 = vpop.permute.xlu0 %1102
      %1104 = vrot.lane.b32.xlu0 %v1094, 119
      %v1105 = vpop.permute.xlu0 %1104
      %1106 = vrot.lane.b32.xlu0 %v1095, 119
      %v1107 = vpop.permute.xlu0 %1106
      %1112 = vrot.lane.b32.xlu0 %v1092, 110
      %v1113 = vpop.permute.xlu0 %1112
      %1114 = vrot.lane.b32.xlu0 %v1093, 110
      %v1115 = vpop.permute.xlu0 %1114
      %1116 = vrot.lane.b32.xlu0 %v1094, 110
      %v1117 = vpop.permute.xlu0 %1116
      %1118 = vrot.lane.b32.xlu0 %v1095, 110
      %v1119 = vpop.permute.xlu0 %1118
      %1124 = vrot.lane.b32.xlu0 %v1092, 101
      %v1125 = vpop.permute.xlu0 %1124
      %1126 = vrot.lane.b32.xlu0 %v1093, 101
      %v1127 = vpop.permute.xlu0 %1126
      %1128 = vrot.lane.b32.xlu0 %v1094, 101
      %v1129 = vpop.permute.xlu0 %1128
      %1130 = vrot.lane.b32.xlu0 %v1095, 101
      %v1131 = vpop.permute.xlu0 %1130
      %1136 = vrot.lane.b32.xlu0 %v1092, 92
      %v1137 = vpop.permute.xlu0 %1136
      %1138 = vrot.lane.b32.xlu0 %v1093, 92
      %v1139 = vpop.permute.xlu0 %1138
      %1140 = vrot.lane.b32.xlu0 %v1094, 92
      %v1141 = vpop.permute.xlu0 %1140
      %1142 = vrot.lane.b32.xlu0 %v1095, 92
      %v1143 = vpop.permute.xlu0 %1142
      %v1148 = vpack.c.bf16 %v1093, %v1092
      %v1149 = vpack.c.bf16 %v1095, %v1094
      %v1150 = vpack.c.bf16 %v1103, %v1101
      %v1151 = vpack.c.bf16 %v1107, %v1105
      %v1152 = vpack.c.bf16 %v1115, %v1113
      %v1153 = vpack.c.bf16 %v1119, %v1117
      %v1154 = vpack.c.bf16 %v1127, %v1125
      %v1155 = vpack.c.bf16 %v1131, %v1129
      %v1156 = vpack.c.bf16 %v1139, %v1137
      %v1157 = vpack.c.bf16 %v1143, %v1141
      %s1158 = scalar_lea.vmem %s3, 128
      %v1159 = vld [vmem:[%s1158] sm:$0xff]
      %v1160 = vld [vmem:[%s1158 + $0x8] sm:$0xff]
      %v1161 = vld [vmem:[%s1158 + $0x10] sm:$0xff]
      %v1162 = vld [vmem:[%s1158 + $0x18] sm:$0xff]
      %v1163 = vld [vmem:[%s1158 + $0x20] sm:$0xff]
      %v1164 = vld [vmem:[%s1158 + $0x28] sm:$0xff]
      %v1165 = vld [vmem:[%s1158 + $0x30] sm:$0xff]
      %v1166 = vld [vmem:[%s1158 + $0x38] sm:$0xff]
      %s1167 = scalar_lea.vmem %s4, 128
      %v1168 = vld [vmem:[%s1167] sm:$0xff]
      %v1169 = vld [vmem:[%s1167 + $0x8] sm:$0xff]
      %v1170 = vld [vmem:[%s1167 + $0x10] sm:$0xff]
      %v1171 = vld [vmem:[%s1167 + $0x18] sm:$0xff]
      %v1172 = vld [vmem:[%s1167 + $0x20] sm:$0xff]
      %v1173 = vld [vmem:[%s1167 + $0x28] sm:$0xff]
      %v1174 = vld [vmem:[%s1167 + $0x30] sm:$0xff]
      %v1175 = vld [vmem:[%s1167 + $0x38] sm:$0xff]
      %1177 = vset.pattern.permute.xlu0 0
      %1178 = vperm.xlu0 %1177, %v1168
      %v1179 = vpop.permute.xlu0 %1178
      %1182 = vset.pattern.permute.xlu0 0
      %1183 = vperm.xlu0 %1182, %v1169
      %v1184 = vpop.permute.xlu0 %1183
      %1187 = vset.pattern.permute.xlu0 0
      %1188 = vperm.xlu0 %1187, %v1170
      %v1189 = vpop.permute.xlu0 %1188
      %1192 = vset.pattern.permute.xlu0 0
      %1193 = vperm.xlu0 %1192, %v1171
      %v1194 = vpop.permute.xlu0 %1193
      %1197 = vset.pattern.permute.xlu0 0
      %1198 = vperm.xlu0 %1197, %v1172
      %v1199 = vpop.permute.xlu0 %1198
      %1202 = vset.pattern.permute.xlu0 0
      %1203 = vperm.xlu0 %1202, %v1173
      %v1204 = vpop.permute.xlu0 %1203
      %1207 = vset.pattern.permute.xlu0 0
      %1208 = vperm.xlu0 %1207, %v1174
      %v1209 = vpop.permute.xlu0 %1208
      %1212 = vset.pattern.permute.xlu0 0
      %1213 = vperm.xlu0 %1212, %v1175
      %v1214 = vpop.permute.xlu0 %1213
      %v1224 = vunpack.c.l.b16 %v1159
      %v1225 = vunpack.c.h.b16 %v1159
      %v1226 = vunpack.c.l.b16 %v1160
      %v1227 = vunpack.c.h.b16 %v1160
      %v1228 = vunpack.c.l.b16 %v1161
      %v1229 = vunpack.c.h.b16 %v1161
      %v1230 = vunpack.c.l.b16 %v1162
      %v1231 = vunpack.c.h.b16 %v1162
      %v1232 = vunpack.c.l.b16 %v1163
      %v1233 = vunpack.c.h.b16 %v1163
      %v1234 = vunpack.c.l.b16 %v1164
      %v1235 = vunpack.c.h.b16 %v1164
      %v1236 = vunpack.c.l.b16 %v1165
      %v1237 = vunpack.c.h.b16 %v1165
      %v1238 = vunpack.c.l.b16 %v1166
      %v1239 = vunpack.c.h.b16 %v1166
      %v1240 = vpack.c.b16 %v1226, %v1224
      %v1241 = vpack.c.b16 %v1227, %v1225
      %v1242 = vpack.c.b16 %v1230, %v1228
      %v1243 = vpack.c.b16 %v1231, %v1229
      %v1244 = vpack.c.b16 %v1234, %v1232
      %v1245 = vpack.c.b16 %v1235, %v1233
      %v1246 = vpack.c.b16 %v1238, %v1236
      %v1247 = vpack.c.b16 %v1239, %v1237
      %1262 = vrot.lane.b32.xlu0 %v1148, 92
      %v1263 = vpop.permute.xlu0 %1262
      %1264 = vrot.lane.b32.xlu0 %v1149, 92
      %v1265 = vpop.permute.xlu0 %1264
      %1266 = vrot.lane.b32.xlu0 %v1150, 92
      %v1267 = vpop.permute.xlu0 %1266
      %1268 = vrot.lane.b32.xlu0 %v1151, 92
      %v1269 = vpop.permute.xlu0 %1268
      %1270 = vrot.lane.b32.xlu0 %v1152, 92
      %v1271 = vpop.permute.xlu0 %1270
      %1272 = vrot.lane.b32.xlu0 %v1153, 92
      %v1273 = vpop.permute.xlu0 %1272
      %1274 = vrot.lane.b32.xlu0 %v1154, 92
      %v1275 = vpop.permute.xlu0 %1274
      %1276 = vrot.lane.b32.xlu0 %v1155, 92
      %v1277 = vpop.permute.xlu0 %1276
      %1278 = vrot.lane.b32.xlu0 %v1156, 92
      %v1279 = vpop.permute.xlu0 %1278
      %1280 = vrot.lane.b32.xlu0 %v1157, 92
      %v1281 = vpop.permute.xlu0 %1280
      %v1293 = vsel %vm625, %v1241, 0
      %v1296 = vsel %vm625, %v1243, 0
      %v1299 = vsel %vm625, %v1245, 0
      %v1302 = vsel %vm625, %v1247, 0
      %1304 = vmatprep.subr.bf16.mxu0 0
      %1305 = vmatpush1.bf16.msra.mxu0 %v1277
      %1306 = vmatprep.subr.bf16.mxu0 0
      %1307 = vmatpush1.bf16.msra.mxu0 %v1275
      %1308 = vmatprep.subr.bf16.mxu0 0
      %1309 = vmatpush1.bf16.msra.mxu0 %v1273
      %1310 = vmatprep.subr.bf16.mxu0 0
      %1311 = vmatpush1.bf16.msra.mxu0 %v1271
      %1312 = vmatprep.subr.bf16.mxu0 0
      %1313 = vmatpush1.bf16.msra.mxu0 %v1269
      %1314 = vmatprep.subr.bf16.mxu0 0
      %1315 = vmatpush1.bf16.msra.mxu0 %v1267
      %1316 = vmatprep.subr.bf16.mxu0 0
      %1317 = vmatpush1.bf16.msra.mxu0 %v1265
      %1318 = vmatprep.subr.bf16.mxu0 0
      %1319 = vmatpush1.bf16.msra.mxu0 %v1263
      %1320 = vmatprep.subr.bf16.mxu0 0
      %1321 = vmatpush2.bf16.msra.mxu0 0
      %1322 = vmatprep.subr.bf16.mxu0 0
      %1323 = vmatpush2.bf16.msra.mxu0 0
      %1324 = vmatprep.subr.bf16.mxu0 0
      %1325 = vmatpush2.bf16.msra.mxu0 0
      %1326 = vmatprep.subr.bf16.mxu0 0
      %1327 = vmatpush2.bf16.msra.mxu0 0
      %1328 = vmatprep.subr.bf16.mxu0 0
      %1329 = vmatpush2.bf16.msra.mxu0 0
      %1330 = vmatprep.subr.bf16.mxu0 0
      %1331 = vmatpush2.bf16.msra.mxu0 0
      %1332 = vmatprep.subr.bf16.mxu0 0
      %1333 = vmatpush2.bf16.msra.mxu0 %v1281
      %1334 = vmatprep.subr.bf16.mxu0 0
      %1335 = vmatpush2.bf16.msra.mxu0 %v1279
      %1336 = vmatprep.mubr.bf16.mxu0 %v1293
      %1337 = vmatmul.mubr.bf16.gmra.mxu0 %v1240
      %v1338 = vpop.f32.mrf.mxu0
      %v1339 = vadd.f32 %v1179, %v1338
      %v1340 = vpop.f32.mrf.mxu0
      %v1341 = vpop.f32.mrf.mxu0
      %v1342 = vadd.f32 %v1184, %v1341
      %v1343 = vpop.f32.mrf.mxu0
      %1344 = vmatprep.mubr.bf16.mxu0 %v1296
      %1345 = vmatmul.mubr.bf16.gmra.mxu0 %v1242
      %v1346 = vpop.f32.mrf.mxu0
      %v1347 = vadd.f32 %v1189, %v1346
      %v1348 = vpop.f32.mrf.mxu0
      %v1349 = vpop.f32.mrf.mxu0
      %v1350 = vadd.f32 %v1194, %v1349
      %v1351 = vpop.f32.mrf.mxu0
      %1352 = vmatprep.mubr.bf16.mxu0 %v1299
      %1353 = vmatmul.mubr.bf16.gmra.mxu0 %v1244
      %v1354 = vpop.f32.mrf.mxu0
      %v1355 = vadd.f32 %v1199, %v1354
      %v1356 = vpop.f32.mrf.mxu0
      %v1357 = vpop.f32.mrf.mxu0
      %v1358 = vadd.f32 %v1204, %v1357
      %v1359 = vpop.f32.mrf.mxu0
      %1360 = vmatprep.mubr.bf16.mxu0 %v1302
      %1361 = vmatmul.mubr.bf16.gmra.mxu0 %v1246
      %v1362 = vpop.f32.mrf.mxu0
      %v1363 = vadd.f32 %v1209, %v1362
      %v1364 = vpop.f32.mrf.mxu0
      %v1365 = vpop.f32.mrf.mxu0
      %v1366 = vadd.f32 %v1214, %v1365
      %v1367 = vpop.f32.mrf.mxu0
      %1368 = vdwg.mxu0
      %v1369 = vxor.u32 %v1355, 2147483648
      %v1370 = vxor.u32 %v1358, 2147483648
      %v1371 = vxor.u32 %v1363, 2147483648
      %v1372 = vxor.u32 %v1366, 2147483648
      %v1373 = vmul.f32 %v1369, 1.442695
      %v1374 = vpow.pop %v1373
      %v1375 = vmul.f32 %v1370, 1.442695
      %v1376 = vpow.pop %v1375
      %v1377 = vmul.f32 %v1371, 1.442695
      %v1378 = vpow.pop %v1377
      %v1379 = vmul.f32 %v1372, 1.442695
      %v1380 = vpow.pop %v1379
      %v1381 = vadd.f32 %v1374, 1.0
      %v1382 = vadd.f32 %v1376, 1.0
      %v1383 = vadd.f32 %v1378, 1.0
      %v1384 = vadd.f32 %v1380, 1.0
      %v1385 = vrcp.pop %v1381
      %v1386 = vmul.f32 1.0, %v1385
      %v1387 = vrcp.pop %v1382
      %v1388 = vmul.f32 1.0, %v1387
      %v1389 = vrcp.pop %v1383
      %v1390 = vmul.f32 1.0, %v1389
      %v1391 = vrcp.pop %v1384
      %v1392 = vmul.f32 1.0, %v1391
      %v1393 = vmul.f32 %v1339, %v1386
      %v1394 = vmul.f32 %v1342, %v1388
      %v1395 = vmul.f32 %v1347, %v1390
      %v1396 = vmul.f32 %v1350, %v1392
      %v1397 = vadd.f32 %v1393, %v1068
      %v1398 = vadd.f32 %v1394, %v1069
      %v1399 = vadd.f32 %v1395, %v1070
      %v1400 = vadd.f32 %v1396, %v1071
      %v1401 = vmul.f32 %v1397, 0.70710677
      %v1402 = vmul.f32 %v1398, 0.70710677
      %v1403 = vmul.f32 %v1399, 0.70710677
      %v1404 = vmul.f32 %v1400, 0.70710677
      %1409 = vrot.lane.b32.xlu0 %v1401, 54
      %v1410 = vpop.permute.xlu0 %1409
      %1411 = vrot.lane.b32.xlu0 %v1402, 54
      %v1412 = vpop.permute.xlu0 %1411
      %1413 = vrot.lane.b32.xlu0 %v1403, 54
      %v1414 = vpop.permute.xlu0 %1413
      %1415 = vrot.lane.b32.xlu0 %v1404, 54
      %v1416 = vpop.permute.xlu0 %1415
      %1421 = vst.msk [vmem:[#allocation2] sm:$0xff] %vm422, %v1410
      %1422 = vst.msk [vmem:[#allocation2 + $0x8] sm:$0xff] %vm422, %v1412
      %1423 = vst.msk [vmem:[#allocation2 + $0x10] sm:$0xff] %vm422, %v1414
      %1424 = vst.msk [vmem:[#allocation2 + $0x18] sm:$0xff] %vm422, %v1416
      %v1425 = vld [vmem:[#allocation2] sm:$0xff]
      %v1426 = vld [vmem:[#allocation2 + $0x8] sm:$0xff]
      %v1427 = vld [vmem:[#allocation2 + $0x10] sm:$0xff]
      %v1428 = vld [vmem:[#allocation2 + $0x18] sm:$0xff]
      %1433 = vrot.lane.b32.xlu0 %v1425, 101
      %v1434 = vpop.permute.xlu0 %1433
      %1435 = vrot.lane.b32.xlu0 %v1426, 101
      %v1436 = vpop.permute.xlu0 %1435
      %1437 = vrot.lane.b32.xlu0 %v1427, 101
      %v1438 = vpop.permute.xlu0 %1437
      %1439 = vrot.lane.b32.xlu0 %v1428, 101
      %v1440 = vpop.permute.xlu0 %1439
      %1445 = vrot.lane.b32.xlu0 %v1425, 74
      %v1446 = vpop.permute.xlu0 %1445
      %1447 = vrot.lane.b32.xlu0 %v1426, 74
      %v1448 = vpop.permute.xlu0 %1447
      %1449 = vrot.lane.b32.xlu0 %v1427, 74
      %v1450 = vpop.permute.xlu0 %1449
      %1451 = vrot.lane.b32.xlu0 %v1428, 74
      %v1452 = vpop.permute.xlu0 %1451
      %1457 = vrot.lane.b32.xlu0 %v1425, 47
      %v1458 = vpop.permute.xlu0 %1457
      %1459 = vrot.lane.b32.xlu0 %v1426, 47
      %v1460 = vpop.permute.xlu0 %1459
      %1461 = vrot.lane.b32.xlu0 %v1427, 47
      %v1462 = vpop.permute.xlu0 %1461
      %1463 = vrot.lane.b32.xlu0 %v1428, 47
      %v1464 = vpop.permute.xlu0 %1463
      %1469 = vrot.lane.b32.xlu0 %v1425, 20
      %v1470 = vpop.permute.xlu0 %1469
      %1471 = vrot.lane.b32.xlu0 %v1426, 20
      %v1472 = vpop.permute.xlu0 %1471
      %1473 = vrot.lane.b32.xlu0 %v1427, 20
      %v1474 = vpop.permute.xlu0 %1473
      %1475 = vrot.lane.b32.xlu0 %v1428, 20
      %v1476 = vpop.permute.xlu0 %1475
      %v1481 = vpack.c.bf16 %v1426, %v1425
      %v1482 = vpack.c.bf16 %v1428, %v1427
      %v1483 = vpack.c.bf16 %v1436, %v1434
      %v1484 = vpack.c.bf16 %v1440, %v1438
      %v1485 = vpack.c.bf16 %v1448, %v1446
      %v1486 = vpack.c.bf16 %v1452, %v1450
      %v1487 = vpack.c.bf16 %v1460, %v1458
      %v1488 = vpack.c.bf16 %v1464, %v1462
      %v1489 = vpack.c.bf16 %v1472, %v1470
      %v1490 = vpack.c.bf16 %v1476, %v1474
      %s1491 = scalar_lea.vmem %s3, 192
      %v1492 = vld [vmem:[%s1491] sm:$0xff]
      %v1493 = vld [vmem:[%s1491 + $0x8] sm:$0xff]
      %v1494 = vld [vmem:[%s1491 + $0x10] sm:$0xff]
      %v1495 = vld [vmem:[%s1491 + $0x18] sm:$0xff]
      %v1496 = vld [vmem:[%s1491 + $0x20] sm:$0xff]
      %v1497 = vld [vmem:[%s1491 + $0x28] sm:$0xff]
      %v1498 = vld [vmem:[%s1491 + $0x30] sm:$0xff]
      %v1499 = vld [vmem:[%s1491 + $0x38] sm:$0xff]
      %s1500 = scalar_lea.vmem %s4, 192
      %v1501 = vld [vmem:[%s1500] sm:$0xff]
      %v1502 = vld [vmem:[%s1500 + $0x8] sm:$0xff]
      %v1503 = vld [vmem:[%s1500 + $0x10] sm:$0xff]
      %v1504 = vld [vmem:[%s1500 + $0x18] sm:$0xff]
      %v1505 = vld [vmem:[%s1500 + $0x20] sm:$0xff]
      %v1506 = vld [vmem:[%s1500 + $0x28] sm:$0xff]
      %v1507 = vld [vmem:[%s1500 + $0x30] sm:$0xff]
      %v1508 = vld [vmem:[%s1500 + $0x38] sm:$0xff]
      %1510 = vset.pattern.permute.xlu0 0
      %1511 = vperm.xlu0 %1510, %v1501
      %v1512 = vpop.permute.xlu0 %1511
      %1515 = vset.pattern.permute.xlu0 0
      %1516 = vperm.xlu0 %1515, %v1502
      %v1517 = vpop.permute.xlu0 %1516
      %1520 = vset.pattern.permute.xlu0 0
      %1521 = vperm.xlu0 %1520, %v1503
      %v1522 = vpop.permute.xlu0 %1521
      %1525 = vset.pattern.permute.xlu0 0
      %1526 = vperm.xlu0 %1525, %v1504
      %v1527 = vpop.permute.xlu0 %1526
      %1530 = vset.pattern.permute.xlu0 0
      %1531 = vperm.xlu0 %1530, %v1505
      %v1532 = vpop.permute.xlu0 %1531
      %1535 = vset.pattern.permute.xlu0 0
      %1536 = vperm.xlu0 %1535, %v1506
      %v1537 = vpop.permute.xlu0 %1536
      %1540 = vset.pattern.permute.xlu0 0
      %1541 = vperm.xlu0 %1540, %v1507
      %v1542 = vpop.permute.xlu0 %1541
      %1545 = vset.pattern.permute.xlu0 0
      %1546 = vperm.xlu0 %1545, %v1508
      %v1547 = vpop.permute.xlu0 %1546
      %v1557 = vunpack.c.l.b16 %v1492
      %v1558 = vunpack.c.h.b16 %v1492
      %v1559 = vunpack.c.l.b16 %v1493
      %v1560 = vunpack.c.h.b16 %v1493
      %v1561 = vunpack.c.l.b16 %v1494
      %v1562 = vunpack.c.h.b16 %v1494
      %v1563 = vunpack.c.l.b16 %v1495
      %v1564 = vunpack.c.h.b16 %v1495
      %v1565 = vunpack.c.l.b16 %v1496
      %v1566 = vunpack.c.h.b16 %v1496
      %v1567 = vunpack.c.l.b16 %v1497
      %v1568 = vunpack.c.h.b16 %v1497
      %v1569 = vunpack.c.l.b16 %v1498
      %v1570 = vunpack.c.h.b16 %v1498
      %v1571 = vunpack.c.l.b16 %v1499
      %v1572 = vunpack.c.h.b16 %v1499
      %v1573 = vpack.c.b16 %v1559, %v1557
      %v1574 = vpack.c.b16 %v1560, %v1558
      %v1575 = vpack.c.b16 %v1563, %v1561
      %v1576 = vpack.c.b16 %v1564, %v1562
      %v1577 = vpack.c.b16 %v1567, %v1565
      %v1578 = vpack.c.b16 %v1568, %v1566
      %v1579 = vpack.c.b16 %v1571, %v1569
      %v1580 = vpack.c.b16 %v1572, %v1570
      %v1586 = vsel %vm625, %v1574, 0
      %v1589 = vsel %vm625, %v1576, 0
      %v1592 = vsel %vm625, %v1578, 0
      %v1595 = vsel %vm625, %v1580, 0
      %1597 = vmatprep.subr.bf16.mxu0 0
      %1598 = vmatpush1.bf16.msra.mxu0 %v1488
      %1599 = vmatprep.subr.bf16.mxu0 0
      %1600 = vmatpush1.bf16.msra.mxu0 %v1487
      %1601 = vmatprep.subr.bf16.mxu0 0
      %1602 = vmatpush1.bf16.msra.mxu0 %v1486
      %1603 = vmatprep.subr.bf16.mxu0 0
      %1604 = vmatpush1.bf16.msra.mxu0 %v1485
      %1605 = vmatprep.subr.bf16.mxu0 0
      %1606 = vmatpush1.bf16.msra.mxu0 %v1484
      %1607 = vmatprep.subr.bf16.mxu0 0
      %1608 = vmatpush1.bf16.msra.mxu0 %v1483
      %1609 = vmatprep.subr.bf16.mxu0 0
      %1610 = vmatpush1.bf16.msra.mxu0 %v1482
      %1611 = vmatprep.subr.bf16.mxu0 0
      %1612 = vmatpush1.bf16.msra.mxu0 %v1481
      %1613 = vmatprep.subr.bf16.mxu0 0
      %1614 = vmatpush2.bf16.msra.mxu0 0
      %1615 = vmatprep.subr.bf16.mxu0 0
      %1616 = vmatpush2.bf16.msra.mxu0 0
      %1617 = vmatprep.subr.bf16.mxu0 0
      %1618 = vmatpush2.bf16.msra.mxu0 0
      %1619 = vmatprep.subr.bf16.mxu0 0
      %1620 = vmatpush2.bf16.msra.mxu0 0
      %1621 = vmatprep.subr.bf16.mxu0 0
      %1622 = vmatpush2.bf16.msra.mxu0 0
      %1623 = vmatprep.subr.bf16.mxu0 0
      %1624 = vmatpush2.bf16.msra.mxu0 0
      %1625 = vmatprep.subr.bf16.mxu0 0
      %1626 = vmatpush2.bf16.msra.mxu0 %v1490
      %1627 = vmatprep.subr.bf16.mxu0 0
      %1628 = vmatpush2.bf16.msra.mxu0 %v1489
      %1629 = vmatprep.mubr.bf16.mxu0 %v1586
      %1630 = vmatmul.mubr.bf16.gmra.mxu0 %v1573
      %v1631 = vpop.f32.mrf.mxu0
      %v1632 = vadd.f32 %v1512, %v1631
      %v1633 = vpop.f32.mrf.mxu0
      %v1634 = vpop.f32.mrf.mxu0
      %v1635 = vadd.f32 %v1517, %v1634
      %v1636 = vpop.f32.mrf.mxu0
      %1637 = vmatprep.mubr.bf16.mxu0 %v1589
      %1638 = vmatmul.mubr.bf16.gmra.mxu0 %v1575
      %v1639 = vpop.f32.mrf.mxu0
      %v1640 = vadd.f32 %v1522, %v1639
      %v1641 = vpop.f32.mrf.mxu0
      %v1642 = vpop.f32.mrf.mxu0
      %v1643 = vadd.f32 %v1527, %v1642
      %v1644 = vpop.f32.mrf.mxu0
      %1645 = vmatprep.mubr.bf16.mxu0 %v1592
      %1646 = vmatmul.mubr.bf16.gmra.mxu0 %v1577
      %v1647 = vpop.f32.mrf.mxu0
      %v1648 = vadd.f32 %v1532, %v1647
      %v1649 = vpop.f32.mrf.mxu0
      %v1650 = vpop.f32.mrf.mxu0
      %v1651 = vadd.f32 %v1537, %v1650
      %v1652 = vpop.f32.mrf.mxu0
      %1653 = vmatprep.mubr.bf16.mxu0 %v1595
      %1654 = vmatmul.mubr.bf16.gmra.mxu0 %v1579
      %v1655 = vpop.f32.mrf.mxu0
      %v1656 = vadd.f32 %v1542, %v1655
      %v1657 = vpop.f32.mrf.mxu0
      %v1658 = vpop.f32.mrf.mxu0
      %v1659 = vadd.f32 %v1547, %v1658
      %v1660 = vpop.f32.mrf.mxu0
      %1661 = vdwg.mxu0
      %v1662 = vxor.u32 %v1648, 2147483648
      %v1663 = vxor.u32 %v1651, 2147483648
      %v1664 = vxor.u32 %v1656, 2147483648
      %v1665 = vxor.u32 %v1659, 2147483648
      %v1666 = vmul.f32 %v1662, 1.442695
      %v1667 = vpow.pop %v1666
      %v1668 = vmul.f32 %v1663, 1.442695
      %v1669 = vpow.pop %v1668
      %v1670 = vmul.f32 %v1664, 1.442695
      %v1671 = vpow.pop %v1670
      %v1672 = vmul.f32 %v1665, 1.442695
      %v1673 = vpow.pop %v1672
      %v1674 = vadd.f32 %v1667, 1.0
      %v1675 = vadd.f32 %v1669, 1.0
      %v1676 = vadd.f32 %v1671, 1.0
      %v1677 = vadd.f32 %v1673, 1.0
      %v1678 = vrcp.pop %v1674
      %v1679 = vmul.f32 1.0, %v1678
      %v1680 = vrcp.pop %v1675
      %v1681 = vmul.f32 1.0, %v1680
      %v1682 = vrcp.pop %v1676
      %v1683 = vmul.f32 1.0, %v1682
      %v1684 = vrcp.pop %v1677
      %v1685 = vmul.f32 1.0, %v1684
      %v1686 = vmul.f32 %v1632, %v1679
      %v1687 = vmul.f32 %v1635, %v1681
      %v1688 = vmul.f32 %v1640, %v1683
      %v1689 = vmul.f32 %v1643, %v1685
      %v1690 = vadd.f32 %v1686, %v1401
      %v1691 = vadd.f32 %v1687, %v1402
      %v1692 = vadd.f32 %v1688, %v1403
      %v1693 = vadd.f32 %v1689, %v1404
      %v1694 = vmul.f32 %v1690, 0.70710677
      %v1695 = vmul.f32 %v1691, 0.70710677
      %v1696 = vmul.f32 %v1692, 0.70710677
      %v1697 = vmul.f32 %v1693, 0.70710677
      %v1698 = vld [vmem:[%s5] sm:$0xf]
      %v1699 = vld [vmem:[%s5 + $0x4] sm:$0xf]
      %v1700 = vld [vmem:[%s5 + $0x8] sm:$0xf]
      %v1701 = vld [vmem:[%s5 + $0xc] sm:$0xf]
      %v1702 = vpack.c.bf16 %v1695, %v1694
      %v1703 = vpack.c.bf16 %v1697, %v1696
      %v1704 = vld [vmem:[%s6] sm:$0xff]
      %v1705 = vld [vmem:[%s6 + $0x8] sm:$0xff]
      %v1706 = vld [vmem:[%s6 + $0x10] sm:$0xff]
      %v1707 = vld [vmem:[%s6 + $0x18] sm:$0xff]
      %1709 = vset.pattern.permute.xlu0 0
      %1710 = vperm.xlu0 %1709, %v1704
      %v1711 = vpop.permute.xlu0 %1710
      %1714 = vset.pattern.permute.xlu0 0
      %1715 = vperm.xlu0 %1714, %v1705
      %v1716 = vpop.permute.xlu0 %1715
      %1719 = vset.pattern.permute.xlu0 0
      %1720 = vperm.xlu0 %1719, %v1706
      %v1721 = vpop.permute.xlu0 %1720
      %1724 = vset.pattern.permute.xlu0 0
      %1725 = vperm.xlu0 %1724, %v1707
      %v1726 = vpop.permute.xlu0 %1725
      %v1732 = vunpack.c.l.b16 %v1698
      %v1733 = vunpack.c.l.b16 %v1699
      %v1734 = vunpack.c.l.b16 %v1700
      %v1735 = vunpack.c.l.b16 %v1701
      %v1736 = vpack.c.b16 %v1733, %v1732
      %v1737 = vpack.c.b16 %v1735, %v1734
      %v1739 = vsel %vm625, %v1736, 0
      %v1742 = vsel %vm625, %v1737, 0
      %1744 = vmatprep.subr.bf16.mxu0 0
      %1745 = vmatpush1.bf16.msra.mxu0 0
      %1746 = vmatprep.subr.bf16.mxu0 0
      %1747 = vmatpush1.bf16.msra.mxu0 0
      %1748 = vmatprep.subr.bf16.mxu0 0
      %1749 = vmatpush1.bf16.msra.mxu0 0
      %1750 = vmatprep.subr.bf16.mxu0 0
      %1751 = vmatpush1.bf16.msra.mxu0 0
      %1752 = vmatprep.subr.bf16.mxu0 0
      %1753 = vmatpush1.bf16.msra.mxu0 0
      %1754 = vmatprep.subr.bf16.mxu0 0
      %1755 = vmatpush1.bf16.msra.mxu0 0
      %1756 = vmatprep.subr.bf16.mxu0 0
      %1757 = vmatpush1.bf16.msra.mxu0 %v1703
      %1758 = vmatprep.subr.bf16.mxu0 0
      %1759 = vmatpush1.bf16.msra.mxu0 %v1702
      %1760 = vmatprep.subr.bf16.mxu0 0
      %1761 = vmatpush2.bf16.msra.mxu0 0
      %1762 = vmatprep.subr.bf16.mxu0 0
      %1763 = vmatpush2.bf16.msra.mxu0 0
      %1764 = vmatprep.subr.bf16.mxu0 0
      %1765 = vmatpush2.bf16.msra.mxu0 0
      %1766 = vmatprep.subr.bf16.mxu0 0
      %1767 = vmatpush2.bf16.msra.mxu0 0
      %1768 = vmatprep.subr.bf16.mxu0 0
      %1769 = vmatpush2.bf16.msra.mxu0 0
      %1770 = vmatprep.subr.bf16.mxu0 0
      %1771 = vmatpush2.bf16.msra.mxu0 0
      %1772 = vmatprep.subr.bf16.mxu0 0
      %1773 = vmatpush2.bf16.msra.mxu0 0
      %1774 = vmatprep.subr.bf16.mxu0 0
      %1775 = vmatpush2.bf16.msra.mxu0 0
      %1776 = vmatprep.mubr.bf16.mxu0 0
      %1777 = vmatmul.mubr.bf16.gmra.mxu0 %v1739
      %v1778 = vpop.f32.mrf.mxu0
      %v1779 = vadd.f32 %v1711, %v1778
      %v1780 = vpop.f32.mrf.mxu0
      %v1781 = vpop.f32.mrf.mxu0
      %v1782 = vadd.f32 %v1716, %v1781
      %v1783 = vpop.f32.mrf.mxu0
      %1784 = vmatprep.mubr.bf16.mxu0 0
      %1785 = vmatmul.mubr.bf16.gmra.mxu0 %v1742
      %v1786 = vpop.f32.mrf.mxu0
      %v1787 = vadd.f32 %v1721, %v1786
      %v1788 = vpop.f32.mrf.mxu0
      %v1789 = vpop.f32.mrf.mxu0
      %v1790 = vadd.f32 %v1726, %v1789
      %v1791 = vpop.f32.mrf.mxu0
      %1792 = vdwg.mxu0
      %vm1793 = vcmask 130048
      %1794 = vst.msk [vmem:[%s298] sm:$0xff] %vm1793, %v1779
      %1795 = vst.msk [vmem:[%s298 + $0x8] sm:$0xff] %vm1793, %v1782
      %1796 = vst.msk [vmem:[%s298 + $0x10] sm:$0xff] %vm1793, %v1787
      %1797 = vst.msk [vmem:[%s298 + $0x18] sm:$0xff] %vm1793, %v1790
      %p1798 = scmp.lt.s32.totalorder %s18, 1
      %s1799 = scalar_select %p1798, %s18, 1
      %s1800 = smul.addr %s1799, 4
      %s1801 = smul.addr %s1800, 8
      %s1802 = scalar_lea.vmem %s7, %s1801
      // Predicated region
      $region49: #{convs2s_a2m_forward.4} parent=47 // pred_check
        %p1803 = pneg %p193
      $region50: #{convs2s_a2m_forward.4} parent=47 // pred_check_branch
        %1805 = sbr.rel (%p1803) target = $region52
      $region51: #{convs2s_a2m_forward.4} parent=47 // pred_region
        _
      $region52: #{convs2s_a2m_forward.4} parent=47 // pred_fallthru
        _
    $region48: #{convs2s_a2m_forward.4} parent=5 // pred_fallthru
      _
    %p1806 = scmp.le.s32.totalorder 2, %s13
    // Predicated region
    $region53: #{convs2s_a2m_forward.4} parent=5 // pred_check
      %p1807 = pneg %p1806
    $region54: #{convs2s_a2m_forward.4} parent=5 // pred_check_branch
      %1809 = sbr.rel (%p1807) target = $region56
    $region55: #{convs2s_a2m_forward.4} parent=5 // pred_region
      %s1810 = ssub.s32 %s13, 2
      // Predicated region
      $region57: #{convs2s_a2m_forward.4} parent=55 // pred_check
        %p1811 = pneg %p199
      $region58: #{convs2s_a2m_forward.4} parent=55 // pred_check_branch
        %1813 = sbr.rel (%p1811) target = $region60
      $region59: #{convs2s_a2m_forward.4} parent=55 // pred_region
        %p1814 = scmp.lt.s32.totalorder %s19, 1
        %s1815 = scalar_select %p1814, %s19, 1
        %s1816 = smul.addr %s1815, 4
        %s1817 = smul.addr %s1816, 8
        %s1818 = scalar_lea.vmem %s7, %s1817
      $region60: #{convs2s_a2m_forward.4} parent=55 // pred_fallthru
        _
    $region56: #{convs2s_a2m_forward.4} parent=5 // pred_fallthru
      _
  $region6: #{convs2s_a2m_forward.4} parent=0 // loop_footer
    %s17 = sadd.s32 1, %s13
  $region7: #{convs2s_a2m_forward.4} parent=0 // loop_footer_branch
    %12 = sbr.rel target = $region3
  $region8: #{convs2s_a2m_forward.4} parent=0 // loop_exit
    _

</llo_original>
